<compile_context>
chip_gen: v7x
topology: tpu7x:2x2x1
jax: 0.10.0
libtpu: 0.0.40
codegen_flags: <defaults>
</compile_context>

<pallas_src>
import math

import jax
import jax.numpy as jnp
import numpy as np
from jax.experimental import pallas as pl
from jax.experimental.pallas import tpu as pltpu

f32 = jnp.float32
bf16 = jnp.bfloat16


def _pairswap(x, even_mask):
    """p[2i] = x[2i+1], p[2i+1] = x[2i] along the last (lane) axis (XLU rolls)."""
    n = x.shape[-1]
    x_prev = pltpu.roll(x, shift=1, axis=1)       # x[j-1] at position j
    x_next = pltpu.roll(x, shift=n - 1, axis=1)   # x[j+1] at position j
    return jnp.where(even_mask, x_next, x_prev)


def make_attention_kernel(*, batch, seq, hidden, n_heads, n_kv_heads,
                          head_dim, max_seq_len, start_pos):
    n_rep = n_heads // n_kv_heads
    kv_len = start_pos + seq
    q_dim = n_heads * head_dim
    kv_dim = n_kv_heads * head_dim
    scale = 1.0 / math.sqrt(head_dim)

    def kernel(x_ref, cos_ref, sin_ref, wqkv_ref, wo_ref,
               cachek_ref, cachev_ref,                 # inputs (caches: raw HBM refs)
               o_ref, ck_out_ref, cv_out_ref,          # outputs (caches aliased to inputs)
               k_vmem, v_vmem, q_scr, o_scr, read_sems, write_sems):
        b = pl.program_id(0)
        nb = pl.num_programs(0)
        slot = b % 2                                   # double-buffer slot for KV prefix

        def start_prefix(batch_idx, s):
            pltpu.make_async_copy(
                cachek_ref.at[batch_idx, pl.ds(0, start_pos), :],
                k_vmem.at[s, pl.ds(0, start_pos), :], read_sems.at[0, s]).start()
            pltpu.make_async_copy(
                cachev_ref.at[batch_idx, pl.ds(0, start_pos), :],
                v_vmem.at[s, pl.ds(0, start_pos), :], read_sems.at[1, s]).start()

        def wait_prefix(batch_idx, s):
            pltpu.make_async_copy(
                cachek_ref.at[batch_idx, pl.ds(0, start_pos), :],
                k_vmem.at[s, pl.ds(0, start_pos), :], read_sems.at[0, s]).wait()
            pltpu.make_async_copy(
                cachev_ref.at[batch_idx, pl.ds(0, start_pos), :],
                v_vmem.at[s, pl.ds(0, start_pos), :], read_sems.at[1, s]).wait()

        # 1) Prime the first batch's prefix DMA; later batches were prefetched by
        #    the previous grid step, so the DMA overlaps that step's attention.
        if start_pos > 0:
            @pl.when(b == 0)
            def _():
                start_prefix(0, 0)

        # 2) Fused QKV projection (single MXU matmul, bf16 in / f32 accum).
        x = x_ref[0]                                                  # (seq, hidden) bf16
        qkv = jnp.dot(x, wqkv_ref[...], preferred_element_type=f32)
        xq = qkv[:, :q_dim] * scale                                   # scale q, not scores
        xk = qkv[:, q_dim:q_dim + kv_dim]
        xv = qkv[:, q_dim + kv_dim:]

        # 3) Rotary embedding (interleaved complex-multiply semantics).  The
        #    (seq, head_dim) tables are tiled to full width in-kernel (cheap lane
        #    replication; removes n_heads x redundant HBM traffic).
        cos_hd = cos_ref[...]
        sin_hd = sin_ref[...]
        cos_q = jnp.tile(cos_hd, (1, n_heads))
        sin_q = jnp.tile(sin_hd, (1, n_heads))
        cos_k = jnp.tile(cos_hd, (1, n_kv_heads))
        sin_k = jnp.tile(sin_hd, (1, n_kv_heads))
        even_q = (jax.lax.broadcasted_iota(jnp.int32, (seq, q_dim), 1) % 2) == 0
        even_k = (jax.lax.broadcasted_iota(jnp.int32, (seq, kv_dim), 1) % 2) == 0
        xq = xq * cos_q + _pairswap(xq, even_q) * sin_q
        xk = xk * cos_k + _pairswap(xk, even_k) * sin_k

        xq_b = xq.astype(bf16)
        xk_b = xk.astype(bf16)
        xv_b = xv.astype(bf16)

        # 4) Head-major Q scratch: replaces the per-group concatenate with
        #    128-aligned lane-sliced stores (one per head).
        for h in range(n_heads):
            g, r = divmod(h, n_rep)
            q_scr[g, r * seq:(r + 1) * seq, :] = xq_b[:, h * head_dim:(h + 1) * head_dim]

        # 5) KV cache update: wait for this slot's prefix, place the new rows in
        #    the VMEM working copy, and DMA only those rows back to the aliased
        #    HBM cache (waits deferred past the attention compute).
        if start_pos > 0:
            wait_prefix(b, slot)
        k_vmem[slot, pl.ds(start_pos, seq), :] = xk_b
        v_vmem[slot, pl.ds(start_pos, seq), :] = xv_b
        k_wb = pltpu.make_async_copy(
            k_vmem.at[slot, pl.ds(start_pos, seq), :],
            ck_out_ref.at[b, pl.ds(start_pos, seq), :], write_sems.at[0])
        v_wb = pltpu.make_async_copy(
            v_vmem.at[slot, pl.ds(start_pos, seq), :],
            cv_out_ref.at[b, pl.ds(start_pos, seq), :], write_sems.at[1])
        k_wb.start()
        v_wb.start()

        # 6) Prefetch the NEXT batch's KV prefix into the other slot; it overlaps
        #    with the rest of this step's attention + output projection.
        if start_pos > 0:
            @pl.when(b + 1 < nb)
            def _():
                start_prefix(b + 1, 1 - slot)

        # 7) In-kernel mask: kv position t visible iff t <= start_pos + s,
        #    where row r of a group block is query position s = r % seq.
        row = jax.lax.broadcasted_iota(jnp.int32, (n_rep * seq, kv_len), 0)
        col = jax.lax.broadcasted_iota(jnp.int32, (n_rep * seq, kv_len), 1)
        visible = col <= (start_pos + row % seq)

        # 8) Grouped-GQA attention: K/V read as head_dim-wide stripes straight
        #    from the VMEM refs; per-head outputs stored into o_scr lane slices.
        for g in range(n_kv_heads):
            d0, d1 = g * head_dim, (g + 1) * head_dim
            q_g = q_scr[g]                                            # (n_rep*seq, D) bf16
            k_g = k_vmem[slot, :, d0:d1]                              # (kv_len, D) bf16
            v_g = v_vmem[slot, :, d0:d1]
            s_g = jax.lax.dot_general(
                q_g, k_g, (((1,), (1,)), ((), ())),
                preferred_element_type=f32)                           # (n_rep*seq, kv_len)
            s_g = jnp.where(visible, s_g, -1e30)
            s_g = s_g - jnp.max(s_g, axis=-1, keepdims=True)
            e_g = jnp.exp(s_g)
            p_g = (e_g * pl.reciprocal(jnp.sum(e_g, axis=-1, keepdims=True),
                                       approx=True)).astype(bf16)
            o_g = jnp.dot(p_g, v_g, preferred_element_type=f32)       # (n_rep*seq, D)
            for r in range(n_rep):
                h = g * n_rep + r
                o_scr[:, h * head_dim:(h + 1) * head_dim] = \
                    o_g[r * seq:(r + 1) * seq, :].astype(bf16)

        # 9) Single full-width output projection (K = q_dim) + bf16 output.
        out = jnp.dot(o_scr[...], wo_ref[...], preferred_element_type=f32)
        o_ref[0] = out.astype(o_ref.dtype)

        # Cache write-back must complete before this grid step retires.
        k_wb.wait()
        v_wb.wait()

    grid_spec = pltpu.PrefetchScalarGridSpec(
        num_scalar_prefetch=0,
        grid=(batch,),
        in_specs=[
            pl.BlockSpec((1, seq, hidden), lambda b: (b, 0, 0)),           # x (bf16)
            pl.BlockSpec((seq, head_dim), lambda b: (0, 0)),               # cos (narrow)
            pl.BlockSpec((seq, head_dim), lambda b: (0, 0)),               # sin (signed, narrow)
            pl.BlockSpec((hidden, q_dim + 2 * kv_dim), lambda b: (0, 0)),  # fused wqkv
            pl.BlockSpec((q_dim, hidden), lambda b: (0, 0)),               # wo
            pl.BlockSpec(memory_space=pl.ANY),                             # cache_k (HBM)
            pl.BlockSpec(memory_space=pl.ANY),                             # cache_v (HBM)
        ],
        out_specs=[
            pl.BlockSpec((1, seq, hidden), lambda b: (b, 0, 0)),           # out (bf16)
            pl.BlockSpec(memory_space=pl.ANY),                             # cache_k (aliased)
            pl.BlockSpec(memory_space=pl.ANY),                             # cache_v (aliased)
        ],
        scratch_shapes=[
            pltpu.VMEM((2, kv_len, kv_dim), bf16),                         # K prefix slots
            pltpu.VMEM((2, kv_len, kv_dim), bf16),                         # V prefix slots
            pltpu.VMEM((n_kv_heads, n_rep * seq, head_dim), bf16),         # head-major Q
            pltpu.VMEM((seq, q_dim), bf16),                                # attention out
            pltpu.SemaphoreType.DMA((2, 2)),                               # prefix reads [kv, slot]
            pltpu.SemaphoreType.DMA((2,)),                                 # cache writebacks
        ],
    )
    out_shape = (
        jax.ShapeDtypeStruct((batch, seq, hidden), bf16),
        jax.ShapeDtypeStruct((batch, max_seq_len, kv_dim), bf16),
        jax.ShapeDtypeStruct((batch, max_seq_len, kv_dim), bf16),
    )
    # Cross-step prefix prefetch carries state across batch steps -> "arbitrary"
    # when start_pos > 0; prefill (no prefix DMA) keeps "parallel" for megacore.
    semantics = ("parallel",) if start_pos == 0 else ("arbitrary",)
    return pl.pallas_call(
        kernel,
        out_shape=out_shape,
        grid_spec=grid_spec,
        input_output_aliases={5: 1, 6: 2},   # cache_k -> out[1], cache_v -> out[2]
        compiler_params=pltpu.CompilerParams(dimension_semantics=semantics),
    )


def build_rope_tables(head_dim, max_seq_len, rope_theta, start_pos, seq):
    inv_freq = 1.0 / (rope_theta ** (
        jnp.arange(0, head_dim, 2, dtype=jnp.float32) / head_dim))
    t = jnp.arange(max_seq_len * 2, dtype=jnp.float32)
    angles = jnp.outer(t, inv_freq)[start_pos:start_pos + seq]     # (seq, head_dim//2)
    cos_half, sin_half = jnp.cos(angles), jnp.sin(angles)
    cos_i = jnp.repeat(cos_half, 2, axis=-1)                       # interleaved cos
    sin_i = jnp.stack([-sin_half, sin_half], axis=-1).reshape(seq, head_dim)
    return cos_half, sin_half, cos_i, sin_i


def reference_attention(x, w, cache_k, cache_v, cos_half, sin_half, start_pos,
                        n_heads, n_kv_heads, head_dim):
    """Pure-JAX reference mirroring the Llama attention forward (bf16 weights/cache)."""
    B, S, _ = x.shape
    n_rep = n_heads // n_kv_heads
    kv_len = start_pos + S
    xf = x.astype(f32)
    xq = xf @ w["wq"].astype(f32)
    xk = xf @ w["wk"].astype(f32)
    xv = xf @ w["wv"].astype(f32)
    xq = xq.reshape(B, S, n_heads, head_dim)
    xk = xk.reshape(B, S, n_kv_heads, head_dim)
    xv = xv.reshape(B, S, n_kv_heads, head_dim)

    def rope(t):
        te, to = t[..., 0::2], t[..., 1::2]
        c = cos_half[None, :, None, :]
        s = sin_half[None, :, None, :]
        re = te * c - to * s
        ro = te * s + to * c
        return jnp.stack([re, ro], axis=-1).reshape(t.shape)

    xq, xk = rope(xq), rope(xk)
    xq_b = xq.astype(bf16).astype(f32)
    xk_b = xk.astype(bf16)
    xv_b = xv.astype(bf16)
    new_ck = cache_k.at[:, start_pos:kv_len, :].set(xk_b.reshape(B, S, -1))
    new_cv = cache_v.at[:, start_pos:kv_len, :].set(xv_b.reshape(B, S, -1))
    keys = new_ck[:, :kv_len].astype(f32).reshape(B, kv_len, n_kv_heads, head_dim)
    values = new_cv[:, :kv_len].astype(f32).reshape(B, kv_len, n_kv_heads, head_dim)
    keys = jnp.repeat(keys, n_rep, axis=2)
    values = jnp.repeat(values, n_rep, axis=2)
    q = xq_b.transpose(0, 2, 1, 3)
    k = keys.transpose(0, 2, 1, 3)
    v = values.transpose(0, 2, 1, 3)
    scores = jnp.einsum("bhsd,bhtd->bhst", q, k) / math.sqrt(head_dim)
    qpos = start_pos + jnp.arange(S)[:, None]
    kpos = jnp.arange(kv_len)[None, :]
    mask = jnp.where(kpos <= qpos, 0.0, -jnp.inf).astype(f32)
    scores = scores + mask[None, None]
    probs = jax.nn.softmax(scores, axis=-1)
    probs = probs.astype(bf16).astype(f32)
    out = jnp.einsum("bhst,bhtd->bhsd", probs, v)
    out = out.transpose(0, 2, 1, 3).reshape(B, S, -1)
    out = out.astype(bf16).astype(f32)
    return out @ w["wo"].astype(f32), new_ck, new_cv


if __name__ == "__main__":
    # Small synthetic Llama-attention config (GQA).
    batch, hidden = 2, 512
    n_heads, n_kv_heads = 4, 2
    head_dim = hidden // n_heads          # 128
    max_seq_len = 32
    rope_theta = 10000.0
    kv_dim = n_kv_heads * head_dim

    key = jax.random.PRNGKey(0)
    k1, k2, k3, k4, k5, k6, kck, kcv = jax.random.split(key, 8)
    wscale = 0.02
    wq = (jax.random.normal(k1, (hidden, n_heads * head_dim), f32) * wscale).astype(bf16)
    wk = (jax.random.normal(k2, (hidden, kv_dim), f32) * wscale).astype(bf16)
    wv = (jax.random.normal(k3, (hidden, kv_dim), f32) * wscale).astype(bf16)
    wo = (jax.random.normal(k4, (n_heads * head_dim, hidden), f32) * wscale).astype(bf16)
    wqkv = jnp.concatenate([wq, wk, wv], axis=1)      # fused QKV weight
    weights = {"wq": wq, "wk": wk, "wv": wv, "wo": wo}

    cache_k0 = jax.random.normal(kck, (batch, max_seq_len, kv_dim), f32).astype(bf16)
    cache_v0 = jax.random.normal(kcv, (batch, max_seq_len, kv_dim), f32).astype(bf16)

    def run_case(name, x_f32, start_pos, cache_k, cache_v):
        seq = x_f32.shape[1]
        x_b = x_f32.astype(bf16)
        cos_half, sin_half, cos_i, sin_i = build_rope_tables(
            head_dim, max_seq_len, rope_theta, start_pos, seq)

        # Reference first: the kernel aliases (donates) the cache buffers.
        ref_out, ref_ck, ref_cv = reference_attention(
            x_b, weights, cache_k, cache_v, cos_half, sin_half, start_pos,
            n_heads, n_kv_heads, head_dim)

        attn_fn = make_attention_kernel(
            batch=batch, seq=seq, hidden=hidden, n_heads=n_heads,
            n_kv_heads=n_kv_heads, head_dim=head_dim,
            max_seq_len=max_seq_len, start_pos=start_pos)
        out, new_ck, new_cv = attn_fn(
            x_b, cos_i, sin_i, wqkv, wo, cache_k, cache_v)
        jax.block_until_ready(out)

        tol = dict(atol=5e-2, rtol=5e-2)
        assert np.allclose(np.asarray(out.astype(f32)), np.asarray(ref_out), **tol), name
        assert np.allclose(np.asarray(new_ck.astype(f32)),
                           np.asarray(ref_ck.astype(f32)), **tol), name
        assert np.allclose(np.asarray(new_cv.astype(f32)),
                           np.asarray(ref_cv.astype(f32)), **tol), name
        return new_ck, new_cv

    # Prefill: 8 tokens starting at position 0 (causal mask generated in-kernel).
    x_prefill = jax.random.normal(k5, (batch, 8, hidden), f32)
    ck1, cv1 = run_case("prefill", x_prefill, 0, cache_k0, cache_v0)

    # Decode: single token at start_pos=15; cache prefix double-buffered across batches.
    x_decode = jax.random.normal(k6, (batch, 1, hidden), f32)
    run_case("decode", x_decode, 15, ck1, cv1)

    print("KERNEL_OK")
</pallas_src>

<mosaic_0001>
module attributes {stable_mosaic.version = 11 : i64} {
  func.func @kernel(%arg0: i32, %arg1: memref<1x8x512xbf16, #tpu.memory_space<vmem>>, %arg2: memref<8x128xf32, #tpu.memory_space<vmem>>, %arg3: memref<8x128xf32, #tpu.memory_space<vmem>>, %arg4: memref<512x1024xbf16, #tpu.memory_space<vmem>>, %arg5: memref<512x512xbf16, #tpu.memory_space<vmem>>, %arg6: memref<2x32x256xbf16, #tpu.memory_space<any>>, %arg7: memref<2x32x256xbf16, #tpu.memory_space<any>>, %arg8: memref<1x8x512xbf16, #tpu.memory_space<vmem>>, %arg9: memref<2x32x256xbf16, #tpu.memory_space<any>>, %arg10: memref<2x32x256xbf16, #tpu.memory_space<any>>, %arg11: memref<2x8x256xbf16, #tpu.memory_space<vmem>>, %arg12: memref<2x8x256xbf16, #tpu.memory_space<vmem>>, %arg13: memref<2x16x128xbf16, #tpu.memory_space<vmem>>, %arg14: memref<8x512xbf16, #tpu.memory_space<vmem>>, %arg15: memref<2x2x!tpu.dma_semaphore, #tpu.memory_space<semaphore_mem>>, %arg16: memref<2x!tpu.dma_semaphore, #tpu.memory_space<semaphore_mem>>) attributes {dimension_semantics = [#tpu.dimension_semantics<parallel>], iteration_bounds = array<i64: 2>, scalar_prefetch = 0 : i64, scratch_operands = 6 : i64, tpu.core_type = #tpu.core_type<tc>, window_params = [{transform_indices = @transform_0, window_bounds = array<i64: 1, 8, 512>}, {pipeline_mode = #tpu.pipeline_mode<synchronous>, transform_indices = @transform_1, window_bounds = array<i64: 8, 128>}, {pipeline_mode = #tpu.pipeline_mode<synchronous>, transform_indices = @transform_2, window_bounds = array<i64: 8, 128>}, {pipeline_mode = #tpu.pipeline_mode<synchronous>, transform_indices = @transform_3, window_bounds = array<i64: 512, 1024>}, {pipeline_mode = #tpu.pipeline_mode<synchronous>, transform_indices = @transform_4, window_bounds = array<i64: 512, 512>}, {}, {}, {transform_indices = @transform_7, window_bounds = array<i64: 1, 8, 512>}, {}, {}]} {
    %c2_i32 = arith.constant 2 : i32
    %c0_i32 = arith.constant 0 : i32
    %0 = arith.cmpi eq, %c2_i32, %c0_i32 : i32
    %c1_i32 = arith.constant 1 : i32
    %1 = arith.select %0, %c1_i32, %c2_i32 : i32
    %2 = arith.remsi %arg0, %1 : i32
    %c0_i32_0 = arith.constant 0 : i32
    %3 = arith.cmpi ne, %2, %c0_i32_0 : i32
    %c0_i32_1 = arith.constant 0 : i32
    %4 = arith.cmpi slt, %2, %c0_i32_1 : i32
    %c0_i32_2 = arith.constant 0 : i32
    %5 = arith.cmpi slt, %1, %c0_i32_2 : i32
    %6 = arith.xori %4, %5 : i1
    %7 = arith.andi %6, %3 : i1
    %8 = arith.addi %2, %1 : i32
    %9 = arith.select %7, %8, %2 : i32
    %c0 = arith.constant 0 : index
    %c0_3 = arith.constant 0 : index
    %c0_4 = arith.constant 0 : index
    %10 = vector.load %arg1[%c0, %c0_3, %c0_4] : memref<1x8x512xbf16, #tpu.memory_space<vmem>>, vector<1x8x512xbf16>
    %11 = vector.shape_cast %10 : vector<1x8x512xbf16> to vector<8x512xbf16>
    %c0_5 = arith.constant 0 : index
    %c0_6 = arith.constant 0 : index
    %12 = vector.load %arg4[%c0_5, %c0_6] : memref<512x1024xbf16, #tpu.memory_space<vmem>>, vector<512x1024xbf16>
    %cst = arith.constant dense<0.000000e+00> : vector<8x1024xf32>
    %13 = tpu.matmul %11, %12, %cst {dimension_numbers = #tpu.dot_dimension_numbers<[1], [0], [0], [1], [0, 0, 1, 1], [], []>} : vector<8x512xbf16>, vector<512x1024xbf16>, vector<8x1024xf32> -> vector<8x1024xf32>
    %14 = vector.extract_strided_slice %13 {offsets = [0, 0], sizes = [8, 512], strides = [1, 1]} : vector<8x1024xf32> to vector<8x512xf32>
    %cst_7 = arith.constant 0.0883883461 : f32
    %15 = vector.broadcast %cst_7 : f32 to vector<8x512xf32>
    %16 = arith.mulf %14, %15 : vector<8x512xf32>
    %17 = vector.extract_strided_slice %13 {offsets = [0, 512], sizes = [8, 256], strides = [1, 1]} : vector<8x1024xf32> to vector<8x256xf32>
    %18 = vector.extract_strided_slice %13 {offsets = [0, 768], sizes = [8, 256], strides = [1, 1]} : vector<8x1024xf32> to vector<8x256xf32>
    %c0_8 = arith.constant 0 : index
    %c0_9 = arith.constant 0 : index
    %19 = vector.load %arg2[%c0_8, %c0_9] : memref<8x128xf32, #tpu.memory_space<vmem>>, vector<8x128xf32>
    %c0_10 = arith.constant 0 : index
    %c0_11 = arith.constant 0 : index
    %20 = vector.load %arg3[%c0_10, %c0_11] : memref<8x128xf32, #tpu.memory_space<vmem>>, vector<8x128xf32>
    %21 = tpu.concatenate %19, %19, %19, %19 in 1 : vector<8x128xf32>, vector<8x128xf32>, vector<8x128xf32>, vector<8x128xf32> -> vector<8x512xf32>
    %22 = tpu.concatenate %20, %20, %20, %20 in 1 : vector<8x128xf32>, vector<8x128xf32>, vector<8x128xf32>, vector<8x128xf32> -> vector<8x512xf32>
    %23 = tpu.concatenate %19, %19 in 1 : vector<8x128xf32>, vector<8x128xf32> -> vector<8x256xf32>
    %24 = tpu.concatenate %20, %20 in 1 : vector<8x128xf32>, vector<8x128xf32> -> vector<8x256xf32>
    %25 = tpu.iota {dimensions = array<i32: 1>} : vector<8x512xi32>
    %c2_i32_12 = arith.constant 2 : i32
    %c0_i32_13 = arith.constant 0 : i32
    %26 = arith.cmpi eq, %c2_i32_12, %c0_i32_13 : i32
    %c1_i32_14 = arith.constant 1 : i32
    %27 = arith.select %26, %c1_i32_14, %c2_i32_12 : i32
    %28 = vector.broadcast %27 : i32 to vector<8x512xi32>
    %29 = arith.remsi %25, %28 : vector<8x512xi32>
    %c0_i32_15 = arith.constant 0 : i32
    %30 = vector.broadcast %c0_i32_15 : i32 to vector<8x512xi32>
    %31 = arith.cmpi ne, %29, %30 : vector<8x512xi32>
    %c0_i32_16 = arith.constant 0 : i32
    %32 = vector.broadcast %c0_i32_16 : i32 to vector<8x512xi32>
    %33 = arith.cmpi slt, %29, %32 : vector<8x512xi32>
    %c0_i32_17 = arith.constant 0 : i32
    %34 = arith.cmpi slt, %27, %c0_i32_17 : i32
    %35 = vector.broadcast %34 : i1 to vector<8x512xi1>
    %36 = vector.broadcast %35 : vector<8x512xi1> to vector<8x512xi1>
    %37 = arith.xori %33, %36 : vector<8x512xi1>
    %38 = arith.andi %37, %31 : vector<8x512xi1>
    %39 = vector.broadcast %27 : i32 to vector<8x512xi32>
    %40 = arith.addi %29, %39 : vector<8x512xi32>
    %41 = arith.select %38, %40, %29 : vector<8x512xi1>, vector<8x512xi32>
    %c0_i32_18 = arith.constant 0 : i32
    %42 = vector.broadcast %c0_i32_18 : i32 to vector<8x512xi32>
    %43 = arith.cmpi eq, %41, %42 : vector<8x512xi32>
    %44 = tpu.iota {dimensions = array<i32: 1>} : vector<8x256xi32>
    %c2_i32_19 = arith.constant 2 : i32
    %c0_i32_20 = arith.constant 0 : i32
    %45 = arith.cmpi eq, %c2_i32_19, %c0_i32_20 : i32
    %c1_i32_21 = arith.constant 1 : i32
    %46 = arith.select %45, %c1_i32_21, %c2_i32_19 : i32
    %47 = vector.broadcast %46 : i32 to vector<8x256xi32>
    %48 = arith.remsi %44, %47 : vector<8x256xi32>
    %c0_i32_22 = arith.constant 0 : i32
    %49 = vector.broadcast %c0_i32_22 : i32 to vector<8x256xi32>
    %50 = arith.cmpi ne, %48, %49 : vector<8x256xi32>
    %c0_i32_23 = arith.constant 0 : i32
    %51 = vector.broadcast %c0_i32_23 : i32 to vector<8x256xi32>
    %52 = arith.cmpi slt, %48, %51 : vector<8x256xi32>
    %c0_i32_24 = arith.constant 0 : i32
    %53 = arith.cmpi slt, %46, %c0_i32_24 : i32
    %54 = vector.broadcast %53 : i1 to vector<8x256xi1>
    %55 = vector.broadcast %54 : vector<8x256xi1> to vector<8x256xi1>
    %56 = arith.xori %52, %55 : vector<8x256xi1>
    %57 = arith.andi %56, %50 : vector<8x256xi1>
    %58 = vector.broadcast %46 : i32 to vector<8x256xi32>
    %59 = arith.addi %48, %58 : vector<8x256xi32>
    %60 = arith.select %57, %59, %48 : vector<8x256xi1>, vector<8x256xi32>
    %c0_i32_25 = arith.constant 0 : i32
    %61 = vector.broadcast %c0_i32_25 : i32 to vector<8x256xi32>
    %62 = arith.cmpi eq, %60, %61 : vector<8x256xi32>
    %63 = arith.mulf %16, %21 : vector<8x512xf32>
    %c1_i32_26 = arith.constant 1 : i32
    %64 = tpu.dynamic_rotate %16 by %c1_i32_26 dim 1 : vector<8x512xf32>, i32 -> vector<8x512xf32>
    %c511_i32 = arith.constant 511 : i32
    %65 = tpu.dynamic_rotate %16 by %c511_i32 dim 1 : vector<8x512xf32>, i32 -> vector<8x512xf32>
    %66 = arith.select %43, %65, %64 : vector<8x512xi1>, vector<8x512xf32>
    %67 = arith.mulf %66, %22 : vector<8x512xf32>
    %68 = arith.addf %63, %67 : vector<8x512xf32>
    %69 = arith.mulf %17, %23 : vector<8x256xf32>
    %c1_i32_27 = arith.constant 1 : i32
    %70 = tpu.dynamic_rotate %17 by %c1_i32_27 dim 1 : vector<8x256xf32>, i32 -> vector<8x256xf32>
    %c255_i32 = arith.constant 255 : i32
    %71 = tpu.dynamic_rotate %17 by %c255_i32 dim 1 : vector<8x256xf32>, i32 -> vector<8x256xf32>
    %72 = arith.select %62, %71, %70 : vector<8x256xi1>, vector<8x256xf32>
    %73 = arith.mulf %72, %24 : vector<8x256xf32>
    %74 = arith.addf %69, %73 : vector<8x256xf32>
    %75 = arith.truncf %68 : vector<8x512xf32> to vector<8x512xbf16>
    %76 = arith.truncf %74 : vector<8x256xf32> to vector<8x256xbf16>
    %77 = arith.truncf %18 : vector<8x256xf32> to vector<8x256xbf16>
    %78 = vector.extract_strided_slice %75 {offsets = [0, 0], sizes = [8, 128], strides = [1, 1]} : vector<8x512xbf16> to vector<8x128xbf16>
    %c0_28 = arith.constant 0 : index
    %c0_29 = arith.constant 0 : index
    %c0_30 = arith.constant 0 : index
    %79 = vector.load %arg13[%c0_28, %c0_29, %c0_30] : memref<2x16x128xbf16, #tpu.memory_space<vmem>>, vector<1x8x128xbf16>
    %80 = vector.shape_cast %79 : vector<1x8x128xbf16> to vector<8x128xbf16>
    %81 = vector.shape_cast %78 : vector<8x128xbf16> to vector<1x8x128xbf16>
    tpu.vector_store %arg13[%c0_28, %c0_29, %c0_30], %81 {strides = array<i32>} : memref<2x16x128xbf16, #tpu.memory_space<vmem>>, vector<1x8x128xbf16>,
    %82 = vector.extract_strided_slice %75 {offsets = [0, 128], sizes = [8, 128], strides = [1, 1]} : vector<8x512xbf16> to vector<8x128xbf16>
    %c0_31 = arith.constant 0 : index
    %c8 = arith.constant 8 : index
    %c0_32 = arith.constant 0 : index
    %83 = vector.load %arg13[%c0_31, %c8, %c0_32] : memref<2x16x128xbf16, #tpu.memory_space<vmem>>, vector<1x8x128xbf16>
    %84 = vector.shape_cast %83 : vector<1x8x128xbf16> to vector<8x128xbf16>
    %85 = vector.shape_cast %82 : vector<8x128xbf16> to vector<1x8x128xbf16>
    tpu.vector_store %arg13[%c0_31, %c8, %c0_32], %85 {strides = array<i32>} : memref<2x16x128xbf16, #tpu.memory_space<vmem>>, vector<1x8x128xbf16>,
    %86 = vector.extract_strided_slice %75 {offsets = [0, 256], sizes = [8, 128], strides = [1, 1]} : vector<8x512xbf16> to vector<8x128xbf16>
    %c1 = arith.constant 1 : index
    %c0_33 = arith.constant 0 : index
    %c0_34 = arith.constant 0 : index
    %87 = vector.load %arg13[%c1, %c0_33, %c0_34] : memref<2x16x128xbf16, #tpu.memory_space<vmem>>, vector<1x8x128xbf16>
    %88 = vector.shape_cast %87 : vector<1x8x128xbf16> to vector<8x128xbf16>
    %89 = vector.shape_cast %86 : vector<8x128xbf16> to vector<1x8x128xbf16>
    tpu.vector_store %arg13[%c1, %c0_33, %c0_34], %89 {strides = array<i32>} : memref<2x16x128xbf16, #tpu.memory_space<vmem>>, vector<1x8x128xbf16>,
    %90 = vector.extract_strided_slice %75 {offsets = [0, 384], sizes = [8, 128], strides = [1, 1]} : vector<8x512xbf16> to vector<8x128xbf16>
    %c1_35 = arith.constant 1 : index
    %c8_36 = arith.constant 8 : index
    %c0_37 = arith.constant 0 : index
    %91 = vector.load %arg13[%c1_35, %c8_36, %c0_37] : memref<2x16x128xbf16, #tpu.memory_space<vmem>>, vector<1x8x128xbf16>
    %92 = vector.shape_cast %91 : vector<1x8x128xbf16> to vector<8x128xbf16>
    %93 = vector.shape_cast %90 : vector<8x128xbf16> to vector<1x8x128xbf16>
    tpu.vector_store %arg13[%c1_35, %c8_36, %c0_37], %93 {strides = array<i32>} : memref<2x16x128xbf16, #tpu.memory_space<vmem>>, vector<1x8x128xbf16>,
    %94 = arith.index_cast %9 : i32 to index
    %c0_38 = arith.constant 0 : index
    %c0_39 = arith.constant 0 : index
    %95 = vector.load %arg11[%94, %c0_38, %c0_39] : memref<2x8x256xbf16, #tpu.memory_space<vmem>>, vector<1x8x256xbf16>
    %96 = vector.shape_cast %95 : vector<1x8x256xbf16> to vector<8x256xbf16>
    %97 = vector.shape_cast %76 : vector<8x256xbf16> to vector<1x8x256xbf16>
    tpu.vector_store %arg11[%94, %c0_38, %c0_39], %97 {strides = array<i32>} : memref<2x8x256xbf16, #tpu.memory_space<vmem>>, vector<1x8x256xbf16>,
    %98 = arith.index_cast %9 : i32 to index
    %c0_40 = arith.constant 0 : index
    %c0_41 = arith.constant 0 : index
    %99 = vector.load %arg12[%98, %c0_40, %c0_41] : memref<2x8x256xbf16, #tpu.memory_space<vmem>>, vector<1x8x256xbf16>
    %100 = vector.shape_cast %99 : vector<1x8x256xbf16> to vector<8x256xbf16>
    %101 = vector.shape_cast %77 : vector<8x256xbf16> to vector<1x8x256xbf16>
    tpu.vector_store %arg12[%98, %c0_40, %c0_41], %101 {strides = array<i32>} : memref<2x8x256xbf16, #tpu.memory_space<vmem>>, vector<1x8x256xbf16>,
    %c0_i32_42 = arith.constant 0 : i32
    %c0_i32_43 = arith.constant 0 : i32
    %c0_i32_44 = arith.constant 0 : i32
    %102 = tpu.memref_slice %arg11[%9, %c0_i32_43, %c0_i32_44] : memref<2x8x256xbf16, #tpu.memory_space<vmem>> -> memref<1x8x256xbf16, #tpu.memory_space<vmem>>
    %103 = tpu.memref_squeeze %102 : memref<1x8x256xbf16, #tpu.memory_space<vmem>> -> memref<8x256xbf16, #tpu.memory_space<vmem>>
    %c0_i32_45 = arith.constant 0 : i32
    %c0_i32_46 = arith.constant 0 : i32
    %104 = tpu.memref_slice %arg9[%arg0, %c0_i32_45, %c0_i32_46] : memref<2x32x256xbf16, #tpu.memory_space<any>> -> memref<1x8x256xbf16, #tpu.memory_space<any>>
    %105 = tpu.memref_squeeze %104 : memref<1x8x256xbf16, #tpu.memory_space<any>> -> memref<8x256xbf16, #tpu.memory_space<any>>
    %106 = tpu.memref_slice %arg16[%c0_i32_42] : memref<2x!tpu.dma_semaphore, #tpu.memory_space<semaphore_mem>> -> memref<1x!tpu.dma_semaphore, #tpu.memory_space<semaphore_mem>>
    %107 = tpu.memref_squeeze %106 : memref<1x!tpu.dma_semaphore, #tpu.memory_space<semaphore_mem>> -> memref<!tpu.dma_semaphore, #tpu.memory_space<semaphore_mem>>
    tpu.enqueue_dma source(%103 : memref<8x256xbf16, #tpu.memory_space<vmem>>) target(%105 : memref<8x256xbf16, #tpu.memory_space<any>>) target_semaphore(%107 : memref<!tpu.dma_semaphore, #tpu.memory_space<semaphore_mem>>)
    %c1_i32_47 = arith.constant 1 : i32
    %c0_i32_48 = arith.constant 0 : i32
    %c0_i32_49 = arith.constant 0 : i32
    %108 = tpu.memref_slice %arg12[%9, %c0_i32_48, %c0_i32_49] : memref<2x8x256xbf16, #tpu.memory_space<vmem>> -> memref<1x8x256xbf16, #tpu.memory_space<vmem>>
    %109 = tpu.memref_squeeze %108 : memref<1x8x256xbf16, #tpu.memory_space<vmem>> -> memref<8x256xbf16, #tpu.memory_space<vmem>>
    %c0_i32_50 = arith.constant 0 : i32
    %c0_i32_51 = arith.constant 0 : i32
    %110 = tpu.memref_slice %arg10[%arg0, %c0_i32_50, %c0_i32_51] : memref<2x32x256xbf16, #tpu.memory_space<any>> -> memref<1x8x256xbf16, #tpu.memory_space<any>>
    %111 = tpu.memref_squeeze %110 : memref<1x8x256xbf16, #tpu.memory_space<any>> -> memref<8x256xbf16, #tpu.memory_space<any>>
    %112 = tpu.memref_slice %arg16[%c1_i32_47] : memref<2x!tpu.dma_semaphore, #tpu.memory_space<semaphore_mem>> -> memref<1x!tpu.dma_semaphore, #tpu.memory_space<semaphore_mem>>
    %113 = tpu.memref_squeeze %112 : memref<1x!tpu.dma_semaphore, #tpu.memory_space<semaphore_mem>> -> memref<!tpu.dma_semaphore, #tpu.memory_space<semaphore_mem>>
    tpu.enqueue_dma source(%109 : memref<8x256xbf16, #tpu.memory_space<vmem>>) target(%111 : memref<8x256xbf16, #tpu.memory_space<any>>) target_semaphore(%113 : memref<!tpu.dma_semaphore, #tpu.memory_space<semaphore_mem>>)
    %114 = tpu.iota {dimensions = array<i32: 0>} : vector<16x8xi32>
    %115 = tpu.iota {dimensions = array<i32: 1>} : vector<16x8xi32>
    %c8_i32 = arith.constant 8 : i32
    %c0_i32_52 = arith.constant 0 : i32
    %116 = arith.cmpi eq, %c8_i32, %c0_i32_52 : i32
    %c1_i32_53 = arith.constant 1 : i32
    %117 = arith.select %116, %c1_i32_53, %c8_i32 : i32
    %118 = vector.broadcast %117 : i32 to vector<16x8xi32>
    %119 = arith.remsi %114, %118 : vector<16x8xi32>
    %c0_i32_54 = arith.constant 0 : i32
    %120 = vector.broadcast %c0_i32_54 : i32 to vector<16x8xi32>
    %121 = arith.cmpi ne, %119, %120 : vector<16x8xi32>
    %c0_i32_55 = arith.constant 0 : i32
    %122 = vector.broadcast %c0_i32_55 : i32 to vector<16x8xi32>
    %123 = arith.cmpi slt, %119, %122 : vector<16x8xi32>
    %c0_i32_56 = arith.constant 0 : i32
    %124 = arith.cmpi slt, %117, %c0_i32_56 : i32
    %125 = vector.broadcast %124 : i1 to vector<16x8xi1>
    %126 = vector.broadcast %125 : vector<16x8xi1> to vector<16x8xi1>
    %127 = arith.xori %123, %126 : vector<16x8xi1>
    %128 = arith.andi %127, %121 : vector<16x8xi1>
    %129 = vector.broadcast %117 : i32 to vector<16x8xi32>
    %130 = arith.addi %119, %129 : vector<16x8xi32>
    %131 = arith.select %128, %130, %119 : vector<16x8xi1>, vector<16x8xi32>
    %c0_i32_57 = arith.constant 0 : i32
    %132 = vector.broadcast %c0_i32_57 : i32 to vector<16x8xi32>
    %133 = arith.addi %132, %131 : vector<16x8xi32>
    %134 = arith.cmpi sle, %115, %133 : vector<16x8xi32>
    %c0_58 = arith.constant 0 : index
    %c0_59 = arith.constant 0 : index
    %c0_60 = arith.constant 0 : index
    %135 = vector.load %arg13[%c0_58, %c0_59, %c0_60] : memref<2x16x128xbf16, #tpu.memory_space<vmem>>, vector<1x16x128xbf16>
    %136 = vector.shape_cast %135 : vector<1x16x128xbf16> to vector<16x128xbf16>
    %137 = arith.index_cast %9 : i32 to index
    %c0_61 = arith.constant 0 : index
    %c0_62 = arith.constant 0 : index
    %138 = vector.load %arg11[%137, %c0_61, %c0_62] : memref<2x8x256xbf16, #tpu.memory_space<vmem>>, vector<1x8x128xbf16>
    %139 = vector.shape_cast %138 : vector<1x8x128xbf16> to vector<8x128xbf16>
    %140 = arith.index_cast %9 : i32 to index
    %c0_63 = arith.constant 0 : index
    %c0_64 = arith.constant 0 : index
    %141 = vector.load %arg12[%140, %c0_63, %c0_64] : memref<2x8x256xbf16, #tpu.memory_space<vmem>>, vector<1x8x128xbf16>
    %142 = vector.shape_cast %141 : vector<1x8x128xbf16> to vector<8x128xbf16>
    %cst_65 = arith.constant dense<0.000000e+00> : vector<16x8xf32>
    %143 = tpu.matmul %136, %139, %cst_65 {dimension_numbers = #tpu.dot_dimension_numbers<[1], [1], [0], [0], [0, 0, 1, 0], [], []>} : vector<16x128xbf16>, vector<8x128xbf16>, vector<16x8xf32> -> vector<16x8xf32>
    %cst_66 = arith.constant -1.000000e+30 : f32
    %144 = vector.broadcast %cst_66 : f32 to vector<16x8xf32>
    %145 = arith.select %134, %143, %144 : vector<16x8xi1>, vector<16x8xf32>
    %cst_67 = arith.constant dense<0xFF800000> : vector<16xf32>
    %146 = vector.multi_reduction <maximumf>, %145, %cst_67 [1] : vector<16x8xf32> to vector<16xf32>
    %147 = vector.shape_cast %146 : vector<16xf32> to vector<16x1xf32>
    %148 = vector.broadcast %147 : vector<16x1xf32> to vector<16x8xf32>
    %149 = arith.subf %145, %148 : vector<16x8xf32>
    %150 = math.exp %149 : vector<16x8xf32>
    %cst_68 = arith.constant dense<0.000000e+00> : vector<16xf32>
    %151 = vector.multi_reduction <add>, %150, %cst_68 [1] : vector<16x8xf32> to vector<16xf32>
    %152 = vector.shape_cast %151 : vector<16xf32> to vector<16x1xf32>
    %153 = tpu.reciprocal %152 {approx = true} : vector<16x1xf32> -> vector<16x1xf32>
    %154 = vector.broadcast %153 : vector<16x1xf32> to vector<16x8xf32>
    %155 = arith.mulf %150, %154 : vector<16x8xf32>
    %156 = arith.truncf %155 : vector<16x8xf32> to vector<16x8xbf16>
    %cst_69 = arith.constant dense<0.000000e+00> : vector<16x128xf32>
    %157 = tpu.matmul %156, %142, %cst_69 {dimension_numbers = #tpu.dot_dimension_numbers<[1], [0], [0], [1], [0, 0, 1, 1], [], []>} : vector<16x8xbf16>, vector<8x128xbf16>, vector<16x128xf32> -> vector<16x128xf32>
    %158 = vector.extract_strided_slice %157 {offsets = [0, 0], sizes = [8, 128], strides = [1, 1]} : vector<16x128xf32> to vector<8x128xf32>
    %159 = arith.truncf %158 : vector<8x128xf32> to vector<8x128xbf16>
    %c0_70 = arith.constant 0 : index
    %c0_71 = arith.constant 0 : index
    %160 = vector.load %arg14[%c0_70, %c0_71] : memref<8x512xbf16, #tpu.memory_space<vmem>>, vector<8x128xbf16>
    tpu.vector_store %arg14[%c0_70, %c0_71], %159 {strides = array<i32>} : memref<8x512xbf16, #tpu.memory_space<vmem>>, vector<8x128xbf16>,
    %161 = vector.extract_strided_slice %157 {offsets = [8, 0], sizes = [8, 128], strides = [1, 1]} : vector<16x128xf32> to vector<8x128xf32>
    %162 = arith.truncf %161 : vector<8x128xf32> to vector<8x128xbf16>
    %c0_72 = arith.constant 0 : index
    %c128 = arith.constant 128 : index
    %163 = vector.load %arg14[%c0_72, %c128] : memref<8x512xbf16, #tpu.memory_space<vmem>>, vector<8x128xbf16>
    tpu.vector_store %arg14[%c0_72, %c128], %162 {strides = array<i32>} : memref<8x512xbf16, #tpu.memory_space<vmem>>, vector<8x128xbf16>,
    %c1_73 = arith.constant 1 : index
    %c0_74 = arith.constant 0 : index
    %c0_75 = arith.constant 0 : index
    %164 = vector.load %arg13[%c1_73, %c0_74, %c0_75] : memref<2x16x128xbf16, #tpu.memory_space<vmem>>, vector<1x16x128xbf16>
    %165 = vector.shape_cast %164 : vector<1x16x128xbf16> to vector<16x128xbf16>
    %166 = arith.index_cast %9 : i32 to index
    %c0_76 = arith.constant 0 : index
    %c128_77 = arith.constant 128 : index
    %167 = vector.load %arg11[%166, %c0_76, %c128_77] : memref<2x8x256xbf16, #tpu.memory_space<vmem>>, vector<1x8x128xbf16>
    %168 = vector.shape_cast %167 : vector<1x8x128xbf16> to vector<8x128xbf16>
    %169 = arith.index_cast %9 : i32 to index
    %c0_78 = arith.constant 0 : index
    %c128_79 = arith.constant 128 : index
    %170 = vector.load %arg12[%169, %c0_78, %c128_79] : memref<2x8x256xbf16, #tpu.memory_space<vmem>>, vector<1x8x128xbf16>
    %171 = vector.shape_cast %170 : vector<1x8x128xbf16> to vector<8x128xbf16>
    %cst_80 = arith.constant dense<0.000000e+00> : vector<16x8xf32>
    %172 = tpu.matmul %165, %168, %cst_80 {dimension_numbers = #tpu.dot_dimension_numbers<[1], [1], [0], [0], [0, 0, 1, 0], [], []>} : vector<16x128xbf16>, vector<8x128xbf16>, vector<16x8xf32> -> vector<16x8xf32>
    %cst_81 = arith.constant -1.000000e+30 : f32
    %173 = vector.broadcast %cst_81 : f32 to vector<16x8xf32>
    %174 = arith.select %134, %172, %173 : vector<16x8xi1>, vector<16x8xf32>
    %cst_82 = arith.constant dense<0xFF800000> : vector<16xf32>
    %175 = vector.multi_reduction <maximumf>, %174, %cst_82 [1] : vector<16x8xf32> to vector<16xf32>
    %176 = vector.shape_cast %175 : vector<16xf32> to vector<16x1xf32>
    %177 = vector.broadcast %176 : vector<16x1xf32> to vector<16x8xf32>
    %178 = arith.subf %174, %177 : vector<16x8xf32>
    %179 = math.exp %178 : vector<16x8xf32>
    %cst_83 = arith.constant dense<0.000000e+00> : vector<16xf32>
    %180 = vector.multi_reduction <add>, %179, %cst_83 [1] : vector<16x8xf32> to vector<16xf32>
    %181 = vector.shape_cast %180 : vector<16xf32> to vector<16x1xf32>
    %182 = tpu.reciprocal %181 {approx = true} : vector<16x1xf32> -> vector<16x1xf32>
    %183 = vector.broadcast %182 : vector<16x1xf32> to vector<16x8xf32>
    %184 = arith.mulf %179, %183 : vector<16x8xf32>
    %185 = arith.truncf %184 : vector<16x8xf32> to vector<16x8xbf16>
    %cst_84 = arith.constant dense<0.000000e+00> : vector<16x128xf32>
    %186 = tpu.matmul %185, %171, %cst_84 {dimension_numbers = #tpu.dot_dimension_numbers<[1], [0], [0], [1], [0, 0, 1, 1], [], []>} : vector<16x8xbf16>, vector<8x128xbf16>, vector<16x128xf32> -> vector<16x128xf32>
    %187 = vector.extract_strided_slice %186 {offsets = [0, 0], sizes = [8, 128], strides = [1, 1]} : vector<16x128xf32> to vector<8x128xf32>
    %188 = arith.truncf %187 : vector<8x128xf32> to vector<8x128xbf16>
    %c0_85 = arith.constant 0 : index
    %c256 = arith.constant 256 : index
    %189 = vector.load %arg14[%c0_85, %c256] : memref<8x512xbf16, #tpu.memory_space<vmem>>, vector<8x128xbf16>
    tpu.vector_store %arg14[%c0_85, %c256], %188 {strides = array<i32>} : memref<8x512xbf16, #tpu.memory_space<vmem>>, vector<8x128xbf16>,
    %190 = vector.extract_strided_slice %186 {offsets = [8, 0], sizes = [8, 128], strides = [1, 1]} : vector<16x128xf32> to vector<8x128xf32>
    %191 = arith.truncf %190 : vector<8x128xf32> to vector<8x128xbf16>
    %c0_86 = arith.constant 0 : index
    %c384 = arith.constant 384 : index
    %192 = vector.load %arg14[%c0_86, %c384] : memref<8x512xbf16, #tpu.memory_space<vmem>>, vector<8x128xbf16>
    tpu.vector_store %arg14[%c0_86, %c384], %191 {strides = array<i32>} : memref<8x512xbf16, #tpu.memory_space<vmem>>, vector<8x128xbf16>,
    %c0_87 = arith.constant 0 : index
    %c0_88 = arith.constant 0 : index
    %193 = vector.load %arg14[%c0_87, %c0_88] : memref<8x512xbf16, #tpu.memory_space<vmem>>, vector<8x512xbf16>
    %c0_89 = arith.constant 0 : index
    %c0_90 = arith.constant 0 : index
    %194 = vector.load %arg5[%c0_89, %c0_90] : memref<512x512xbf16, #tpu.memory_space<vmem>>, vector<512x512xbf16>
    %cst_91 = arith.constant dense<0.000000e+00> : vector<8x512xf32>
    %195 = tpu.matmul %193, %194, %cst_91 {dimension_numbers = #tpu.dot_dimension_numbers<[1], [0], [0], [1], [0, 0, 1, 1], [], []>} : vector<8x512xbf16>, vector<512x512xbf16>, vector<8x512xf32> -> vector<8x512xf32>
    %196 = arith.truncf %195 : vector<8x512xf32> to vector<8x512xbf16>
    %c0_92 = arith.constant 0 : index
    %c0_93 = arith.constant 0 : index
    %c0_94 = arith.constant 0 : index
    %197 = vector.load %arg8[%c0_92, %c0_93, %c0_94] : memref<1x8x512xbf16, #tpu.memory_space<vmem>>, vector<1x8x512xbf16>
    %198 = vector.shape_cast %197 : vector<1x8x512xbf16> to vector<8x512xbf16>
    %199 = vector.shape_cast %196 : vector<8x512xbf16> to vector<1x8x512xbf16>
    tpu.vector_store %arg8[%c0_92, %c0_93, %c0_94], %199 {strides = array<i32>} : memref<1x8x512xbf16, #tpu.memory_space<vmem>>, vector<1x8x512xbf16>,
    %c0_i32_95 = arith.constant 0 : i32
    %c0_i32_96 = arith.constant 0 : i32
    %c0_i32_97 = arith.constant 0 : i32
    %200 = tpu.memref_slice %arg11[%9, %c0_i32_96, %c0_i32_97] : memref<2x8x256xbf16, #tpu.memory_space<vmem>> -> memref<1x8x256xbf16, #tpu.memory_space<vmem>>
    %201 = tpu.memref_squeeze %200 : memref<1x8x256xbf16, #tpu.memory_space<vmem>> -> memref<8x256xbf16, #tpu.memory_space<vmem>>
    %c0_i32_98 = arith.constant 0 : i32
    %c0_i32_99 = arith.constant 0 : i32
    %202 = tpu.memref_slice %arg9[%arg0, %c0_i32_98, %c0_i32_99] : memref<2x32x256xbf16, #tpu.memory_space<any>> -> memref<1x8x256xbf16, #tpu.memory_space<any>>
    %203 = tpu.memref_squeeze %202 : memref<1x8x256xbf16, #tpu.memory_space<any>> -> memref<8x256xbf16, #tpu.memory_space<any>>
    %204 = tpu.memref_slice %arg16[%c0_i32_95] : memref<2x!tpu.dma_semaphore, #tpu.memory_space<semaphore_mem>> -> memref<1x!tpu.dma_semaphore, #tpu.memory_space<semaphore_mem>>
    %205 = tpu.memref_squeeze %204 : memref<1x!tpu.dma_semaphore, #tpu.memory_space<semaphore_mem>> -> memref<!tpu.dma_semaphore, #tpu.memory_space<semaphore_mem>>
    tpu.wait_dma2 semaphore(%205 : memref<!tpu.dma_semaphore, #tpu.memory_space<semaphore_mem>>) src(%201 : memref<8x256xbf16, #tpu.memory_space<vmem>>) dst(%203 : memref<8x256xbf16, #tpu.memory_space<any>>)
    %c1_i32_100 = arith.constant 1 : i32
    %c0_i32_101 = arith.constant 0 : i32
    %c0_i32_102 = arith.constant 0 : i32
    %206 = tpu.memref_slice %arg12[%9, %c0_i32_101, %c0_i32_102] : memref<2x8x256xbf16, #tpu.memory_space<vmem>> -> memref<1x8x256xbf16, #tpu.memory_space<vmem>>
    %207 = tpu.memref_squeeze %206 : memref<1x8x256xbf16, #tpu.memory_space<vmem>> -> memref<8x256xbf16, #tpu.memory_space<vmem>>
    %c0_i32_103 = arith.constant 0 : i32
    %c0_i32_104 = arith.constant 0 : i32
    %208 = tpu.memref_slice %arg10[%arg0, %c0_i32_103, %c0_i32_104] : memref<2x32x256xbf16, #tpu.memory_space<any>> -> memref<1x8x256xbf16, #tpu.memory_space<any>>
    %209 = tpu.memref_squeeze %208 : memref<1x8x256xbf16, #tpu.memory_space<any>> -> memref<8x256xbf16, #tpu.memory_space<any>>
    %210 = tpu.memref_slice %arg16[%c1_i32_100] : memref<2x!tpu.dma_semaphore, #tpu.memory_space<semaphore_mem>> -> memref<1x!tpu.dma_semaphore, #tpu.memory_space<semaphore_mem>>
    %211 = tpu.memref_squeeze %210 : memref<1x!tpu.dma_semaphore, #tpu.memory_space<semaphore_mem>> -> memref<!tpu.dma_semaphore, #tpu.memory_space<semaphore_mem>>
    tpu.wait_dma2 semaphore(%211 : memref<!tpu.dma_semaphore, #tpu.memory_space<semaphore_mem>>) src(%207 : memref<8x256xbf16, #tpu.memory_space<vmem>>) dst(%209 : memref<8x256xbf16, #tpu.memory_space<any>>)
    return
  }
  func.func @transform_0(%arg0: i32) -> (i32, i32, i32) {
    %c0_i32 = arith.constant 0 : i32
    %c0_i32_0 = arith.constant 0 : i32
    %c0_i32_1 = arith.constant 0 : i32
    return %arg0, %c0_i32, %c0_i32_0 : i32, i32, i32
  }
  func.func @transform_1(%arg0: i32) -> (i32, i32) {
    %c0_i32 = arith.constant 0 : i32
    %c0_i32_0 = arith.constant 0 : i32
    %c0_i32_1 = arith.constant 0 : i32
    return %c0_i32, %c0_i32_0 : i32, i32
  }
  func.func @transform_2(%arg0: i32) -> (i32, i32) {
    %c0_i32 = arith.constant 0 : i32
    %c0_i32_0 = arith.constant 0 : i32
    %c0_i32_1 = arith.constant 0 : i32
    return %c0_i32, %c0_i32_0 : i32, i32
  }
  func.func @transform_3(%arg0: i32) -> (i32, i32) {
    %c0_i32 = arith.constant 0 : i32
    %c0_i32_0 = arith.constant 0 : i32
    %c0_i32_1 = arith.constant 0 : i32
    return %c0_i32, %c0_i32_0 : i32, i32
  }
  func.func @transform_4(%arg0: i32) -> (i32, i32) {
    %c0_i32 = arith.constant 0 : i32
    %c0_i32_0 = arith.constant 0 : i32
    %c0_i32_1 = arith.constant 0 : i32
    return %c0_i32, %c0_i32_0 : i32, i32
  }
  func.func @transform_7(%arg0: i32) -> (i32, i32, i32) {
    %c0_i32 = arith.constant 0 : i32
    %c0_i32_0 = arith.constant 0 : i32
    %c0_i32_1 = arith.constant 0 : i32
    return %arg0, %c0_i32, %c0_i32_0 : i32, i32, i32
  }
}

</mosaic_0001>

<llo_original>
// kernel: tpu_custom_call.1
$region0: #{tpu_custom_call.1}
  #allocation0 [shape = 'u32[]', space=smem, size = 0x4, offset = 0x4, fixed_abs, tag = 'smem constant byte address 0x4 - core index']
  #allocation1 [shape = 'u32[144,128]{1,0:T(1,128)}', space=vmem, size = 0x12000, scoped, tag = 'internal scratch']
  #allocation2 [shape = 'bf16[2,8,256]{2,1,0:T(8,128)(2,1)}', space=vmem, size = 0x2000, scoped, tag = 'scratch operand']
  #allocation3 [shape = 'bf16[2,8,256]{2,1,0:T(8,128)(2,1)}', space=vmem, size = 0x2000, scoped, tag = 'scratch operand']
  #allocation4 [shape = 'bf16[2,16,128]{2,1,0:T(16,128)(2,1)}', space=vmem, size = 0x2000, scoped, tag = 'scratch operand']
  #allocation5 [shape = 'bf16[8,512]{1,0:T(8,128)(2,1)}', space=vmem, size = 0x2000, scoped, tag = 'scratch operand']
  #allocation6 [shape = 's32[4]{0}', space=sflag, size = 0x10, scoped, tag = 'scratch operand']
  #allocation7 [shape = 's32[2]{0}', space=sflag, size = 0x8, scoped, tag = 'scratch operand']
  #allocation14 [shape = 's32[]', space=sflag, size = 0x4, offset = 0, fixed_abs, tag = 'sflag constant byte address 0x0 - dummy sync flag']
  #allocation15 [shape = 's32[]', space=sflag, size = 0x4, offset = 0, fixed_abs, tag = 'sflag constant byte address 0x0 - dummy sync flag']
  #allocation16 [shape = 'u32[]', space=smem, size = 0x4, offset = 0x44, fixed_abs, tag = 'smem constant byte address 0x44 - assertion arg 0']
  #allocation17 [shape = 'u32[]', space=smem, size = 0x4, offset = 0x48, fixed_abs, tag = 'smem constant byte address 0x48 - assertion arg 1']
  #allocation18 [shape = 's32[]', space=sflag, size = 0x4, offset = 0, fixed_abs, tag = 'sflag constant byte address 0x0 - dummy sync flag']
  #allocation19 [shape = 's32[]', space=sflag, size = 0x4, offset = 0, fixed_abs, tag = 'sflag constant byte address 0x0 - dummy sync flag']
  %s0 = inlined_call_operand.vmem [shape: bf16[2,8,512], index: 0, kind: input, shape index: {}]
  %s1 = inlined_call_operand.vmem [shape: f32[8,128], index: 1, kind: input, shape index: {}]
  %s2 = inlined_call_operand.vmem [shape: f32[8,128], index: 2, kind: input, shape index: {}]
  %s3 = inlined_call_operand.hbm [shape: bf16[512,1024], index: 3, kind: input, shape index: {}]
  %s4 = inlined_call_operand.hbm [shape: bf16[512,512], index: 4, kind: input, shape index: {}]
  %s5 = inlined_call_operand.hbm [shape: bf16[2,32,256], index: 5, kind: input, shape index: {}, may-alias: {5,8}]
  %s6 = inlined_call_operand.hbm [shape: bf16[2,32,256], index: 6, kind: input, shape index: {}, may-alias: {6,9}]
  %s7 = inlined_call_operand.hbm [shape: bf16[2,8,512], index: 7, kind: output, shape index: {0}]
  %s8 = inlined_call_operand.hbm [shape: bf16[2,32,256], index: 8, kind: output, shape index: {1}, may-alias: {5,8}]
  %s9 = inlined_call_operand.hbm [shape: bf16[2,32,256], index: 9, kind: output, shape index: {2}, may-alias: {6,9}]
  %10 = xla_tuple %s7, %s8, %s9
  %s11 = sld [smem:[#allocation0]]
  $region69: #{tpu_custom_call.1} parent=0
    _
  %s13 = ssub.s32 1, %s11
  %s14 = scalar_select 0, %s13, %s11
  $region1: #{tpu_custom_call.1} parent=0
    #allocation8 [shape = 'u8[1048576]{0}', space=vmem, size = 0x100000, scoped, tag = 'input window, operand 3, single buffered']
    #allocation9 [shape = 's32[2]{0}', space=sflag, size = 0x8, scoped, tag = 'scoped memory for tpu_custom_call.1']
    #allocation10 [shape = 's32[2]{0}', space=sflag, size = 0x8, scoped, tag = 'scoped memory for tpu_custom_call.1']
    #allocation11 [shape = 'u8[524288]{0}', space=vmem, size = 0x80000, scoped, tag = 'input window, operand 4, single buffered']
    #allocation12 [shape = 's32[1]{0}', space=sflag, size = 0x4, scoped, tag = 'scoped memory for tpu_custom_call.1']
    #allocation13 [shape = 'u8[16384]{0}', space=vmem, size = 0x4000, scoped, tag = 'output window, operand 0']
    %15 = vsyncpa [#allocation9], 0
    %16 = vsyncpa [#allocation12], 0
    %17 = vsyncpa [#allocation10], 0
    %s18 = scalar_lea.sflag [#allocation10], 1
    %19 = vsyncpa %s18, 0
    loop: start=0, step=1, limit=4
    $region2: #{tpu_custom_call.1} parent=1 // loop_pre_header
      _
    $region3: #{tpu_custom_call.1} parent=1 // loop_header
      %s21 = sphi 0, %s25
      %p22 = scmp.ge.s32.totalorder %s21, 4
      %s31 = sphi 0, %s33
      %s34 = sphi 0, %s31
      %s35 = sphi 0, %s34
      %s51 = sphi 0, %s35
      %s55 = sphi 0, %s55
      %s57 = sphi 0, %s55
      %s58 = sphi 0, %s57
      %s72 = sphi 0, %s58
      %s76 = sphi 0, %s76
      %s78 = sphi 0, %s76
      %s79 = sphi 0, %s78
      %s93 = sphi 0, %s79
      %s97 = sphi 0, %s97
      %s99 = sphi 0, %s97
      %s100 = sphi 0, %s99
      %s114 = sphi 0, %s100
      %s118 = sphi 0, %s118
      %s120 = sphi 0, %s118
      %s121 = sphi 0, %s120
      %s135 = sphi 0, %s121
      %s141 = sphi 0, %s143
      %s144 = sphi 0, %s141
      %s145 = sphi 0, %s144
      %s161 = sphi 0, %s145
    $region4: #{tpu_custom_call.1} parent=1 // loop_header_branch
      %24 = sbr.rel (%p22) target = $region8
    $region5: #{tpu_custom_call.1} parent=1 // loop_body
      %s26 = ssub.s32 %s21, 1
      %s27 = ssub.s32 %s21, 2
      %s28 = sadd.s32 %s21, 1
      %s29 = ssub.s32 %s21, %s28
      %p30 = scmp.eq.s32.totalorder %s29, 0
      %s32 = sadd.s32 %s31, 1
      %s33 = scalar_select %p30, %s31, %s32
      %p36 = pneg %p30
      %p37 = scmp.eq.s32.totalorder %s21, 1
      %p38 = por %p36, %p37
      %p39 = scmp.ne.s32.totalorder %s31, %s34
      %p40 = scmp.eq.s32.totalorder %s21, 0
      %p41 = por %p39, %p40
      %p42 = scmp.ne.s32.totalorder %s31, %s34
      %p43 = scmp.eq.s32.totalorder %s26, 1
      %p44 = por %p42, %p43
      %p45 = scmp.ne.s32.totalorder %s34, %s35
      %p46 = scmp.eq.s32.totalorder %s26, 0
      %p47 = por %p45, %p46
      %p48 = scmp.ne.s32.totalorder %s34, %s35
      %p49 = scmp.eq.s32.totalorder %s27, 1
      %p50 = por %p48, %p49
      %p52 = scmp.ne.s32.totalorder %s35, %s51
      %p53 = scmp.eq.s32.totalorder %s27, 0
      %p54 = por %p52, %p53
      %s56 = sadd.s32 %s55, 1
      %p59 = scmp.eq.s32.totalorder %s21, 1
      %p60 = scmp.ne.s32.totalorder %s55, %s57
      %p61 = scmp.eq.s32.totalorder %s21, 0
      %p62 = por %p60, %p61
      %p63 = scmp.ne.s32.totalorder %s55, %s57
      %p64 = scmp.eq.s32.totalorder %s26, 1
      %p65 = por %p63, %p64
      %p66 = scmp.ne.s32.totalorder %s57, %s58
      %p67 = scmp.eq.s32.totalorder %s26, 0
      %p68 = por %p66, %p67
      %p69 = scmp.ne.s32.totalorder %s57, %s58
      %p70 = scmp.eq.s32.totalorder %s27, 1
      %p71 = por %p69, %p70
      %p73 = scmp.ne.s32.totalorder %s58, %s72
      %p74 = scmp.eq.s32.totalorder %s27, 0
      %p75 = por %p73, %p74
      %s77 = sadd.s32 %s76, 1
      %p80 = scmp.eq.s32.totalorder %s21, 1
      %p81 = scmp.ne.s32.totalorder %s76, %s78
      %p82 = scmp.eq.s32.totalorder %s21, 0
      %p83 = por %p81, %p82
      %p84 = scmp.ne.s32.totalorder %s76, %s78
      %p85 = scmp.eq.s32.totalorder %s26, 1
      %p86 = por %p84, %p85
      %p87 = scmp.ne.s32.totalorder %s78, %s79
      %p88 = scmp.eq.s32.totalorder %s26, 0
      %p89 = por %p87, %p88
      %p90 = scmp.ne.s32.totalorder %s78, %s79
      %p91 = scmp.eq.s32.totalorder %s27, 1
      %p92 = por %p90, %p91
      %p94 = scmp.ne.s32.totalorder %s79, %s93
      %p95 = scmp.eq.s32.totalorder %s27, 0
      %p96 = por %p94, %p95
      %s98 = sadd.s32 %s97, 1
      %p101 = scmp.eq.s32.totalorder %s21, 1
      %p102 = scmp.ne.s32.totalorder %s97, %s99
      %p103 = scmp.eq.s32.totalorder %s21, 0
      %p104 = por %p102, %p103
      %p105 = scmp.ne.s32.totalorder %s97, %s99
      %p106 = scmp.eq.s32.totalorder %s26, 1
      %p107 = por %p105, %p106
      %p108 = scmp.ne.s32.totalorder %s99, %s100
      %p109 = scmp.eq.s32.totalorder %s26, 0
      %p110 = por %p108, %p109
      %p111 = scmp.ne.s32.totalorder %s99, %s100
      %p112 = scmp.eq.s32.totalorder %s27, 1
      %p113 = por %p111, %p112
      %p115 = scmp.ne.s32.totalorder %s100, %s114
      %p116 = scmp.eq.s32.totalorder %s27, 0
      %p117 = por %p115, %p116
      %s119 = sadd.s32 %s118, 1
      %p122 = scmp.eq.s32.totalorder %s21, 1
      %p123 = scmp.ne.s32.totalorder %s118, %s120
      %p124 = scmp.eq.s32.totalorder %s21, 0
      %p125 = por %p123, %p124
      %p126 = scmp.ne.s32.totalorder %s118, %s120
      %p127 = scmp.eq.s32.totalorder %s26, 1
      %p128 = por %p126, %p127
      %p129 = scmp.ne.s32.totalorder %s120, %s121
      %p130 = scmp.eq.s32.totalorder %s26, 0
      %p131 = por %p129, %p130
      %p132 = scmp.ne.s32.totalorder %s120, %s121
      %p133 = scmp.eq.s32.totalorder %s27, 1
      %p134 = por %p132, %p133
      %p136 = scmp.ne.s32.totalorder %s121, %s135
      %p137 = scmp.eq.s32.totalorder %s27, 0
      %p138 = por %p136, %p137
      %s139 = ssub.s32 %s21, %s28
      %p140 = scmp.eq.s32.totalorder %s139, 0
      %s142 = sadd.s32 %s141, 1
      %s143 = scalar_select %p140, %s141, %s142
      %p146 = pneg %p140
      %p147 = scmp.eq.s32.totalorder %s21, 1
      %p148 = por %p146, %p147
      %p149 = scmp.ne.s32.totalorder %s141, %s144
      %p150 = scmp.eq.s32.totalorder %s21, 0
      %p151 = por %p149, %p150
      %p152 = scmp.ne.s32.totalorder %s141, %s144
      %p153 = scmp.eq.s32.totalorder %s26, 1
      %p154 = por %p152, %p153
      %p155 = scmp.ne.s32.totalorder %s144, %s145
      %p156 = scmp.eq.s32.totalorder %s26, 0
      %p157 = por %p155, %p156
      %p158 = scmp.ne.s32.totalorder %s144, %s145
      %p159 = scmp.eq.s32.totalorder %s27, 1
      %p160 = por %p158, %p159
      %p162 = scmp.ne.s32.totalorder %s145, %s161
      %p163 = scmp.eq.s32.totalorder %s27, 0
      %p164 = por %p162, %p163
      %p165 = scmp.le.s32.totalorder 1, %s21
      %p166 = scmp.lt.s32.totalorder %s21, 3
      %p167 = pnand %p165, %p166
      %p168 = pneg %p167
      // Predicated region
      $region9: #{tpu_custom_call.1} parent=5 // pred_check
        _
      $region10: #{tpu_custom_call.1} parent=5 // pred_check_branch
        %170 = sbr.rel (%p167) target = $region12
      $region11: #{tpu_custom_call.1} parent=5 // pred_region
        %s171 = ssub.s32 %s21, 1
        // Predicated region
        $region13: #{tpu_custom_call.1} parent=11 // pred_check
          %p172 = pneg %p68
        $region14: #{tpu_custom_call.1} parent=11 // pred_check_branch
          %174 = sbr.rel (%p172) target = $region16
        $region15: #{tpu_custom_call.1} parent=11 // pred_region
          _
        $region16: #{tpu_custom_call.1} parent=11 // pred_fallthru
          _
        // Predicated region
        $region17: #{tpu_custom_call.1} parent=11 // pred_check
          %p175 = pneg %p89
        $region18: #{tpu_custom_call.1} parent=11 // pred_check_branch
          %177 = sbr.rel (%p175) target = $region20
        $region19: #{tpu_custom_call.1} parent=11 // pred_region
          _
        $region20: #{tpu_custom_call.1} parent=11 // pred_fallthru
          _
        // Predicated region
        $region21: #{tpu_custom_call.1} parent=11 // pred_check
          %p178 = pneg %p110
        $region22: #{tpu_custom_call.1} parent=11 // pred_check_branch
          %180 = sbr.rel (%p178) target = $region24
        $region23: #{tpu_custom_call.1} parent=11 // pred_region
          %s182 = ssub.s32 32768, 32768
          %183 = vsyncadd [#allocation9], %s182
          %s184 = sshll.u32 [#allocation8], 4
          %s185 = int_to_ptr.vmem [resolvable:$true] %s184
          %190 = dma.hbm_to_vmem [thread:$0]  %s3, 32768, %s185, [#allocation9], 512, 512, 32
        $region24: #{tpu_custom_call.1} parent=11 // pred_fallthru
          _
        // Predicated region
        $region25: #{tpu_custom_call.1} parent=11 // pred_check
          %p191 = pneg %p131
        $region26: #{tpu_custom_call.1} parent=11 // pred_check_branch
          %193 = sbr.rel (%p191) target = $region28
        $region27: #{tpu_custom_call.1} parent=11 // pred_region
          %s195 = ssub.s32 16384, 16384
          %196 = vsyncadd [#allocation12], %s195
          %s197 = sshll.u32 [#allocation11], 4
          %s198 = int_to_ptr.vmem [resolvable:$true] %s197
          %203 = dma.hbm_to_vmem [thread:$0]  %s4, 16384, %s198, [#allocation12], 256, 256, 16
        $region28: #{tpu_custom_call.1} parent=11 // pred_fallthru
          _
      $region12: #{tpu_custom_call.1} parent=5 // pred_fallthru
        _
      %p204 = scmp.lt.s32.totalorder %s21, 2
      // Predicated region
      $region29: #{tpu_custom_call.1} parent=5 // pred_check
        %p205 = pneg %p204
      $region30: #{tpu_custom_call.1} parent=5 // pred_check_branch
        %207 = sbr.rel (%p205) target = $region32
      $region31: #{tpu_custom_call.1} parent=5 // pred_region
        // Predicated region
        $region33: #{tpu_custom_call.1} parent=31 // pred_check
          %p208 = pneg %p41
        $region34: #{tpu_custom_call.1} parent=31 // pred_check_branch
          %210 = sbr.rel (%p208) target = $region36
        $region35: #{tpu_custom_call.1} parent=31 // pred_region
          %p211 = scmp.lt.s32.totalorder %s21, 1
          %s212 = scalar_select %p211, %s21, 1
          %s213 = smul.addr %s212, 4
          %s214 = smul.addr %s213, 4
          %s215 = scalar_lea.vmem %s0, %s214
        $region36: #{tpu_custom_call.1} parent=31 // pred_fallthru
          _
      $region32: #{tpu_custom_call.1} parent=5 // pred_fallthru
        _
      %p216 = scmp.le.s32.totalorder 1, %s21
      %p217 = scmp.lt.s32.totalorder %s21, 3
      %p218 = pnand %p216, %p217
      %p219 = pneg %p218
      // Predicated region
      $region37: #{tpu_custom_call.1} parent=5 // pred_check
        _
      $region38: #{tpu_custom_call.1} parent=5 // pred_check_branch
        %221 = sbr.rel (%p218) target = $region40
      $region39: #{tpu_custom_call.1} parent=5 // pred_region
        %s222 = ssub.s32 %s21, 1
        // Predicated region
        $region41: #{tpu_custom_call.1} parent=39 // pred_check
          %p223 = pneg %p110
        $region42: #{tpu_custom_call.1} parent=39 // pred_check_branch
          %225 = sbr.rel (%p223) target = $region44
        $region43: #{tpu_custom_call.1} parent=39 // pred_region
          %226 = dma.done [#allocation9], 32768
        $region44: #{tpu_custom_call.1} parent=39 // pred_fallthru
          _
        // Predicated region
        $region45: #{tpu_custom_call.1} parent=39 // pred_check
          %p227 = pneg %p131
        $region46: #{tpu_custom_call.1} parent=39 // pred_check_branch
          %229 = sbr.rel (%p227) target = $region48
        $region47: #{tpu_custom_call.1} parent=39 // pred_region
          %230 = dma.done [#allocation12], 16384
        $region48: #{tpu_custom_call.1} parent=39 // pred_fallthru
          _
        %p231 = scmp.lt.s32.totalorder %s26, 1
        %s232 = scalar_select %p231, %s26, 1
        %s233 = smul.addr %s232, 4
        %s234 = smul.addr %s233, 4
        %s235 = scalar_lea.vmem %s0, %s234
        %p236 = pneg %p47
        %p237 = pneg %p44
        %p238 = pneg %p68
        %p239 = pneg %p65
        %p240 = pneg %p89
        %p241 = pneg %p86
        %p242 = pneg %p110
        %p243 = pneg %p107
        %p244 = pneg %p131
        %p245 = pneg %p128
        %p246 = pneg %p157
        %p247 = pneg %p154
        %s248 = sand.u32 %s144, 1
        %s249 = scalar_lea.sflag [#allocation10], %s248
        %s250 = sand.u32 %s144, 1
        %s251 = smul.addr %s250, 16
        %s252 = scalar_lea.vmem [#allocation13], %s251
        %p253 = scmp.lt.s32.totalorder %s26, 1
        %s254 = scalar_select %p253, %s26, 1
        %s255 = smul.addr %s254, 4
        %s256 = smul.addr %s255, 4
        %s257 = scalar_lea.vmem %s0, %s256
        %p259 = scmp.lt.s32.totalorder %s26, 0
        %s260 = ssub.s32 0, %s26
        %s261 = scalar_select %p259, %s260, %s26
        %s262 = sand.u32 %s261, 1
        %s263 = ssub.s32 0, %s262
        %s264 = scalar_select %p259, %s263, %s262
        %p265 = scmp.ne.s32.totalorder %s264, 0
        %p266 = scmp.lt.s32.totalorder %s264, 0
        %p267 = pnand %p266, %p265
        %p268 = pneg %p267
        %s269 = sadd.s32 %s264, 2
        %s270 = scalar_select %p268, %s269, %s264
        %v271 = vld [vmem:[%s257] sm:$0xff]
        %v272 = vld [vmem:[%s257 + $0x8] sm:$0xff]
        %v273 = vld [vmem:[#allocation8] sm:$0xff]
        %v274 = vld [vmem:[#allocation8 + $0x8] sm:$0xff]
        %v275 = vld [vmem:[#allocation8 + $0x10] sm:$0xff]
        %v276 = vld [vmem:[#allocation8 + $0x18] sm:$0xff]
        %v277 = vld [vmem:[#allocation8 + $0x20] sm:$0xff]
        %v278 = vld [vmem:[#allocation8 + $0x28] sm:$0xff]
        %v279 = vld [vmem:[#allocation8 + $0x30] sm:$0xff]
        %v280 = vld [vmem:[#allocation8 + $0x38] sm:$0xff]
        %v281 = vld [vmem:[#allocation8 + $0x40] sm:$0xff]
        %v282 = vld [vmem:[#allocation8 + $0x48] sm:$0xff]
        %v283 = vld [vmem:[#allocation8 + $0x50] sm:$0xff]
        %v284 = vld [vmem:[#allocation8 + $0x58] sm:$0xff]
        %v285 = vld [vmem:[#allocation8 + $0x60] sm:$0xff]
        %v286 = vld [vmem:[#allocation8 + $0x68] sm:$0xff]
        %v287 = vld [vmem:[#allocation8 + $0x70] sm:$0xff]
        %v288 = vld [vmem:[#allocation8 + $0x78] sm:$0xff]
        %v289 = vld [vmem:[#allocation8 + $0x80] sm:$0xff]
        %v290 = vld [vmem:[#allocation8 + $0x88] sm:$0xff]
        %v291 = vld [vmem:[#allocation8 + $0x90] sm:$0xff]
        %v292 = vld [vmem:[#allocation8 + $0x98] sm:$0xff]
        %v293 = vld [vmem:[#allocation8 + $0xa0] sm:$0xff]
        %v294 = vld [vmem:[#allocation8 + $0xa8] sm:$0xff]
        %v295 = vld [vmem:[#allocation8 + $0xb0] sm:$0xff]
        %v296 = vld [vmem:[#allocation8 + $0xb8] sm:$0xff]
        %v297 = vld [vmem:[#allocation8 + $0xc0] sm:$0xff]
        %v298 = vld [vmem:[#allocation8 + $0xc8] sm:$0xff]
        %v299 = vld [vmem:[#allocation8 + $0xd0] sm:$0xff]
        %v300 = vld [vmem:[#allocation8 + $0xd8] sm:$0xff]
        %v301 = vld [vmem:[#allocation8 + $0xe0] sm:$0xff]
        %v302 = vld [vmem:[#allocation8 + $0xe8] sm:$0xff]
        %v303 = vld [vmem:[#allocation8 + $0xf0] sm:$0xff]
        %v304 = vld [vmem:[#allocation8 + $0xf8] sm:$0xff]
        %v305 = vld [vmem:[#allocation8 + $0x100] sm:$0xff]
        %v306 = vld [vmem:[#allocation8 + $0x108] sm:$0xff]
        %v307 = vld [vmem:[#allocation8 + $0x110] sm:$0xff]
        %v308 = vld [vmem:[#allocation8 + $0x118] sm:$0xff]
        %v309 = vld [vmem:[#allocation8 + $0x120] sm:$0xff]
        %v310 = vld [vmem:[#allocation8 + $0x128] sm:$0xff]
        %v311 = vld [vmem:[#allocation8 + $0x130] sm:$0xff]
        %v312 = vld [vmem:[#allocation8 + $0x138] sm:$0xff]
        %v313 = vld [vmem:[#allocation8 + $0x140] sm:$0xff]
        %v314 = vld [vmem:[#allocation8 + $0x148] sm:$0xff]
        %v315 = vld [vmem:[#allocation8 + $0x150] sm:$0xff]
        %v316 = vld [vmem:[#allocation8 + $0x158] sm:$0xff]
        %v317 = vld [vmem:[#allocation8 + $0x160] sm:$0xff]
        %v318 = vld [vmem:[#allocation8 + $0x168] sm:$0xff]
        %v319 = vld [vmem:[#allocation8 + $0x170] sm:$0xff]
        %v320 = vld [vmem:[#allocation8 + $0x178] sm:$0xff]
        %v321 = vld [vmem:[#allocation8 + $0x180] sm:$0xff]
        %v322 = vld [vmem:[#allocation8 + $0x188] sm:$0xff]
        %v323 = vld [vmem:[#allocation8 + $0x190] sm:$0xff]
        %v324 = vld [vmem:[#allocation8 + $0x198] sm:$0xff]
        %v325 = vld [vmem:[#allocation8 + $0x1a0] sm:$0xff]
        %v326 = vld [vmem:[#allocation8 + $0x1a8] sm:$0xff]
        %v327 = vld [vmem:[#allocation8 + $0x1b0] sm:$0xff]
        %v328 = vld [vmem:[#allocation8 + $0x1b8] sm:$0xff]
        %v329 = vld [vmem:[#allocation8 + $0x1c0] sm:$0xff]
        %v330 = vld [vmem:[#allocation8 + $0x1c8] sm:$0xff]
        %v331 = vld [vmem:[#allocation8 + $0x1d0] sm:$0xff]
        %v332 = vld [vmem:[#allocation8 + $0x1d8] sm:$0xff]
        %v333 = vld [vmem:[#allocation8 + $0x1e0] sm:$0xff]
        %v334 = vld [vmem:[#allocation8 + $0x1e8] sm:$0xff]
        %v335 = vld [vmem:[#allocation8 + $0x1f0] sm:$0xff]
        %v336 = vld [vmem:[#allocation8 + $0x1f8] sm:$0xff]
        %v337 = vld [vmem:[#allocation8 + $0x200] sm:$0xff]
        %v338 = vld [vmem:[#allocation8 + $0x208] sm:$0xff]
        %v339 = vld [vmem:[#allocation8 + $0x210] sm:$0xff]
        %v340 = vld [vmem:[#allocation8 + $0x218] sm:$0xff]
        %v341 = vld [vmem:[#allocation8 + $0x220] sm:$0xff]
        %v342 = vld [vmem:[#allocation8 + $0x228] sm:$0xff]
        %v343 = vld [vmem:[#allocation8 + $0x230] sm:$0xff]
        %v344 = vld [vmem:[#allocation8 + $0x238] sm:$0xff]
        %v345 = vld [vmem:[#allocation8 + $0x240] sm:$0xff]
        %v346 = vld [vmem:[#allocation8 + $0x248] sm:$0xff]
        %v347 = vld [vmem:[#allocation8 + $0x250] sm:$0xff]
        %v348 = vld [vmem:[#allocation8 + $0x258] sm:$0xff]
        %v349 = vld [vmem:[#allocation8 + $0x260] sm:$0xff]
        %v350 = vld [vmem:[#allocation8 + $0x268] sm:$0xff]
        %v351 = vld [vmem:[#allocation8 + $0x270] sm:$0xff]
        %v352 = vld [vmem:[#allocation8 + $0x278] sm:$0xff]
        %v353 = vld [vmem:[#allocation8 + $0x280] sm:$0xff]
        %v354 = vld [vmem:[#allocation8 + $0x288] sm:$0xff]
        %v355 = vld [vmem:[#allocation8 + $0x290] sm:$0xff]
        %v356 = vld [vmem:[#allocation8 + $0x298] sm:$0xff]
        %v357 = vld [vmem:[#allocation8 + $0x2a0] sm:$0xff]
        %v358 = vld [vmem:[#allocation8 + $0x2a8] sm:$0xff]
        %v359 = vld [vmem:[#allocation8 + $0x2b0] sm:$0xff]
        %v360 = vld [vmem:[#allocation8 + $0x2b8] sm:$0xff]
        %v361 = vld [vmem:[#allocation8 + $0x2c0] sm:$0xff]
        %v362 = vld [vmem:[#allocation8 + $0x2c8] sm:$0xff]
        %v363 = vld [vmem:[#allocation8 + $0x2d0] sm:$0xff]
        %v364 = vld [vmem:[#allocation8 + $0x2d8] sm:$0xff]
        %v365 = vld [vmem:[#allocation8 + $0x2e0] sm:$0xff]
        %v366 = vld [vmem:[#allocation8 + $0x2e8] sm:$0xff]
        %v367 = vld [vmem:[#allocation8 + $0x2f0] sm:$0xff]
        %v368 = vld [vmem:[#allocation8 + $0x2f8] sm:$0xff]
        %v369 = vld [vmem:[#allocation8 + $0x300] sm:$0xff]
        %v370 = vld [vmem:[#allocation8 + $0x308] sm:$0xff]
        %v371 = vld [vmem:[#allocation8 + $0x310] sm:$0xff]
        %v372 = vld [vmem:[#allocation8 + $0x318] sm:$0xff]
        %v373 = vld [vmem:[#allocation8 + $0x320] sm:$0xff]
        %v374 = vld [vmem:[#allocation8 + $0x328] sm:$0xff]
        %v375 = vld [vmem:[#allocation8 + $0x330] sm:$0xff]
        %v376 = vld [vmem:[#allocation8 + $0x338] sm:$0xff]
        %v377 = vld [vmem:[#allocation8 + $0x340] sm:$0xff]
        %v378 = vld [vmem:[#allocation8 + $0x348] sm:$0xff]
        %v379 = vld [vmem:[#allocation8 + $0x350] sm:$0xff]
        %v380 = vld [vmem:[#allocation8 + $0x358] sm:$0xff]
        %v381 = vld [vmem:[#allocation8 + $0x360] sm:$0xff]
        %v382 = vld [vmem:[#allocation8 + $0x368] sm:$0xff]
        %v383 = vld [vmem:[#allocation8 + $0x370] sm:$0xff]
        %v384 = vld [vmem:[#allocation8 + $0x378] sm:$0xff]
        %v385 = vld [vmem:[#allocation8 + $0x380] sm:$0xff]
        %v386 = vld [vmem:[#allocation8 + $0x388] sm:$0xff]
        %v387 = vld [vmem:[#allocation8 + $0x390] sm:$0xff]
        %v388 = vld [vmem:[#allocation8 + $0x398] sm:$0xff]
        %v389 = vld [vmem:[#allocation8 + $0x3a0] sm:$0xff]
        %v390 = vld [vmem:[#allocation8 + $0x3a8] sm:$0xff]
        %v391 = vld [vmem:[#allocation8 + $0x3b0] sm:$0xff]
        %v392 = vld [vmem:[#allocation8 + $0x3b8] sm:$0xff]
        %v393 = vld [vmem:[#allocation8 + $0x3c0] sm:$0xff]
        %v394 = vld [vmem:[#allocation8 + $0x3c8] sm:$0xff]
        %v395 = vld [vmem:[#allocation8 + $0x3d0] sm:$0xff]
        %v396 = vld [vmem:[#allocation8 + $0x3d8] sm:$0xff]
        %v397 = vld [vmem:[#allocation8 + $0x3e0] sm:$0xff]
        %v398 = vld [vmem:[#allocation8 + $0x3e8] sm:$0xff]
        %v399 = vld [vmem:[#allocation8 + $0x3f0] sm:$0xff]
        %v400 = vld [vmem:[#allocation8 + $0x3f8] sm:$0xff]
        %v401 = vld [vmem:[#allocation8 + $0x400] sm:$0xff]
        %v402 = vld [vmem:[#allocation8 + $0x408] sm:$0xff]
        %v403 = vld [vmem:[#allocation8 + $0x410] sm:$0xff]
        %v404 = vld [vmem:[#allocation8 + $0x418] sm:$0xff]
        %v405 = vld [vmem:[#allocation8 + $0x420] sm:$0xff]
        %v406 = vld [vmem:[#allocation8 + $0x428] sm:$0xff]
        %v407 = vld [vmem:[#allocation8 + $0x430] sm:$0xff]
        %v408 = vld [vmem:[#allocation8 + $0x438] sm:$0xff]
        %v409 = vld [vmem:[#allocation8 + $0x440] sm:$0xff]
        %v410 = vld [vmem:[#allocation8 + $0x448] sm:$0xff]
        %v411 = vld [vmem:[#allocation8 + $0x450] sm:$0xff]
        %v412 = vld [vmem:[#allocation8 + $0x458] sm:$0xff]
        %v413 = vld [vmem:[#allocation8 + $0x460] sm:$0xff]
        %v414 = vld [vmem:[#allocation8 + $0x468] sm:$0xff]
        %v415 = vld [vmem:[#allocation8 + $0x470] sm:$0xff]
        %v416 = vld [vmem:[#allocation8 + $0x478] sm:$0xff]
        %v417 = vld [vmem:[#allocation8 + $0x480] sm:$0xff]
        %v418 = vld [vmem:[#allocation8 + $0x488] sm:$0xff]
        %v419 = vld [vmem:[#allocation8 + $0x490] sm:$0xff]
        %v420 = vld [vmem:[#allocation8 + $0x498] sm:$0xff]
        %v421 = vld [vmem:[#allocation8 + $0x4a0] sm:$0xff]
        %v422 = vld [vmem:[#allocation8 + $0x4a8] sm:$0xff]
        %v423 = vld [vmem:[#allocation8 + $0x4b0] sm:$0xff]
        %v424 = vld [vmem:[#allocation8 + $0x4b8] sm:$0xff]
        %v425 = vld [vmem:[#allocation8 + $0x4c0] sm:$0xff]
        %v426 = vld [vmem:[#allocation8 + $0x4c8] sm:$0xff]
        %v427 = vld [vmem:[#allocation8 + $0x4d0] sm:$0xff]
        %v428 = vld [vmem:[#allocation8 + $0x4d8] sm:$0xff]
        %v429 = vld [vmem:[#allocation8 + $0x4e0] sm:$0xff]
        %v430 = vld [vmem:[#allocation8 + $0x4e8] sm:$0xff]
        %v431 = vld [vmem:[#allocation8 + $0x4f0] sm:$0xff]
        %v432 = vld [vmem:[#allocation8 + $0x4f8] sm:$0xff]
        %v433 = vld [vmem:[#allocation8 + $0x500] sm:$0xff]
        %v434 = vld [vmem:[#allocation8 + $0x508] sm:$0xff]
        %v435 = vld [vmem:[#allocation8 + $0x510] sm:$0xff]
        %v436 = vld [vmem:[#allocation8 + $0x518] sm:$0xff]
        %v437 = vld [vmem:[#allocation8 + $0x520] sm:$0xff]
        %v438 = vld [vmem:[#allocation8 + $0x528] sm:$0xff]
        %v439 = vld [vmem:[#allocation8 + $0x530] sm:$0xff]
        %v440 = vld [vmem:[#allocation8 + $0x538] sm:$0xff]
        %v441 = vld [vmem:[#allocation8 + $0x540] sm:$0xff]
        %v442 = vld [vmem:[#allocation8 + $0x548] sm:$0xff]
        %v443 = vld [vmem:[#allocation8 + $0x550] sm:$0xff]
        %v444 = vld [vmem:[#allocation8 + $0x558] sm:$0xff]
        %v445 = vld [vmem:[#allocation8 + $0x560] sm:$0xff]
        %v446 = vld [vmem:[#allocation8 + $0x568] sm:$0xff]
        %v447 = vld [vmem:[#allocation8 + $0x570] sm:$0xff]
        %v448 = vld [vmem:[#allocation8 + $0x578] sm:$0xff]
        %v449 = vld [vmem:[#allocation8 + $0x580] sm:$0xff]
        %v450 = vld [vmem:[#allocation8 + $0x588] sm:$0xff]
        %v451 = vld [vmem:[#allocation8 + $0x590] sm:$0xff]
        %v452 = vld [vmem:[#allocation8 + $0x598] sm:$0xff]
        %v453 = vld [vmem:[#allocation8 + $0x5a0] sm:$0xff]
        %v454 = vld [vmem:[#allocation8 + $0x5a8] sm:$0xff]
        %v455 = vld [vmem:[#allocation8 + $0x5b0] sm:$0xff]
        %v456 = vld [vmem:[#allocation8 + $0x5b8] sm:$0xff]
        %v457 = vld [vmem:[#allocation8 + $0x5c0] sm:$0xff]
        %v458 = vld [vmem:[#allocation8 + $0x5c8] sm:$0xff]
        %v459 = vld [vmem:[#allocation8 + $0x5d0] sm:$0xff]
        %v460 = vld [vmem:[#allocation8 + $0x5d8] sm:$0xff]
        %v461 = vld [vmem:[#allocation8 + $0x5e0] sm:$0xff]
        %v462 = vld [vmem:[#allocation8 + $0x5e8] sm:$0xff]
        %v463 = vld [vmem:[#allocation8 + $0x5f0] sm:$0xff]
        %v464 = vld [vmem:[#allocation8 + $0x5f8] sm:$0xff]
        %v465 = vld [vmem:[#allocation8 + $0x600] sm:$0xff]
        %v466 = vld [vmem:[#allocation8 + $0x608] sm:$0xff]
        %v467 = vld [vmem:[#allocation8 + $0x610] sm:$0xff]
        %v468 = vld [vmem:[#allocation8 + $0x618] sm:$0xff]
        %v469 = vld [vmem:[#allocation8 + $0x620] sm:$0xff]
        %v470 = vld [vmem:[#allocation8 + $0x628] sm:$0xff]
        %v471 = vld [vmem:[#allocation8 + $0x630] sm:$0xff]
        %v472 = vld [vmem:[#allocation8 + $0x638] sm:$0xff]
        %v473 = vld [vmem:[#allocation8 + $0x640] sm:$0xff]
        %v474 = vld [vmem:[#allocation8 + $0x648] sm:$0xff]
        %v475 = vld [vmem:[#allocation8 + $0x650] sm:$0xff]
        %v476 = vld [vmem:[#allocation8 + $0x658] sm:$0xff]
        %v477 = vld [vmem:[#allocation8 + $0x660] sm:$0xff]
        %v478 = vld [vmem:[#allocation8 + $0x668] sm:$0xff]
        %v479 = vld [vmem:[#allocation8 + $0x670] sm:$0xff]
        %v480 = vld [vmem:[#allocation8 + $0x678] sm:$0xff]
        %v481 = vld [vmem:[#allocation8 + $0x680] sm:$0xff]
        %v482 = vld [vmem:[#allocation8 + $0x688] sm:$0xff]
        %v483 = vld [vmem:[#allocation8 + $0x690] sm:$0xff]
        %v484 = vld [vmem:[#allocation8 + $0x698] sm:$0xff]
        %v485 = vld [vmem:[#allocation8 + $0x6a0] sm:$0xff]
        %v486 = vld [vmem:[#allocation8 + $0x6a8] sm:$0xff]
        %v487 = vld [vmem:[#allocation8 + $0x6b0] sm:$0xff]
        %v488 = vld [vmem:[#allocation8 + $0x6b8] sm:$0xff]
        %v489 = vld [vmem:[#allocation8 + $0x6c0] sm:$0xff]
        %v490 = vld [vmem:[#allocation8 + $0x6c8] sm:$0xff]
        %v491 = vld [vmem:[#allocation8 + $0x6d0] sm:$0xff]
        %v492 = vld [vmem:[#allocation8 + $0x6d8] sm:$0xff]
        %v493 = vld [vmem:[#allocation8 + $0x6e0] sm:$0xff]
        %v494 = vld [vmem:[#allocation8 + $0x6e8] sm:$0xff]
        %v495 = vld [vmem:[#allocation8 + $0x6f0] sm:$0xff]
        %v496 = vld [vmem:[#allocation8 + $0x6f8] sm:$0xff]
        %v497 = vld [vmem:[#allocation8 + $0x700] sm:$0xff]
        %v498 = vld [vmem:[#allocation8 + $0x708] sm:$0xff]
        %v499 = vld [vmem:[#allocation8 + $0x710] sm:$0xff]
        %v500 = vld [vmem:[#allocation8 + $0x718] sm:$0xff]
        %v501 = vld [vmem:[#allocation8 + $0x720] sm:$0xff]
        %v502 = vld [vmem:[#allocation8 + $0x728] sm:$0xff]
        %v503 = vld [vmem:[#allocation8 + $0x730] sm:$0xff]
        %v504 = vld [vmem:[#allocation8 + $0x738] sm:$0xff]
        %v505 = vld [vmem:[#allocation8 + $0x740] sm:$0xff]
        %v506 = vld [vmem:[#allocation8 + $0x748] sm:$0xff]
        %v507 = vld [vmem:[#allocation8 + $0x750] sm:$0xff]
        %v508 = vld [vmem:[#allocation8 + $0x758] sm:$0xff]
        %v509 = vld [vmem:[#allocation8 + $0x760] sm:$0xff]
        %v510 = vld [vmem:[#allocation8 + $0x768] sm:$0xff]
        %v511 = vld [vmem:[#allocation8 + $0x770] sm:$0xff]
        %v512 = vld [vmem:[#allocation8 + $0x778] sm:$0xff]
        %v513 = vld [vmem:[#allocation8 + $0x780] sm:$0xff]
        %v514 = vld [vmem:[#allocation8 + $0x788] sm:$0xff]
        %v515 = vld [vmem:[#allocation8 + $0x790] sm:$0xff]
        %v516 = vld [vmem:[#allocation8 + $0x798] sm:$0xff]
        %v517 = vld [vmem:[#allocation8 + $0x7a0] sm:$0xff]
        %v518 = vld [vmem:[#allocation8 + $0x7a8] sm:$0xff]
        %v519 = vld [vmem:[#allocation8 + $0x7b0] sm:$0xff]
        %v520 = vld [vmem:[#allocation8 + $0x7b8] sm:$0xff]
        %v521 = vld [vmem:[#allocation8 + $0x7c0] sm:$0xff]
        %v522 = vld [vmem:[#allocation8 + $0x7c8] sm:$0xff]
        %v523 = vld [vmem:[#allocation8 + $0x7d0] sm:$0xff]
        %v524 = vld [vmem:[#allocation8 + $0x7d8] sm:$0xff]
        %v525 = vld [vmem:[#allocation8 + $0x7e0] sm:$0xff]
        %v526 = vld [vmem:[#allocation8 + $0x7e8] sm:$0xff]
        %v527 = vld [vmem:[#allocation8 + $0x7f0] sm:$0xff]
        %v528 = vld [vmem:[#allocation8 + $0x7f8] sm:$0xff]
        %v531 = vunpack.c.l.b16 %v271
        %v532 = vunpack.c.h.b16 %v271
        %v533 = vunpack.c.l.b16 %v272
        %v534 = vunpack.c.h.b16 %v272
        %v535 = vpack.c.b16 %v531, %v531
        %v536 = vpack.c.b16 %v532, %v532
        %v537 = vpack.c.b16 %v533, %v533
        %v538 = vpack.c.b16 %v534, %v534
        %v799 = vunpack.c.l.b16 %v273
        %v800 = vunpack.c.h.b16 %v273
        %v801 = vunpack.c.l.b16 %v274
        %v802 = vunpack.c.h.b16 %v274
        %v803 = vunpack.c.l.b16 %v275
        %v804 = vunpack.c.h.b16 %v275
        %v805 = vunpack.c.l.b16 %v276
        %v806 = vunpack.c.h.b16 %v276
        %v807 = vunpack.c.l.b16 %v277
        %v808 = vunpack.c.h.b16 %v277
        %v809 = vunpack.c.l.b16 %v278
        %v810 = vunpack.c.h.b16 %v278
        %v811 = vunpack.c.l.b16 %v279
        %v812 = vunpack.c.h.b16 %v279
        %v813 = vunpack.c.l.b16 %v280
        %v814 = vunpack.c.h.b16 %v280
        %v815 = vunpack.c.l.b16 %v281
        %v816 = vunpack.c.h.b16 %v281
        %v817 = vunpack.c.l.b16 %v282
        %v818 = vunpack.c.h.b16 %v282
        %v819 = vunpack.c.l.b16 %v283
        %v820 = vunpack.c.h.b16 %v283
        %v821 = vunpack.c.l.b16 %v284
        %v822 = vunpack.c.h.b16 %v284
        %v823 = vunpack.c.l.b16 %v285
        %v824 = vunpack.c.h.b16 %v285
        %v825 = vunpack.c.l.b16 %v286
        %v826 = vunpack.c.h.b16 %v286
        %v827 = vunpack.c.l.b16 %v287
        %v828 = vunpack.c.h.b16 %v287
        %v829 = vunpack.c.l.b16 %v288
        %v830 = vunpack.c.h.b16 %v288
        %v831 = vunpack.c.l.b16 %v289
        %v832 = vunpack.c.h.b16 %v289
        %v833 = vunpack.c.l.b16 %v290
        %v834 = vunpack.c.h.b16 %v290
        %v835 = vunpack.c.l.b16 %v291
        %v836 = vunpack.c.h.b16 %v291
        %v837 = vunpack.c.l.b16 %v292
        %v838 = vunpack.c.h.b16 %v292
        %v839 = vunpack.c.l.b16 %v293
        %v840 = vunpack.c.h.b16 %v293
        %v841 = vunpack.c.l.b16 %v294
        %v842 = vunpack.c.h.b16 %v294
        %v843 = vunpack.c.l.b16 %v295
        %v844 = vunpack.c.h.b16 %v295
        %v845 = vunpack.c.l.b16 %v296
        %v846 = vunpack.c.h.b16 %v296
        %v847 = vunpack.c.l.b16 %v297
        %v848 = vunpack.c.h.b16 %v297
        %v849 = vunpack.c.l.b16 %v298
        %v850 = vunpack.c.h.b16 %v298
        %v851 = vunpack.c.l.b16 %v299
        %v852 = vunpack.c.h.b16 %v299
        %v853 = vunpack.c.l.b16 %v300
        %v854 = vunpack.c.h.b16 %v300
        %v855 = vunpack.c.l.b16 %v301
        %v856 = vunpack.c.h.b16 %v301
        %v857 = vunpack.c.l.b16 %v302
        %v858 = vunpack.c.h.b16 %v302
        %v859 = vunpack.c.l.b16 %v303
        %v860 = vunpack.c.h.b16 %v303
        %v861 = vunpack.c.l.b16 %v304
        %v862 = vunpack.c.h.b16 %v304
        %v863 = vunpack.c.l.b16 %v305
        %v864 = vunpack.c.h.b16 %v305
        %v865 = vunpack.c.l.b16 %v306
        %v866 = vunpack.c.h.b16 %v306
        %v867 = vunpack.c.l.b16 %v307
        %v868 = vunpack.c.h.b16 %v307
        %v869 = vunpack.c.l.b16 %v308
        %v870 = vunpack.c.h.b16 %v308
        %v871 = vunpack.c.l.b16 %v309
        %v872 = vunpack.c.h.b16 %v309
        %v873 = vunpack.c.l.b16 %v310
        %v874 = vunpack.c.h.b16 %v310
        %v875 = vunpack.c.l.b16 %v311
        %v876 = vunpack.c.h.b16 %v311
        %v877 = vunpack.c.l.b16 %v312
        %v878 = vunpack.c.h.b16 %v312
        %v879 = vunpack.c.l.b16 %v313
        %v880 = vunpack.c.h.b16 %v313
        %v881 = vunpack.c.l.b16 %v314
        %v882 = vunpack.c.h.b16 %v314
        %v883 = vunpack.c.l.b16 %v315
        %v884 = vunpack.c.h.b16 %v315
        %v885 = vunpack.c.l.b16 %v316
        %v886 = vunpack.c.h.b16 %v316
        %v887 = vunpack.c.l.b16 %v317
        %v888 = vunpack.c.h.b16 %v317
        %v889 = vunpack.c.l.b16 %v318
        %v890 = vunpack.c.h.b16 %v318
        %v891 = vunpack.c.l.b16 %v319
        %v892 = vunpack.c.h.b16 %v319
        %v893 = vunpack.c.l.b16 %v320
        %v894 = vunpack.c.h.b16 %v320
        %v895 = vunpack.c.l.b16 %v321
        %v896 = vunpack.c.h.b16 %v321
        %v897 = vunpack.c.l.b16 %v322
        %v898 = vunpack.c.h.b16 %v322
        %v899 = vunpack.c.l.b16 %v323
        %v900 = vunpack.c.h.b16 %v323
        %v901 = vunpack.c.l.b16 %v324
        %v902 = vunpack.c.h.b16 %v324
        %v903 = vunpack.c.l.b16 %v325
        %v904 = vunpack.c.h.b16 %v325
        %v905 = vunpack.c.l.b16 %v326
        %v906 = vunpack.c.h.b16 %v326
        %v907 = vunpack.c.l.b16 %v327
        %v908 = vunpack.c.h.b16 %v327
        %v909 = vunpack.c.l.b16 %v328
        %v910 = vunpack.c.h.b16 %v328
        %v911 = vunpack.c.l.b16 %v329
        %v912 = vunpack.c.h.b16 %v329
        %v913 = vunpack.c.l.b16 %v330
        %v914 = vunpack.c.h.b16 %v330
        %v915 = vunpack.c.l.b16 %v331
        %v916 = vunpack.c.h.b16 %v331
        %v917 = vunpack.c.l.b16 %v332
        %v918 = vunpack.c.h.b16 %v332
        %v919 = vunpack.c.l.b16 %v333
        %v920 = vunpack.c.h.b16 %v333
        %v921 = vunpack.c.l.b16 %v334
        %v922 = vunpack.c.h.b16 %v334
        %v923 = vunpack.c.l.b16 %v335
        %v924 = vunpack.c.h.b16 %v335
        %v925 = vunpack.c.l.b16 %v336
        %v926 = vunpack.c.h.b16 %v336
        %v927 = vunpack.c.l.b16 %v337
        %v928 = vunpack.c.h.b16 %v337
        %v929 = vunpack.c.l.b16 %v338
        %v930 = vunpack.c.h.b16 %v338
        %v931 = vunpack.c.l.b16 %v339
        %v932 = vunpack.c.h.b16 %v339
        %v933 = vunpack.c.l.b16 %v340
        %v934 = vunpack.c.h.b16 %v340
        %v935 = vunpack.c.l.b16 %v341
        %v936 = vunpack.c.h.b16 %v341
        %v937 = vunpack.c.l.b16 %v342
        %v938 = vunpack.c.h.b16 %v342
        %v939 = vunpack.c.l.b16 %v343
        %v940 = vunpack.c.h.b16 %v343
        %v941 = vunpack.c.l.b16 %v344
        %v942 = vunpack.c.h.b16 %v344
        %v943 = vunpack.c.l.b16 %v345
        %v944 = vunpack.c.h.b16 %v345
        %v945 = vunpack.c.l.b16 %v346
        %v946 = vunpack.c.h.b16 %v346
        %v947 = vunpack.c.l.b16 %v347
        %v948 = vunpack.c.h.b16 %v347
        %v949 = vunpack.c.l.b16 %v348
        %v950 = vunpack.c.h.b16 %v348
        %v951 = vunpack.c.l.b16 %v349
        %v952 = vunpack.c.h.b16 %v349
        %v953 = vunpack.c.l.b16 %v350
        %v954 = vunpack.c.h.b16 %v350
        %v955 = vunpack.c.l.b16 %v351
        %v956 = vunpack.c.h.b16 %v351
        %v957 = vunpack.c.l.b16 %v352
        %v958 = vunpack.c.h.b16 %v352
        %v959 = vunpack.c.l.b16 %v353
        %v960 = vunpack.c.h.b16 %v353
        %v961 = vunpack.c.l.b16 %v354
        %v962 = vunpack.c.h.b16 %v354
        %v963 = vunpack.c.l.b16 %v355
        %v964 = vunpack.c.h.b16 %v355
        %v965 = vunpack.c.l.b16 %v356
        %v966 = vunpack.c.h.b16 %v356
        %v967 = vunpack.c.l.b16 %v357
        %v968 = vunpack.c.h.b16 %v357
        %v969 = vunpack.c.l.b16 %v358
        %v970 = vunpack.c.h.b16 %v358
        %v971 = vunpack.c.l.b16 %v359
        %v972 = vunpack.c.h.b16 %v359
        %v973 = vunpack.c.l.b16 %v360
        %v974 = vunpack.c.h.b16 %v360
        %v975 = vunpack.c.l.b16 %v361
        %v976 = vunpack.c.h.b16 %v361
        %v977 = vunpack.c.l.b16 %v362
        %v978 = vunpack.c.h.b16 %v362
        %v979 = vunpack.c.l.b16 %v363
        %v980 = vunpack.c.h.b16 %v363
        %v981 = vunpack.c.l.b16 %v364
        %v982 = vunpack.c.h.b16 %v364
        %v983 = vunpack.c.l.b16 %v365
        %v984 = vunpack.c.h.b16 %v365
        %v985 = vunpack.c.l.b16 %v366
        %v986 = vunpack.c.h.b16 %v366
        %v987 = vunpack.c.l.b16 %v367
        %v988 = vunpack.c.h.b16 %v367
        %v989 = vunpack.c.l.b16 %v368
        %v990 = vunpack.c.h.b16 %v368
        %v991 = vunpack.c.l.b16 %v369
        %v992 = vunpack.c.h.b16 %v369
        %v993 = vunpack.c.l.b16 %v370
        %v994 = vunpack.c.h.b16 %v370
        %v995 = vunpack.c.l.b16 %v371
        %v996 = vunpack.c.h.b16 %v371
        %v997 = vunpack.c.l.b16 %v372
        %v998 = vunpack.c.h.b16 %v372
        %v999 = vunpack.c.l.b16 %v373
        %v1000 = vunpack.c.h.b16 %v373
        %v1001 = vunpack.c.l.b16 %v374
        %v1002 = vunpack.c.h.b16 %v374
        %v1003 = vunpack.c.l.b16 %v375
        %v1004 = vunpack.c.h.b16 %v375
        %v1005 = vunpack.c.l.b16 %v376
        %v1006 = vunpack.c.h.b16 %v376
        %v1007 = vunpack.c.l.b16 %v377
        %v1008 = vunpack.c.h.b16 %v377
        %v1009 = vunpack.c.l.b16 %v378
        %v1010 = vunpack.c.h.b16 %v378
        %v1011 = vunpack.c.l.b16 %v379
        %v1012 = vunpack.c.h.b16 %v379
        %v1013 = vunpack.c.l.b16 %v380
        %v1014 = vunpack.c.h.b16 %v380
        %v1015 = vunpack.c.l.b16 %v381
        %v1016 = vunpack.c.h.b16 %v381
        %v1017 = vunpack.c.l.b16 %v382
        %v1018 = vunpack.c.h.b16 %v382
        %v1019 = vunpack.c.l.b16 %v383
        %v1020 = vunpack.c.h.b16 %v383
        %v1021 = vunpack.c.l.b16 %v384
        %v1022 = vunpack.c.h.b16 %v384
        %v1023 = vunpack.c.l.b16 %v385
        %v1024 = vunpack.c.h.b16 %v385
        %v1025 = vunpack.c.l.b16 %v386
        %v1026 = vunpack.c.h.b16 %v386
        %v1027 = vunpack.c.l.b16 %v387
        %v1028 = vunpack.c.h.b16 %v387
        %v1029 = vunpack.c.l.b16 %v388
        %v1030 = vunpack.c.h.b16 %v388
        %v1031 = vunpack.c.l.b16 %v389
        %v1032 = vunpack.c.h.b16 %v389
        %v1033 = vunpack.c.l.b16 %v390
        %v1034 = vunpack.c.h.b16 %v390
        %v1035 = vunpack.c.l.b16 %v391
        %v1036 = vunpack.c.h.b16 %v391
        %v1037 = vunpack.c.l.b16 %v392
        %v1038 = vunpack.c.h.b16 %v392
        %v1039 = vunpack.c.l.b16 %v393
        %v1040 = vunpack.c.h.b16 %v393
        %v1041 = vunpack.c.l.b16 %v394
        %v1042 = vunpack.c.h.b16 %v394
        %v1043 = vunpack.c.l.b16 %v395
        %v1044 = vunpack.c.h.b16 %v395
        %v1045 = vunpack.c.l.b16 %v396
        %v1046 = vunpack.c.h.b16 %v396
        %v1047 = vunpack.c.l.b16 %v397
        %v1048 = vunpack.c.h.b16 %v397
        %v1049 = vunpack.c.l.b16 %v398
        %v1050 = vunpack.c.h.b16 %v398
        %v1051 = vunpack.c.l.b16 %v399
        %v1052 = vunpack.c.h.b16 %v399
        %v1053 = vunpack.c.l.b16 %v400
        %v1054 = vunpack.c.h.b16 %v400
        %v1055 = vunpack.c.l.b16 %v401
        %v1056 = vunpack.c.h.b16 %v401
        %v1057 = vunpack.c.l.b16 %v402
        %v1058 = vunpack.c.h.b16 %v402
        %v1059 = vunpack.c.l.b16 %v403
        %v1060 = vunpack.c.h.b16 %v403
        %v1061 = vunpack.c.l.b16 %v404
        %v1062 = vunpack.c.h.b16 %v404
        %v1063 = vunpack.c.l.b16 %v405
        %v1064 = vunpack.c.h.b16 %v405
        %v1065 = vunpack.c.l.b16 %v406
        %v1066 = vunpack.c.h.b16 %v406
        %v1067 = vunpack.c.l.b16 %v407
        %v1068 = vunpack.c.h.b16 %v407
        %v1069 = vunpack.c.l.b16 %v408
        %v1070 = vunpack.c.h.b16 %v408
        %v1071 = vunpack.c.l.b16 %v409
        %v1072 = vunpack.c.h.b16 %v409
        %v1073 = vunpack.c.l.b16 %v410
        %v1074 = vunpack.c.h.b16 %v410
        %v1075 = vunpack.c.l.b16 %v411
        %v1076 = vunpack.c.h.b16 %v411
        %v1077 = vunpack.c.l.b16 %v412
        %v1078 = vunpack.c.h.b16 %v412
        %v1079 = vunpack.c.l.b16 %v413
        %v1080 = vunpack.c.h.b16 %v413
        %v1081 = vunpack.c.l.b16 %v414
        %v1082 = vunpack.c.h.b16 %v414
        %v1083 = vunpack.c.l.b16 %v415
        %v1084 = vunpack.c.h.b16 %v415
        %v1085 = vunpack.c.l.b16 %v416
        %v1086 = vunpack.c.h.b16 %v416
        %v1087 = vunpack.c.l.b16 %v417
        %v1088 = vunpack.c.h.b16 %v417
        %v1089 = vunpack.c.l.b16 %v418
        %v1090 = vunpack.c.h.b16 %v418
        %v1091 = vunpack.c.l.b16 %v419
        %v1092 = vunpack.c.h.b16 %v419
        %v1093 = vunpack.c.l.b16 %v420
        %v1094 = vunpack.c.h.b16 %v420
        %v1095 = vunpack.c.l.b16 %v421
        %v1096 = vunpack.c.h.b16 %v421
        %v1097 = vunpack.c.l.b16 %v422
        %v1098 = vunpack.c.h.b16 %v422
        %v1099 = vunpack.c.l.b16 %v423
        %v1100 = vunpack.c.h.b16 %v423
        %v1101 = vunpack.c.l.b16 %v424
        %v1102 = vunpack.c.h.b16 %v424
        %v1103 = vunpack.c.l.b16 %v425
        %v1104 = vunpack.c.h.b16 %v425
        %v1105 = vunpack.c.l.b16 %v426
        %v1106 = vunpack.c.h.b16 %v426
        %v1107 = vunpack.c.l.b16 %v427
        %v1108 = vunpack.c.h.b16 %v427
        %v1109 = vunpack.c.l.b16 %v428
        %v1110 = vunpack.c.h.b16 %v428
        %v1111 = vunpack.c.l.b16 %v429
        %v1112 = vunpack.c.h.b16 %v429
        %v1113 = vunpack.c.l.b16 %v430
        %v1114 = vunpack.c.h.b16 %v430
        %v1115 = vunpack.c.l.b16 %v431
        %v1116 = vunpack.c.h.b16 %v431
        %v1117 = vunpack.c.l.b16 %v432
        %v1118 = vunpack.c.h.b16 %v432
        %v1119 = vunpack.c.l.b16 %v433
        %v1120 = vunpack.c.h.b16 %v433
        %v1121 = vunpack.c.l.b16 %v434
        %v1122 = vunpack.c.h.b16 %v434
        %v1123 = vunpack.c.l.b16 %v435
        %v1124 = vunpack.c.h.b16 %v435
        %v1125 = vunpack.c.l.b16 %v436
        %v1126 = vunpack.c.h.b16 %v436
        %v1127 = vunpack.c.l.b16 %v437
        %v1128 = vunpack.c.h.b16 %v437
        %v1129 = vunpack.c.l.b16 %v438
        %v1130 = vunpack.c.h.b16 %v438
        %v1131 = vunpack.c.l.b16 %v439
        %v1132 = vunpack.c.h.b16 %v439
        %v1133 = vunpack.c.l.b16 %v440
        %v1134 = vunpack.c.h.b16 %v440
        %v1135 = vunpack.c.l.b16 %v441
        %v1136 = vunpack.c.h.b16 %v441
        %v1137 = vunpack.c.l.b16 %v442
        %v1138 = vunpack.c.h.b16 %v442
        %v1139 = vunpack.c.l.b16 %v443
        %v1140 = vunpack.c.h.b16 %v443
        %v1141 = vunpack.c.l.b16 %v444
        %v1142 = vunpack.c.h.b16 %v444
        %v1143 = vunpack.c.l.b16 %v445
        %v1144 = vunpack.c.h.b16 %v445
        %v1145 = vunpack.c.l.b16 %v446
        %v1146 = vunpack.c.h.b16 %v446
        %v1147 = vunpack.c.l.b16 %v447
        %v1148 = vunpack.c.h.b16 %v447
        %v1149 = vunpack.c.l.b16 %v448
        %v1150 = vunpack.c.h.b16 %v448
        %v1151 = vunpack.c.l.b16 %v449
        %v1152 = vunpack.c.h.b16 %v449
        %v1153 = vunpack.c.l.b16 %v450
        %v1154 = vunpack.c.h.b16 %v450
        %v1155 = vunpack.c.l.b16 %v451
        %v1156 = vunpack.c.h.b16 %v451
        %v1157 = vunpack.c.l.b16 %v452
        %v1158 = vunpack.c.h.b16 %v452
        %v1159 = vunpack.c.l.b16 %v453
        %v1160 = vunpack.c.h.b16 %v453
        %v1161 = vunpack.c.l.b16 %v454
        %v1162 = vunpack.c.h.b16 %v454
        %v1163 = vunpack.c.l.b16 %v455
        %v1164 = vunpack.c.h.b16 %v455
        %v1165 = vunpack.c.l.b16 %v456
        %v1166 = vunpack.c.h.b16 %v456
        %v1167 = vunpack.c.l.b16 %v457
        %v1168 = vunpack.c.h.b16 %v457
        %v1169 = vunpack.c.l.b16 %v458
        %v1170 = vunpack.c.h.b16 %v458
        %v1171 = vunpack.c.l.b16 %v459
        %v1172 = vunpack.c.h.b16 %v459
        %v1173 = vunpack.c.l.b16 %v460
        %v1174 = vunpack.c.h.b16 %v460
        %v1175 = vunpack.c.l.b16 %v461
        %v1176 = vunpack.c.h.b16 %v461
        %v1177 = vunpack.c.l.b16 %v462
        %v1178 = vunpack.c.h.b16 %v462
        %v1179 = vunpack.c.l.b16 %v463
        %v1180 = vunpack.c.h.b16 %v463
        %v1181 = vunpack.c.l.b16 %v464
        %v1182 = vunpack.c.h.b16 %v464
        %v1183 = vunpack.c.l.b16 %v465
        %v1184 = vunpack.c.h.b16 %v465
        %v1185 = vunpack.c.l.b16 %v466
        %v1186 = vunpack.c.h.b16 %v466
        %v1187 = vunpack.c.l.b16 %v467
        %v1188 = vunpack.c.h.b16 %v467
        %v1189 = vunpack.c.l.b16 %v468
        %v1190 = vunpack.c.h.b16 %v468
        %v1191 = vunpack.c.l.b16 %v469
        %v1192 = vunpack.c.h.b16 %v469
        %v1193 = vunpack.c.l.b16 %v470
        %v1194 = vunpack.c.h.b16 %v470
        %v1195 = vunpack.c.l.b16 %v471
        %v1196 = vunpack.c.h.b16 %v471
        %v1197 = vunpack.c.l.b16 %v472
        %v1198 = vunpack.c.h.b16 %v472
        %v1199 = vunpack.c.l.b16 %v473
        %v1200 = vunpack.c.h.b16 %v473
        %v1201 = vunpack.c.l.b16 %v474
        %v1202 = vunpack.c.h.b16 %v474
        %v1203 = vunpack.c.l.b16 %v475
        %v1204 = vunpack.c.h.b16 %v475
        %v1205 = vunpack.c.l.b16 %v476
        %v1206 = vunpack.c.h.b16 %v476
        %v1207 = vunpack.c.l.b16 %v477
        %v1208 = vunpack.c.h.b16 %v477
        %v1209 = vunpack.c.l.b16 %v478
        %v1210 = vunpack.c.h.b16 %v478
        %v1211 = vunpack.c.l.b16 %v479
        %v1212 = vunpack.c.h.b16 %v479
        %v1213 = vunpack.c.l.b16 %v480
        %v1214 = vunpack.c.h.b16 %v480
        %v1215 = vunpack.c.l.b16 %v481
        %v1216 = vunpack.c.h.b16 %v481
        %v1217 = vunpack.c.l.b16 %v482
        %v1218 = vunpack.c.h.b16 %v482
        %v1219 = vunpack.c.l.b16 %v483
        %v1220 = vunpack.c.h.b16 %v483
        %v1221 = vunpack.c.l.b16 %v484
        %v1222 = vunpack.c.h.b16 %v484
        %v1223 = vunpack.c.l.b16 %v485
        %v1224 = vunpack.c.h.b16 %v485
        %v1225 = vunpack.c.l.b16 %v486
        %v1226 = vunpack.c.h.b16 %v486
        %v1227 = vunpack.c.l.b16 %v487
        %v1228 = vunpack.c.h.b16 %v487
        %v1229 = vunpack.c.l.b16 %v488
        %v1230 = vunpack.c.h.b16 %v488
        %v1231 = vunpack.c.l.b16 %v489
        %v1232 = vunpack.c.h.b16 %v489
        %v1233 = vunpack.c.l.b16 %v490
        %v1234 = vunpack.c.h.b16 %v490
        %v1235 = vunpack.c.l.b16 %v491
        %v1236 = vunpack.c.h.b16 %v491
        %v1237 = vunpack.c.l.b16 %v492
        %v1238 = vunpack.c.h.b16 %v492
        %v1239 = vunpack.c.l.b16 %v493
        %v1240 = vunpack.c.h.b16 %v493
        %v1241 = vunpack.c.l.b16 %v494
        %v1242 = vunpack.c.h.b16 %v494
        %v1243 = vunpack.c.l.b16 %v495
        %v1244 = vunpack.c.h.b16 %v495
        %v1245 = vunpack.c.l.b16 %v496
        %v1246 = vunpack.c.h.b16 %v496
        %v1247 = vunpack.c.l.b16 %v497
        %v1248 = vunpack.c.h.b16 %v497
        %v1249 = vunpack.c.l.b16 %v498
        %v1250 = vunpack.c.h.b16 %v498
        %v1251 = vunpack.c.l.b16 %v499
        %v1252 = vunpack.c.h.b16 %v499
        %v1253 = vunpack.c.l.b16 %v500
        %v1254 = vunpack.c.h.b16 %v500
        %v1255 = vunpack.c.l.b16 %v501
        %v1256 = vunpack.c.h.b16 %v501
        %v1257 = vunpack.c.l.b16 %v502
        %v1258 = vunpack.c.h.b16 %v502
        %v1259 = vunpack.c.l.b16 %v503
        %v1260 = vunpack.c.h.b16 %v503
        %v1261 = vunpack.c.l.b16 %v504
        %v1262 = vunpack.c.h.b16 %v504
        %v1263 = vunpack.c.l.b16 %v505
        %v1264 = vunpack.c.h.b16 %v505
        %v1265 = vunpack.c.l.b16 %v506
        %v1266 = vunpack.c.h.b16 %v506
        %v1267 = vunpack.c.l.b16 %v507
        %v1268 = vunpack.c.h.b16 %v507
        %v1269 = vunpack.c.l.b16 %v508
        %v1270 = vunpack.c.h.b16 %v508
        %v1271 = vunpack.c.l.b16 %v509
        %v1272 = vunpack.c.h.b16 %v509
        %v1273 = vunpack.c.l.b16 %v510
        %v1274 = vunpack.c.h.b16 %v510
        %v1275 = vunpack.c.l.b16 %v511
        %v1276 = vunpack.c.h.b16 %v511
        %v1277 = vunpack.c.l.b16 %v512
        %v1278 = vunpack.c.h.b16 %v512
        %v1279 = vunpack.c.l.b16 %v513
        %v1280 = vunpack.c.h.b16 %v513
        %v1281 = vunpack.c.l.b16 %v514
        %v1282 = vunpack.c.h.b16 %v514
        %v1283 = vunpack.c.l.b16 %v515
        %v1284 = vunpack.c.h.b16 %v515
        %v1285 = vunpack.c.l.b16 %v516
        %v1286 = vunpack.c.h.b16 %v516
        %v1287 = vunpack.c.l.b16 %v517
        %v1288 = vunpack.c.h.b16 %v517
        %v1289 = vunpack.c.l.b16 %v518
        %v1290 = vunpack.c.h.b16 %v518
        %v1291 = vunpack.c.l.b16 %v519
        %v1292 = vunpack.c.h.b16 %v519
        %v1293 = vunpack.c.l.b16 %v520
        %v1294 = vunpack.c.h.b16 %v520
        %v1295 = vunpack.c.l.b16 %v521
        %v1296 = vunpack.c.h.b16 %v521
        %v1297 = vunpack.c.l.b16 %v522
        %v1298 = vunpack.c.h.b16 %v522
        %v1299 = vunpack.c.l.b16 %v523
        %v1300 = vunpack.c.h.b16 %v523
        %v1301 = vunpack.c.l.b16 %v524
        %v1302 = vunpack.c.h.b16 %v524
        %v1303 = vunpack.c.l.b16 %v525
        %v1304 = vunpack.c.h.b16 %v525
        %v1305 = vunpack.c.l.b16 %v526
        %v1306 = vunpack.c.h.b16 %v526
        %v1307 = vunpack.c.l.b16 %v527
        %v1308 = vunpack.c.h.b16 %v527
        %v1309 = vunpack.c.l.b16 %v528
        %v1310 = vunpack.c.h.b16 %v528
        %v1311 = vpack.c.b16 %v807, %v799
        %v1312 = vpack.c.b16 %v808, %v800
        %v1313 = vpack.c.b16 %v809, %v801
        %v1314 = vpack.c.b16 %v810, %v802
        %v1315 = vpack.c.b16 %v811, %v803
        %v1316 = vpack.c.b16 %v812, %v804
        %v1317 = vpack.c.b16 %v813, %v805
        %v1318 = vpack.c.b16 %v814, %v806
        %v1319 = vpack.c.b16 %v823, %v815
        %v1320 = vpack.c.b16 %v824, %v816
        %v1321 = vpack.c.b16 %v825, %v817
        %v1322 = vpack.c.b16 %v826, %v818
        %v1323 = vpack.c.b16 %v827, %v819
        %v1324 = vpack.c.b16 %v828, %v820
        %v1325 = vpack.c.b16 %v829, %v821
        %v1326 = vpack.c.b16 %v830, %v822
        %v1327 = vpack.c.b16 %v839, %v831
        %v1328 = vpack.c.b16 %v840, %v832
        %v1329 = vpack.c.b16 %v841, %v833
        %v1330 = vpack.c.b16 %v842, %v834
        %v1331 = vpack.c.b16 %v843, %v835
        %v1332 = vpack.c.b16 %v844, %v836
        %v1333 = vpack.c.b16 %v845, %v837
        %v1334 = vpack.c.b16 %v846, %v838
        %v1335 = vpack.c.b16 %v855, %v847
        %v1336 = vpack.c.b16 %v856, %v848
        %v1337 = vpack.c.b16 %v857, %v849
        %v1338 = vpack.c.b16 %v858, %v850
        %v1339 = vpack.c.b16 %v859, %v851
        %v1340 = vpack.c.b16 %v860, %v852
        %v1341 = vpack.c.b16 %v861, %v853
        %v1342 = vpack.c.b16 %v862, %v854
        %v1343 = vpack.c.b16 %v871, %v863
        %v1344 = vpack.c.b16 %v872, %v864
        %v1345 = vpack.c.b16 %v873, %v865
        %v1346 = vpack.c.b16 %v874, %v866
        %v1347 = vpack.c.b16 %v875, %v867
        %v1348 = vpack.c.b16 %v876, %v868
        %v1349 = vpack.c.b16 %v877, %v869
        %v1350 = vpack.c.b16 %v878, %v870
        %v1351 = vpack.c.b16 %v887, %v879
        %v1352 = vpack.c.b16 %v888, %v880
        %v1353 = vpack.c.b16 %v889, %v881
        %v1354 = vpack.c.b16 %v890, %v882
        %v1355 = vpack.c.b16 %v891, %v883
        %v1356 = vpack.c.b16 %v892, %v884
        %v1357 = vpack.c.b16 %v893, %v885
        %v1358 = vpack.c.b16 %v894, %v886
        %v1359 = vpack.c.b16 %v903, %v895
        %v1360 = vpack.c.b16 %v904, %v896
        %v1361 = vpack.c.b16 %v905, %v897
        %v1362 = vpack.c.b16 %v906, %v898
        %v1363 = vpack.c.b16 %v907, %v899
        %v1364 = vpack.c.b16 %v908, %v900
        %v1365 = vpack.c.b16 %v909, %v901
        %v1366 = vpack.c.b16 %v910, %v902
        %v1367 = vpack.c.b16 %v919, %v911
        %v1368 = vpack.c.b16 %v920, %v912
        %v1369 = vpack.c.b16 %v921, %v913
        %v1370 = vpack.c.b16 %v922, %v914
        %v1371 = vpack.c.b16 %v923, %v915
        %v1372 = vpack.c.b16 %v924, %v916
        %v1373 = vpack.c.b16 %v925, %v917
        %v1374 = vpack.c.b16 %v926, %v918
        %v1375 = vpack.c.b16 %v935, %v927
        %v1376 = vpack.c.b16 %v936, %v928
        %v1377 = vpack.c.b16 %v937, %v929
        %v1378 = vpack.c.b16 %v938, %v930
        %v1379 = vpack.c.b16 %v939, %v931
        %v1380 = vpack.c.b16 %v940, %v932
        %v1381 = vpack.c.b16 %v941, %v933
        %v1382 = vpack.c.b16 %v942, %v934
        %v1383 = vpack.c.b16 %v951, %v943
        %v1384 = vpack.c.b16 %v952, %v944
        %v1385 = vpack.c.b16 %v953, %v945
        %v1386 = vpack.c.b16 %v954, %v946
        %v1387 = vpack.c.b16 %v955, %v947
        %v1388 = vpack.c.b16 %v956, %v948
        %v1389 = vpack.c.b16 %v957, %v949
        %v1390 = vpack.c.b16 %v958, %v950
        %v1391 = vpack.c.b16 %v967, %v959
        %v1392 = vpack.c.b16 %v968, %v960
        %v1393 = vpack.c.b16 %v969, %v961
        %v1394 = vpack.c.b16 %v970, %v962
        %v1395 = vpack.c.b16 %v971, %v963
        %v1396 = vpack.c.b16 %v972, %v964
        %v1397 = vpack.c.b16 %v973, %v965
        %v1398 = vpack.c.b16 %v974, %v966
        %v1399 = vpack.c.b16 %v983, %v975
        %v1400 = vpack.c.b16 %v984, %v976
        %v1401 = vpack.c.b16 %v985, %v977
        %v1402 = vpack.c.b16 %v986, %v978
        %v1403 = vpack.c.b16 %v987, %v979
        %v1404 = vpack.c.b16 %v988, %v980
        %v1405 = vpack.c.b16 %v989, %v981
        %v1406 = vpack.c.b16 %v990, %v982
        %v1407 = vpack.c.b16 %v999, %v991
        %v1408 = vpack.c.b16 %v1000, %v992
        %v1409 = vpack.c.b16 %v1001, %v993
        %v1410 = vpack.c.b16 %v1002, %v994
        %v1411 = vpack.c.b16 %v1003, %v995
        %v1412 = vpack.c.b16 %v1004, %v996
        %v1413 = vpack.c.b16 %v1005, %v997
        %v1414 = vpack.c.b16 %v1006, %v998
        %v1415 = vpack.c.b16 %v1015, %v1007
        %v1416 = vpack.c.b16 %v1016, %v1008
        %v1417 = vpack.c.b16 %v1017, %v1009
        %v1418 = vpack.c.b16 %v1018, %v1010
        %v1419 = vpack.c.b16 %v1019, %v1011
        %v1420 = vpack.c.b16 %v1020, %v1012
        %v1421 = vpack.c.b16 %v1021, %v1013
        %v1422 = vpack.c.b16 %v1022, %v1014
        %v1423 = vpack.c.b16 %v1031, %v1023
        %v1424 = vpack.c.b16 %v1032, %v1024
        %v1425 = vpack.c.b16 %v1033, %v1025
        %v1426 = vpack.c.b16 %v1034, %v1026
        %v1427 = vpack.c.b16 %v1035, %v1027
        %v1428 = vpack.c.b16 %v1036, %v1028
        %v1429 = vpack.c.b16 %v1037, %v1029
        %v1430 = vpack.c.b16 %v1038, %v1030
        %v1431 = vpack.c.b16 %v1047, %v1039
        %v1432 = vpack.c.b16 %v1048, %v1040
        %v1433 = vpack.c.b16 %v1049, %v1041
        %v1434 = vpack.c.b16 %v1050, %v1042
        %v1435 = vpack.c.b16 %v1051, %v1043
        %v1436 = vpack.c.b16 %v1052, %v1044
        %v1437 = vpack.c.b16 %v1053, %v1045
        %v1438 = vpack.c.b16 %v1054, %v1046
        %v1439 = vpack.c.b16 %v1063, %v1055
        %v1440 = vpack.c.b16 %v1064, %v1056
        %v1441 = vpack.c.b16 %v1065, %v1057
        %v1442 = vpack.c.b16 %v1066, %v1058
        %v1443 = vpack.c.b16 %v1067, %v1059
        %v1444 = vpack.c.b16 %v1068, %v1060
        %v1445 = vpack.c.b16 %v1069, %v1061
        %v1446 = vpack.c.b16 %v1070, %v1062
        %v1447 = vpack.c.b16 %v1079, %v1071
        %v1448 = vpack.c.b16 %v1080, %v1072
        %v1449 = vpack.c.b16 %v1081, %v1073
        %v1450 = vpack.c.b16 %v1082, %v1074
        %v1451 = vpack.c.b16 %v1083, %v1075
        %v1452 = vpack.c.b16 %v1084, %v1076
        %v1453 = vpack.c.b16 %v1085, %v1077
        %v1454 = vpack.c.b16 %v1086, %v1078
        %v1455 = vpack.c.b16 %v1095, %v1087
        %v1456 = vpack.c.b16 %v1096, %v1088
        %v1457 = vpack.c.b16 %v1097, %v1089
        %v1458 = vpack.c.b16 %v1098, %v1090
        %v1459 = vpack.c.b16 %v1099, %v1091
        %v1460 = vpack.c.b16 %v1100, %v1092
        %v1461 = vpack.c.b16 %v1101, %v1093
        %v1462 = vpack.c.b16 %v1102, %v1094
        %v1463 = vpack.c.b16 %v1111, %v1103
        %v1464 = vpack.c.b16 %v1112, %v1104
        %v1465 = vpack.c.b16 %v1113, %v1105
        %v1466 = vpack.c.b16 %v1114, %v1106
        %v1467 = vpack.c.b16 %v1115, %v1107
        %v1468 = vpack.c.b16 %v1116, %v1108
        %v1469 = vpack.c.b16 %v1117, %v1109
        %v1470 = vpack.c.b16 %v1118, %v1110
        %v1471 = vpack.c.b16 %v1127, %v1119
        %v1472 = vpack.c.b16 %v1128, %v1120
        %v1473 = vpack.c.b16 %v1129, %v1121
        %v1474 = vpack.c.b16 %v1130, %v1122
        %v1475 = vpack.c.b16 %v1131, %v1123
        %v1476 = vpack.c.b16 %v1132, %v1124
        %v1477 = vpack.c.b16 %v1133, %v1125
        %v1478 = vpack.c.b16 %v1134, %v1126
        %v1479 = vpack.c.b16 %v1143, %v1135
        %v1480 = vpack.c.b16 %v1144, %v1136
        %v1481 = vpack.c.b16 %v1145, %v1137
        %v1482 = vpack.c.b16 %v1146, %v1138
        %v1483 = vpack.c.b16 %v1147, %v1139
        %v1484 = vpack.c.b16 %v1148, %v1140
        %v1485 = vpack.c.b16 %v1149, %v1141
        %v1486 = vpack.c.b16 %v1150, %v1142
        %v1487 = vpack.c.b16 %v1159, %v1151
        %v1488 = vpack.c.b16 %v1160, %v1152
        %v1489 = vpack.c.b16 %v1161, %v1153
        %v1490 = vpack.c.b16 %v1162, %v1154
        %v1491 = vpack.c.b16 %v1163, %v1155
        %v1492 = vpack.c.b16 %v1164, %v1156
        %v1493 = vpack.c.b16 %v1165, %v1157
        %v1494 = vpack.c.b16 %v1166, %v1158
        %v1495 = vpack.c.b16 %v1175, %v1167
        %v1496 = vpack.c.b16 %v1176, %v1168
        %v1497 = vpack.c.b16 %v1177, %v1169
        %v1498 = vpack.c.b16 %v1178, %v1170
        %v1499 = vpack.c.b16 %v1179, %v1171
        %v1500 = vpack.c.b16 %v1180, %v1172
        %v1501 = vpack.c.b16 %v1181, %v1173
        %v1502 = vpack.c.b16 %v1182, %v1174
        %v1503 = vpack.c.b16 %v1191, %v1183
        %v1504 = vpack.c.b16 %v1192, %v1184
        %v1505 = vpack.c.b16 %v1193, %v1185
        %v1506 = vpack.c.b16 %v1194, %v1186
        %v1507 = vpack.c.b16 %v1195, %v1187
        %v1508 = vpack.c.b16 %v1196, %v1188
        %v1509 = vpack.c.b16 %v1197, %v1189
        %v1510 = vpack.c.b16 %v1198, %v1190
        %v1511 = vpack.c.b16 %v1207, %v1199
        %v1512 = vpack.c.b16 %v1208, %v1200
        %v1513 = vpack.c.b16 %v1209, %v1201
        %v1514 = vpack.c.b16 %v1210, %v1202
        %v1515 = vpack.c.b16 %v1211, %v1203
        %v1516 = vpack.c.b16 %v1212, %v1204
        %v1517 = vpack.c.b16 %v1213, %v1205
        %v1518 = vpack.c.b16 %v1214, %v1206
        %v1519 = vpack.c.b16 %v1223, %v1215
        %v1520 = vpack.c.b16 %v1224, %v1216
        %v1521 = vpack.c.b16 %v1225, %v1217
        %v1522 = vpack.c.b16 %v1226, %v1218
        %v1523 = vpack.c.b16 %v1227, %v1219
        %v1524 = vpack.c.b16 %v1228, %v1220
        %v1525 = vpack.c.b16 %v1229, %v1221
        %v1526 = vpack.c.b16 %v1230, %v1222
        %v1527 = vpack.c.b16 %v1239, %v1231
        %v1528 = vpack.c.b16 %v1240, %v1232
        %v1529 = vpack.c.b16 %v1241, %v1233
        %v1530 = vpack.c.b16 %v1242, %v1234
        %v1531 = vpack.c.b16 %v1243, %v1235
        %v1532 = vpack.c.b16 %v1244, %v1236
        %v1533 = vpack.c.b16 %v1245, %v1237
        %v1534 = vpack.c.b16 %v1246, %v1238
        %v1535 = vpack.c.b16 %v1255, %v1247
        %v1536 = vpack.c.b16 %v1256, %v1248
        %v1537 = vpack.c.b16 %v1257, %v1249
        %v1538 = vpack.c.b16 %v1258, %v1250
        %v1539 = vpack.c.b16 %v1259, %v1251
        %v1540 = vpack.c.b16 %v1260, %v1252
        %v1541 = vpack.c.b16 %v1261, %v1253
        %v1542 = vpack.c.b16 %v1262, %v1254
        %v1543 = vpack.c.b16 %v1271, %v1263
        %v1544 = vpack.c.b16 %v1272, %v1264
        %v1545 = vpack.c.b16 %v1273, %v1265
        %v1546 = vpack.c.b16 %v1274, %v1266
        %v1547 = vpack.c.b16 %v1275, %v1267
        %v1548 = vpack.c.b16 %v1276, %v1268
        %v1549 = vpack.c.b16 %v1277, %v1269
        %v1550 = vpack.c.b16 %v1278, %v1270
        %v1551 = vpack.c.b16 %v1287, %v1279
        %v1552 = vpack.c.b16 %v1288, %v1280
        %v1553 = vpack.c.b16 %v1289, %v1281
        %v1554 = vpack.c.b16 %v1290, %v1282
        %v1555 = vpack.c.b16 %v1291, %v1283
        %v1556 = vpack.c.b16 %v1292, %v1284
        %v1557 = vpack.c.b16 %v1293, %v1285
        %v1558 = vpack.c.b16 %v1294, %v1286
        %v1559 = vpack.c.b16 %v1303, %v1295
        %v1560 = vpack.c.b16 %v1304, %v1296
        %v1561 = vpack.c.b16 %v1305, %v1297
        %v1562 = vpack.c.b16 %v1306, %v1298
        %v1563 = vpack.c.b16 %v1307, %v1299
        %v1564 = vpack.c.b16 %v1308, %v1300
        %v1565 = vpack.c.b16 %v1309, %v1301
        %v1566 = vpack.c.b16 %v1310, %v1302
        %1823 = vmatprep.subr.bf16.mxu0 %v1312
        %1824 = vmatpush1.bf16.msra.mxu0 %v1311
        %1825 = vmatprep.subr.bf16.mxu0 %v1320
        %1826 = vmatpush1.bf16.msra.mxu0 %v1319
        %1827 = vmatprep.subr.bf16.mxu0 %v1328
        %1828 = vmatpush1.bf16.msra.mxu0 %v1327
        %1829 = vmatprep.subr.bf16.mxu0 %v1336
        %1830 = vmatpush1.bf16.msra.mxu0 %v1335
        %1831 = vmatprep.subr.bf16.mxu0 %v1344
        %1832 = vmatpush1.bf16.msra.mxu0 %v1343
        %1833 = vmatprep.subr.bf16.mxu0 %v1352
        %1834 = vmatpush1.bf16.msra.mxu0 %v1351
        %1835 = vmatprep.subr.bf16.mxu0 %v1360
        %1836 = vmatpush1.bf16.msra.mxu0 %v1359
        %1837 = vmatprep.subr.bf16.mxu0 %v1368
        %1838 = vmatpush1.bf16.msra.mxu0 %v1367
        %1839 = vmatprep.subr.bf16.mxu0 %v1376
        %1840 = vmatpush1.bf16.msra.mxu0 %v1375
        %1841 = vmatprep.subr.bf16.mxu0 %v1384
        %1842 = vmatpush1.bf16.msra.mxu0 %v1383
        %1843 = vmatprep.subr.bf16.mxu0 %v1392
        %1844 = vmatpush1.bf16.msra.mxu0 %v1391
        %1845 = vmatprep.subr.bf16.mxu0 %v1400
        %1846 = vmatpush1.bf16.msra.mxu0 %v1399
        %1847 = vmatprep.subr.bf16.mxu0 %v1408
        %1848 = vmatpush1.bf16.msra.mxu0 %v1407
        %1849 = vmatprep.subr.bf16.mxu0 %v1416
        %1850 = vmatpush1.bf16.msra.mxu0 %v1415
        %1851 = vmatprep.subr.bf16.mxu0 %v1424
        %1852 = vmatpush1.bf16.msra.mxu0 %v1423
        %1853 = vmatprep.subr.bf16.mxu0 %v1432
        %1854 = vmatpush1.bf16.msra.mxu0 %v1431
        %1855 = vmatprep.mubr.bf16.mxu0 %v536
        %1856 = vmatmul.mubr.bf16.gmra.mrb[0].mxu0 %v535
        %v1857 = vpop.f32.mrb[0].mxu0
        %v1858 = vadd.f32 0.0, %v1857
        %v1859 = vpop.f32.mrb[0].mxu0
        %v1860 = vadd.f32 0.0, %v1859
        %v1861 = vpop.f32.mrb[0].mxu0
        %v1862 = vpop.f32.mrb[0].mxu0
        %1863 = vdwg.mxu0
        %1864 = vmatprep.subr.bf16.mxu0 %v1440
        %1865 = vmatpush1.bf16.msra.mxu0 %v1439
        %1866 = vmatprep.subr.bf16.mxu0 %v1448
        %1867 = vmatpush1.bf16.msra.mxu0 %v1447
        %1868 = vmatprep.subr.bf16.mxu0 %v1456
        %1869 = vmatpush1.bf16.msra.mxu0 %v1455
        %1870 = vmatprep.subr.bf16.mxu0 %v1464
        %1871 = vmatpush1.bf16.msra.mxu0 %v1463
        %1872 = vmatprep.subr.bf16.mxu0 %v1472
        %1873 = vmatpush1.bf16.msra.mxu0 %v1471
        %1874 = vmatprep.subr.bf16.mxu0 %v1480
        %1875 = vmatpush1.bf16.msra.mxu0 %v1479
        %1876 = vmatprep.subr.bf16.mxu0 %v1488
        %1877 = vmatpush1.bf16.msra.mxu0 %v1487
        %1878 = vmatprep.subr.bf16.mxu0 %v1496
        %1879 = vmatpush1.bf16.msra.mxu0 %v1495
        %1880 = vmatprep.subr.bf16.mxu0 %v1504
        %1881 = vmatpush1.bf16.msra.mxu0 %v1503
        %1882 = vmatprep.subr.bf16.mxu0 %v1512
        %1883 = vmatpush1.bf16.msra.mxu0 %v1511
        %1884 = vmatprep.subr.bf16.mxu0 %v1520
        %1885 = vmatpush1.bf16.msra.mxu0 %v1519
        %1886 = vmatprep.subr.bf16.mxu0 %v1528
        %1887 = vmatpush1.bf16.msra.mxu0 %v1527
        %1888 = vmatprep.subr.bf16.mxu0 %v1536
        %1889 = vmatpush1.bf16.msra.mxu0 %v1535
        %1890 = vmatprep.subr.bf16.mxu0 %v1544
        %1891 = vmatpush1.bf16.msra.mxu0 %v1543
        %1892 = vmatprep.subr.bf16.mxu0 %v1552
        %1893 = vmatpush1.bf16.msra.mxu0 %v1551
        %1894 = vmatprep.subr.bf16.mxu0 %v1560
        %1895 = vmatpush1.bf16.msra.mxu0 %v1559
        %1896 = vmatprep.mubr.bf16.mxu0 %v538
        %1897 = vmatmul.mubr.bf16.gmra.mrb[0].mxu0 %v537
        %v1898 = vpop.f32.mrb[0].mxu0
        %v1899 = vadd.f32 %v1858, %v1898
        %v1900 = vpop.f32.mrb[0].mxu0
        %v1901 = vadd.f32 %v1860, %v1900
        %v1902 = vpop.f32.mrb[0].mxu0
        %v1903 = vpop.f32.mrb[0].mxu0
        %1904 = vdwg.mxu0
        %1905 = vmatprep.subr.bf16.mxu0 %v1314
        %1906 = vmatpush1.bf16.msra.mxu0 %v1313
        %1907 = vmatprep.subr.bf16.mxu0 %v1322
        %1908 = vmatpush1.bf16.msra.mxu0 %v1321
        %1909 = vmatprep.subr.bf16.mxu0 %v1330
        %1910 = vmatpush1.bf16.msra.mxu0 %v1329
        %1911 = vmatprep.subr.bf16.mxu0 %v1338
        %1912 = vmatpush1.bf16.msra.mxu0 %v1337
        %1913 = vmatprep.subr.bf16.mxu0 %v1346
        %1914 = vmatpush1.bf16.msra.mxu0 %v1345
        %1915 = vmatprep.subr.bf16.mxu0 %v1354
        %1916 = vmatpush1.bf16.msra.mxu0 %v1353
        %1917 = vmatprep.subr.bf16.mxu0 %v1362
        %1918 = vmatpush1.bf16.msra.mxu0 %v1361
        %1919 = vmatprep.subr.bf16.mxu0 %v1370
        %1920 = vmatpush1.bf16.msra.mxu0 %v1369
        %1921 = vmatprep.subr.bf16.mxu0 %v1378
        %1922 = vmatpush1.bf16.msra.mxu0 %v1377
        %1923 = vmatprep.subr.bf16.mxu0 %v1386
        %1924 = vmatpush1.bf16.msra.mxu0 %v1385
        %1925 = vmatprep.subr.bf16.mxu0 %v1394
        %1926 = vmatpush1.bf16.msra.mxu0 %v1393
        %1927 = vmatprep.subr.bf16.mxu0 %v1402
        %1928 = vmatpush1.bf16.msra.mxu0 %v1401
        %1929 = vmatprep.subr.bf16.mxu0 %v1410
        %1930 = vmatpush1.bf16.msra.mxu0 %v1409
        %1931 = vmatprep.subr.bf16.mxu0 %v1418
        %1932 = vmatpush1.bf16.msra.mxu0 %v1417
        %1933 = vmatprep.subr.bf16.mxu0 %v1426
        %1934 = vmatpush1.bf16.msra.mxu0 %v1425
        %1935 = vmatprep.subr.bf16.mxu0 %v1434
        %1936 = vmatpush1.bf16.msra.mxu0 %v1433
        %1937 = vmatprep.mubr.bf16.mxu0 %v536
        %1938 = vmatmul.mubr.bf16.gmra.mrb[0].mxu0 %v535
        %v1939 = vpop.f32.mrb[0].mxu0
        %v1940 = vadd.f32 0.0, %v1939
        %v1941 = vpop.f32.mrb[0].mxu0
        %v1942 = vadd.f32 0.0, %v1941
        %v1943 = vpop.f32.mrb[0].mxu0
        %v1944 = vpop.f32.mrb[0].mxu0
        %1945 = vdwg.mxu0
        %1946 = vmatprep.subr.bf16.mxu0 %v1442
        %1947 = vmatpush1.bf16.msra.mxu0 %v1441
        %1948 = vmatprep.subr.bf16.mxu0 %v1450
        %1949 = vmatpush1.bf16.msra.mxu0 %v1449
        %1950 = vmatprep.subr.bf16.mxu0 %v1458
        %1951 = vmatpush1.bf16.msra.mxu0 %v1457
        %1952 = vmatprep.subr.bf16.mxu0 %v1466
        %1953 = vmatpush1.bf16.msra.mxu0 %v1465
        %1954 = vmatprep.subr.bf16.mxu0 %v1474
        %1955 = vmatpush1.bf16.msra.mxu0 %v1473
        %1956 = vmatprep.subr.bf16.mxu0 %v1482
        %1957 = vmatpush1.bf16.msra.mxu0 %v1481
        %1958 = vmatprep.subr.bf16.mxu0 %v1490
        %1959 = vmatpush1.bf16.msra.mxu0 %v1489
        %1960 = vmatprep.subr.bf16.mxu0 %v1498
        %1961 = vmatpush1.bf16.msra.mxu0 %v1497
        %1962 = vmatprep.subr.bf16.mxu0 %v1506
        %1963 = vmatpush1.bf16.msra.mxu0 %v1505
        %1964 = vmatprep.subr.bf16.mxu0 %v1514
        %1965 = vmatpush1.bf16.msra.mxu0 %v1513
        %1966 = vmatprep.subr.bf16.mxu0 %v1522
        %1967 = vmatpush1.bf16.msra.mxu0 %v1521
        %1968 = vmatprep.subr.bf16.mxu0 %v1530
        %1969 = vmatpush1.bf16.msra.mxu0 %v1529
        %1970 = vmatprep.subr.bf16.mxu0 %v1538
        %1971 = vmatpush1.bf16.msra.mxu0 %v1537
        %1972 = vmatprep.subr.bf16.mxu0 %v1546
        %1973 = vmatpush1.bf16.msra.mxu0 %v1545
        %1974 = vmatprep.subr.bf16.mxu0 %v1554
        %1975 = vmatpush1.bf16.msra.mxu0 %v1553
        %1976 = vmatprep.subr.bf16.mxu0 %v1562
        %1977 = vmatpush1.bf16.msra.mxu0 %v1561
        %1978 = vmatprep.mubr.bf16.mxu0 %v538
        %1979 = vmatmul.mubr.bf16.gmra.mrb[0].mxu0 %v537
        %v1980 = vpop.f32.mrb[0].mxu0
        %v1981 = vadd.f32 %v1940, %v1980
        %v1982 = vpop.f32.mrb[0].mxu0
        %v1983 = vadd.f32 %v1942, %v1982
        %v1984 = vpop.f32.mrb[0].mxu0
        %v1985 = vpop.f32.mrb[0].mxu0
        %1986 = vdwg.mxu0
        %1987 = vmatprep.subr.bf16.mxu0 %v1316
        %1988 = vmatpush1.bf16.msra.mxu0 %v1315
        %1989 = vmatprep.subr.bf16.mxu0 %v1324
        %1990 = vmatpush1.bf16.msra.mxu0 %v1323
        %1991 = vmatprep.subr.bf16.mxu0 %v1332
        %1992 = vmatpush1.bf16.msra.mxu0 %v1331
        %1993 = vmatprep.subr.bf16.mxu0 %v1340
        %1994 = vmatpush1.bf16.msra.mxu0 %v1339
        %1995 = vmatprep.subr.bf16.mxu0 %v1348
        %1996 = vmatpush1.bf16.msra.mxu0 %v1347
        %1997 = vmatprep.subr.bf16.mxu0 %v1356
        %1998 = vmatpush1.bf16.msra.mxu0 %v1355
        %1999 = vmatprep.subr.bf16.mxu0 %v1364
        %2000 = vmatpush1.bf16.msra.mxu0 %v1363
        %2001 = vmatprep.subr.bf16.mxu0 %v1372
        %2002 = vmatpush1.bf16.msra.mxu0 %v1371
        %2003 = vmatprep.subr.bf16.mxu0 %v1380
        %2004 = vmatpush1.bf16.msra.mxu0 %v1379
        %2005 = vmatprep.subr.bf16.mxu0 %v1388
        %2006 = vmatpush1.bf16.msra.mxu0 %v1387
        %2007 = vmatprep.subr.bf16.mxu0 %v1396
        %2008 = vmatpush1.bf16.msra.mxu0 %v1395
        %2009 = vmatprep.subr.bf16.mxu0 %v1404
        %2010 = vmatpush1.bf16.msra.mxu0 %v1403
        %2011 = vmatprep.subr.bf16.mxu0 %v1412
        %2012 = vmatpush1.bf16.msra.mxu0 %v1411
        %2013 = vmatprep.subr.bf16.mxu0 %v1420
        %2014 = vmatpush1.bf16.msra.mxu0 %v1419
        %2015 = vmatprep.subr.bf16.mxu0 %v1428
        %2016 = vmatpush1.bf16.msra.mxu0 %v1427
        %2017 = vmatprep.subr.bf16.mxu0 %v1436
        %2018 = vmatpush1.bf16.msra.mxu0 %v1435
        %2019 = vmatprep.mubr.bf16.mxu0 %v536
        %2020 = vmatmul.mubr.bf16.gmra.mrb[0].mxu0 %v535
        %v2021 = vpop.f32.mrb[0].mxu0
        %v2022 = vadd.f32 0.0, %v2021
        %v2023 = vpop.f32.mrb[0].mxu0
        %v2024 = vadd.f32 0.0, %v2023
        %v2025 = vpop.f32.mrb[0].mxu0
        %v2026 = vpop.f32.mrb[0].mxu0
        %2027 = vdwg.mxu0
        %2028 = vmatprep.subr.bf16.mxu0 %v1444
        %2029 = vmatpush1.bf16.msra.mxu0 %v1443
        %2030 = vmatprep.subr.bf16.mxu0 %v1452
        %2031 = vmatpush1.bf16.msra.mxu0 %v1451
        %2032 = vmatprep.subr.bf16.mxu0 %v1460
        %2033 = vmatpush1.bf16.msra.mxu0 %v1459
        %2034 = vmatprep.subr.bf16.mxu0 %v1468
        %2035 = vmatpush1.bf16.msra.mxu0 %v1467
        %2036 = vmatprep.subr.bf16.mxu0 %v1476
        %2037 = vmatpush1.bf16.msra.mxu0 %v1475
        %2038 = vmatprep.subr.bf16.mxu0 %v1484
        %2039 = vmatpush1.bf16.msra.mxu0 %v1483
        %2040 = vmatprep.subr.bf16.mxu0 %v1492
        %2041 = vmatpush1.bf16.msra.mxu0 %v1491
        %2042 = vmatprep.subr.bf16.mxu0 %v1500
        %2043 = vmatpush1.bf16.msra.mxu0 %v1499
        %2044 = vmatprep.subr.bf16.mxu0 %v1508
        %2045 = vmatpush1.bf16.msra.mxu0 %v1507
        %2046 = vmatprep.subr.bf16.mxu0 %v1516
        %2047 = vmatpush1.bf16.msra.mxu0 %v1515
        %2048 = vmatprep.subr.bf16.mxu0 %v1524
        %2049 = vmatpush1.bf16.msra.mxu0 %v1523
        %2050 = vmatprep.subr.bf16.mxu0 %v1532
        %2051 = vmatpush1.bf16.msra.mxu0 %v1531
        %2052 = vmatprep.subr.bf16.mxu0 %v1540
        %2053 = vmatpush1.bf16.msra.mxu0 %v1539
        %2054 = vmatprep.subr.bf16.mxu0 %v1548
        %2055 = vmatpush1.bf16.msra.mxu0 %v1547
        %2056 = vmatprep.subr.bf16.mxu0 %v1556
        %2057 = vmatpush1.bf16.msra.mxu0 %v1555
        %2058 = vmatprep.subr.bf16.mxu0 %v1564
        %2059 = vmatpush1.bf16.msra.mxu0 %v1563
        %2060 = vmatprep.mubr.bf16.mxu0 %v538
        %2061 = vmatmul.mubr.bf16.gmra.mrb[0].mxu0 %v537
        %v2062 = vpop.f32.mrb[0].mxu0
        %v2063 = vadd.f32 %v2022, %v2062
        %v2064 = vpop.f32.mrb[0].mxu0
        %v2065 = vadd.f32 %v2024, %v2064
        %v2066 = vpop.f32.mrb[0].mxu0
        %v2067 = vpop.f32.mrb[0].mxu0
        %2068 = vdwg.mxu0
        %2069 = vmatprep.subr.bf16.mxu0 %v1318
        %2070 = vmatpush1.bf16.msra.mxu0 %v1317
        %2071 = vmatprep.subr.bf16.mxu0 %v1326
        %2072 = vmatpush1.bf16.msra.mxu0 %v1325
        %2073 = vmatprep.subr.bf16.mxu0 %v1334
        %2074 = vmatpush1.bf16.msra.mxu0 %v1333
        %2075 = vmatprep.subr.bf16.mxu0 %v1342
        %2076 = vmatpush1.bf16.msra.mxu0 %v1341
        %2077 = vmatprep.subr.bf16.mxu0 %v1350
        %2078 = vmatpush1.bf16.msra.mxu0 %v1349
        %2079 = vmatprep.subr.bf16.mxu0 %v1358
        %2080 = vmatpush1.bf16.msra.mxu0 %v1357
        %2081 = vmatprep.subr.bf16.mxu0 %v1366
        %2082 = vmatpush1.bf16.msra.mxu0 %v1365
        %2083 = vmatprep.subr.bf16.mxu0 %v1374
        %2084 = vmatpush1.bf16.msra.mxu0 %v1373
        %2085 = vmatprep.subr.bf16.mxu0 %v1382
        %2086 = vmatpush1.bf16.msra.mxu0 %v1381
        %2087 = vmatprep.subr.bf16.mxu0 %v1390
        %2088 = vmatpush1.bf16.msra.mxu0 %v1389
        %2089 = vmatprep.subr.bf16.mxu0 %v1398
        %2090 = vmatpush1.bf16.msra.mxu0 %v1397
        %2091 = vmatprep.subr.bf16.mxu0 %v1406
        %2092 = vmatpush1.bf16.msra.mxu0 %v1405
        %2093 = vmatprep.subr.bf16.mxu0 %v1414
        %2094 = vmatpush1.bf16.msra.mxu0 %v1413
        %2095 = vmatprep.subr.bf16.mxu0 %v1422
        %2096 = vmatpush1.bf16.msra.mxu0 %v1421
        %2097 = vmatprep.subr.bf16.mxu0 %v1430
        %2098 = vmatpush1.bf16.msra.mxu0 %v1429
        %2099 = vmatprep.subr.bf16.mxu0 %v1438
        %2100 = vmatpush1.bf16.msra.mxu0 %v1437
        %2101 = vmatprep.mubr.bf16.mxu0 %v536
        %2102 = vmatmul.mubr.bf16.gmra.mrb[0].mxu0 %v535
        %v2103 = vpop.f32.mrb[0].mxu0
        %v2104 = vadd.f32 0.0, %v2103
        %v2105 = vpop.f32.mrb[0].mxu0
        %v2106 = vadd.f32 0.0, %v2105
        %v2107 = vpop.f32.mrb[0].mxu0
        %v2108 = vpop.f32.mrb[0].mxu0
        %2109 = vdwg.mxu0
        %2110 = vmatprep.subr.bf16.mxu0 %v1446
        %2111 = vmatpush1.bf16.msra.mxu0 %v1445
        %2112 = vmatprep.subr.bf16.mxu0 %v1454
        %2113 = vmatpush1.bf16.msra.mxu0 %v1453
        %2114 = vmatprep.subr.bf16.mxu0 %v1462
        %2115 = vmatpush1.bf16.msra.mxu0 %v1461
        %2116 = vmatprep.subr.bf16.mxu0 %v1470
        %2117 = vmatpush1.bf16.msra.mxu0 %v1469
        %2118 = vmatprep.subr.bf16.mxu0 %v1478
        %2119 = vmatpush1.bf16.msra.mxu0 %v1477
        %2120 = vmatprep.subr.bf16.mxu0 %v1486
        %2121 = vmatpush1.bf16.msra.mxu0 %v1485
        %2122 = vmatprep.subr.bf16.mxu0 %v1494
        %2123 = vmatpush1.bf16.msra.mxu0 %v1493
        %2124 = vmatprep.subr.bf16.mxu0 %v1502
        %2125 = vmatpush1.bf16.msra.mxu0 %v1501
        %2126 = vmatprep.subr.bf16.mxu0 %v1510
        %2127 = vmatpush1.bf16.msra.mxu0 %v1509
        %2128 = vmatprep.subr.bf16.mxu0 %v1518
        %2129 = vmatpush1.bf16.msra.mxu0 %v1517
        %2130 = vmatprep.subr.bf16.mxu0 %v1526
        %2131 = vmatpush1.bf16.msra.mxu0 %v1525
        %2132 = vmatprep.subr.bf16.mxu0 %v1534
        %2133 = vmatpush1.bf16.msra.mxu0 %v1533
        %2134 = vmatprep.subr.bf16.mxu0 %v1542
        %2135 = vmatpush1.bf16.msra.mxu0 %v1541
        %2136 = vmatprep.subr.bf16.mxu0 %v1550
        %2137 = vmatpush1.bf16.msra.mxu0 %v1549
        %2138 = vmatprep.subr.bf16.mxu0 %v1558
        %2139 = vmatpush1.bf16.msra.mxu0 %v1557
        %2140 = vmatprep.subr.bf16.mxu0 %v1566
        %2141 = vmatpush1.bf16.msra.mxu0 %v1565
        %2142 = vmatprep.mubr.bf16.mxu0 %v538
        %2143 = vmatmul.mubr.bf16.gmra.mrb[0].mxu0 %v537
        %v2144 = vpop.f32.mrb[0].mxu0
        %v2145 = vadd.f32 %v2104, %v2144
        %v2146 = vpop.f32.mrb[0].mxu0
        %v2147 = vadd.f32 %v2106, %v2146
        %v2148 = vpop.f32.mrb[0].mxu0
        %v2149 = vpop.f32.mrb[0].mxu0
        %2150 = vdwg.mxu0
        %v2151 = vmul.f32 %v1899, 0.088388346
        %v2152 = vmul.f32 %v1901, 0.088388346
        %v2153 = vmul.f32 %v1981, 0.088388346
        %v2154 = vmul.f32 %v1983, 0.088388346
        %v2155 = vld [vmem:[%s1] sm:$0xff]
        %v2156 = vld [vmem:[%s2] sm:$0xff]
        %v2157 = vlaneseq
        %v2158 = vand.u32 %v2157, 127
        %v2159 = vadd.s32 %v2158, 128
        %v2160 = vadd.s32 %v2158, 256
        %v2161 = vadd.s32 %v2158, 384
        %vm2162 = vcmp.lt.s32.totalorder %v2158, 0
        %v2163 = vsub.s32 0, %v2158
        %v2164 = vsel %vm2162, %v2163, %v2158
        %v2165 = vshrl.u32 %v2164, 1
        %v2166 = vand.u32 %v2164, 1
        %v2167 = vsub.s32 0, %v2166
        %v2168 = vsel %vm2162, %v2167, %v2166
        %vm2169 = vcmp.lt.s32.totalorder %v2159, 0
        %v2170 = vsub.s32 0, %v2159
        %v2171 = vsel %vm2169, %v2170, %v2159
        %v2172 = vshrl.u32 %v2171, 1
        %v2173 = vand.u32 %v2171, 1
        %v2174 = vsub.s32 0, %v2173
        %v2175 = vsel %vm2169, %v2174, %v2173
        %vm2176 = vcmp.lt.s32.totalorder %v2160, 0
        %v2177 = vsub.s32 0, %v2160
        %v2178 = vsel %vm2176, %v2177, %v2160
        %v2179 = vshrl.u32 %v2178, 1
        %v2180 = vand.u32 %v2178, 1
        %v2181 = vsub.s32 0, %v2180
        %v2182 = vsel %vm2176, %v2181, %v2180
        %vm2183 = vcmp.lt.s32.totalorder %v2161, 0
        %v2184 = vsub.s32 0, %v2161
        %v2185 = vsel %vm2183, %v2184, %v2161
        %v2186 = vshrl.u32 %v2185, 1
        %v2187 = vand.u32 %v2185, 1
        %v2188 = vsub.s32 0, %v2187
        %v2189 = vsel %vm2183, %v2188, %v2187
        %vm2190 = vcmp.ne.s32.totalorder %v2168, 0
        %vm2191 = vcmp.ne.s32.totalorder %v2175, 0
        %vm2192 = vcmp.ne.s32.totalorder %v2182, 0
        %vm2193 = vcmp.ne.s32.totalorder %v2189, 0
        %vm2194 = vcmp.lt.s32.totalorder %v2168, 0
        %vm2195 = vcmp.lt.s32.totalorder %v2175, 0
        %vm2196 = vcmp.lt.s32.totalorder %v2182, 0
        %vm2197 = vcmp.lt.s32.totalorder %v2189, 0
        %vm2198 = vmand %vm2194, %vm2190
        %vm2199 = vmand %vm2195, %vm2191
        %vm2200 = vmand %vm2196, %vm2192
        %vm2201 = vmand %vm2197, %vm2193
        %v2202 = vadd.s32 %v2168, 2
        %v2203 = vadd.s32 %v2175, 2
        %v2204 = vadd.s32 %v2182, 2
        %v2205 = vadd.s32 %v2189, 2
        %v2206 = vsel %vm2198, %v2202, %v2168
        %v2207 = vsel %vm2199, %v2203, %v2175
        %v2208 = vsel %vm2200, %v2204, %v2182
        %v2209 = vsel %vm2201, %v2205, %v2189
        %vm2210 = vcmp.eq.s32.totalorder %v2206, 0
        %vm2211 = vcmp.eq.s32.totalorder %v2207, 0
        %vm2212 = vcmp.eq.s32.totalorder %v2208, 0
        %vm2213 = vcmp.eq.s32.totalorder %v2209, 0
        %v2214 = vmul.f32 %v2151, %v2155
        %v2215 = vmul.f32 %v2152, %v2155
        %v2216 = vmul.f32 %v2153, %v2155
        %v2217 = vmul.f32 %v2154, %v2155
        %2218 = vrot.lane.b32.xlu0 %v2151, 1
        %v2219 = vpop.permute.xlu0 %2218
        %2220 = vrot.lane.b32.xlu0 %v2152, 1
        %v2221 = vpop.permute.xlu0 %2220
        %2222 = vrot.lane.b32.xlu0 %v2153, 1
        %v2223 = vpop.permute.xlu0 %2222
        %2224 = vrot.lane.b32.xlu0 %v2154, 1
        %v2225 = vpop.permute.xlu0 %2224
        %vm2226 = vcmp.lt.s32.totalorder %v2158, 1
        %v2227 = vsel %vm2226, %v2223, %v2225
        %v2228 = vsel %vm2226, %v2221, %v2223
        %v2229 = vsel %vm2226, %v2219, %v2221
        %v2230 = vsel %vm2226, %v2225, %v2219
        %2231 = vrot.lane.b32.xlu0 %v2151, 127
        %v2232 = vpop.permute.xlu0 %2231
        %2233 = vrot.lane.b32.xlu0 %v2152, 127
        %v2234 = vpop.permute.xlu0 %2233
        %2235 = vrot.lane.b32.xlu0 %v2153, 127
        %v2236 = vpop.permute.xlu0 %2235
        %2237 = vrot.lane.b32.xlu0 %v2154, 127
        %v2238 = vpop.permute.xlu0 %2237
        %vm2239 = vcmp.lt.s32.totalorder %v2158, 127
        %v2240 = vsel %vm2239, %v2236, %v2238
        %v2241 = vsel %vm2239, %v2234, %v2236
        %v2242 = vsel %vm2239, %v2232, %v2234
        %v2243 = vsel %vm2239, %v2238, %v2232
        %v2244 = vsel %vm2210, %v2242, %v2230
        %v2245 = vsel %vm2211, %v2241, %v2229
        %v2246 = vsel %vm2212, %v2240, %v2228
        %v2247 = vsel %vm2213, %v2243, %v2227
        %v2248 = vmul.f32 %v2244, %v2156
        %v2249 = vmul.f32 %v2245, %v2156
        %v2250 = vmul.f32 %v2246, %v2156
        %v2251 = vmul.f32 %v2247, %v2156
        %v2252 = vadd.f32 %v2214, %v2248
        %v2253 = vadd.f32 %v2215, %v2249
        %v2254 = vadd.f32 %v2216, %v2250
        %v2255 = vadd.f32 %v2217, %v2251
        %v2256 = vmul.f32 %v2063, %v2155
        %v2257 = vmul.f32 %v2065, %v2155
        %2258 = vrot.lane.b32.xlu0 %v2063, 1
        %v2259 = vpop.permute.xlu0 %2258
        %2260 = vrot.lane.b32.xlu0 %v2065, 1
        %v2261 = vpop.permute.xlu0 %2260
        %v2262 = vsel %vm2226, %v2259, %v2261
        %v2263 = vsel %vm2226, %v2261, %v2259
        %2264 = vrot.lane.b32.xlu0 %v2063, 127
        %v2265 = vpop.permute.xlu0 %2264
        %2266 = vrot.lane.b32.xlu0 %v2065, 127
        %v2267 = vpop.permute.xlu0 %2266
        %v2268 = vsel %vm2239, %v2265, %v2267
        %v2269 = vsel %vm2239, %v2267, %v2265
        %v2270 = vsel %vm2210, %v2268, %v2263
        %v2271 = vsel %vm2211, %v2269, %v2262
        %v2272 = vmul.f32 %v2270, %v2156
        %v2273 = vmul.f32 %v2271, %v2156
        %v2274 = vadd.f32 %v2256, %v2272
        %v2275 = vadd.f32 %v2257, %v2273
        %v2276 = vpack.c.bf16 %v2252, %v2252
        %v2277 = vpack.c.bf16 %v2253, %v2253
        %v2278 = vpack.c.bf16 %v2254, %v2254
        %v2279 = vpack.c.bf16 %v2255, %v2255
        %v2280 = vpack.c.bf16 %v2274, %v2274
        %v2281 = vpack.c.bf16 %v2275, %v2275
        %v2282 = vpack.c.bf16 %v2145, %v2145
        %v2283 = vpack.c.bf16 %v2147, %v2147
        %2284 = vst [vmem:[#allocation4] sm:$0xf] %v2276
        %v2286 = vrot.slane %v2277, 4
        %2288 = vst [vmem:[#allocation4] sm:$0xf0] %v2286
        %s2289 = scalar_lea.vmem [#allocation4], 8
        %2290 = vst [vmem:[%s2289] sm:$0xf] %v2278
        %v2292 = vrot.slane %v2279, 4
        %2294 = vst [vmem:[%s2289] sm:$0xf0] %v2292
        %v2297 = vunpack.c.l.b16 %v2280
        %v2298 = vunpack.c.l.b16 %v2281
        %v2299 = vpack.c.b16 %v2298, %v2297
        %s2301 = smul.u32 %s270, 2
        %s2302 = smul.addr %s2301, 4
        %s2303 = scalar_lea.vmem [#allocation2], %s2302
        %2304 = vst [vmem:[%s2303] sm:$0xff] %v2299
        %v2307 = vunpack.c.l.b16 %v2282
        %v2308 = vunpack.c.l.b16 %v2283
        %v2309 = vpack.c.b16 %v2308, %v2307
        %s2311 = smul.addr %s2301, 4
        %s2312 = scalar_lea.vmem [#allocation3], %s2311
        %2313 = vst [vmem:[%s2312] sm:$0xff] %v2309
        %s2314 = smul.u32 %s26, 8
        %s2315 = smul.addr %s2314, 64
        %s2316 = scalar_lea.hbm %s8, %s2315
        // Predicated region
        $region49: #{tpu_custom_call.1} parent=39 // pred_check
          _
        $region50: #{tpu_custom_call.1} parent=39 // pred_check_branch
          %2318 = sbr.rel target = $region52
        $region51: #{tpu_custom_call.1} parent=39 // pred_region
          %2319 = sst [smem:[#allocation16]] [#allocation15]
          %2320 = sst [smem:[#allocation17]] [#allocation14]
        $region52: #{tpu_custom_call.1} parent=39 // pred_fallthru
          _
        %2322 = shalt.err (0)
        %s2324 = sshll.u32 %s2303, 4
        %s2325 = int_to_ptr.vmem [resolvable:$true] %s2324
        %2327 = dma.vmem_to_hbm [thread:$0]  %s2325, 128, %s2316, [#allocation7]
        %s2328 = smul.addr %s2314, 64
        %s2329 = scalar_lea.hbm %s9, %s2328
        %s2330 = scalar_lea.sflag [#allocation7], 1
        // Predicated region
        $region53: #{tpu_custom_call.1} parent=39 // pred_check
          _
        $region54: #{tpu_custom_call.1} parent=39 // pred_check_branch
          %2332 = sbr.rel target = $region56
        $region55: #{tpu_custom_call.1} parent=39 // pred_region
          %2333 = sst [smem:[#allocation16]] [#allocation19]
          %2334 = sst [smem:[#allocation17]] [#allocation18]
        $region56: #{tpu_custom_call.1} parent=39 // pred_fallthru
          _
        %2336 = shalt.err (0)
        %s2338 = sshll.u32 %s2312, 4
        %s2339 = int_to_ptr.vmem [resolvable:$true] %s2338
        %2341 = dma.vmem_to_hbm [thread:$0]  %s2339, 128, %s2329, %s2330
        %v2342 = vlaneseq
        %v2343 = vshrl.u32 %v2342, 7
        %v2344 = vadd.s32 %v2343, 8
        %vm2345 = vcmp.lt.s32.totalorder %v2343, 0
        %v2346 = vsub.s32 0, %v2343
        %v2347 = vsel %vm2345, %v2346, %v2343
        %v2348 = vshrl.u32 %v2347, 3
        %v2349 = vand.u32 %v2347, 7
        %v2350 = vsub.s32 0, %v2349
        %v2351 = vsel %vm2345, %v2350, %v2349
        %vm2352 = vcmp.lt.s32.totalorder %v2344, 0
        %v2353 = vsub.s32 0, %v2344
        %v2354 = vsel %vm2352, %v2353, %v2344
        %v2355 = vshrl.u32 %v2354, 3
        %v2356 = vand.u32 %v2354, 7
        %v2357 = vsub.s32 0, %v2356
        %v2358 = vsel %vm2352, %v2357, %v2356
        %vm2359 = vcmp.ne.s32.totalorder %v2351, 0
        %vm2360 = vcmp.ne.s32.totalorder %v2358, 0
        %vm2361 = vcmp.lt.s32.totalorder %v2351, 0
        %vm2362 = vcmp.lt.s32.totalorder %v2358, 0
        %vm2363 = vmand %vm2361, %vm2359
        %vm2364 = vmand %vm2362, %vm2360
        %v2365 = vadd.s32 %v2351, 8
        %v2366 = vadd.s32 %v2358, 8
        %v2367 = vsel %vm2363, %v2365, %v2351
        %v2368 = vsel %vm2364, %v2366, %v2358
        %vm2369 = vcmp.le.s32.totalorder %v2158, %v2367
        %vm2370 = vcmp.le.s32.totalorder %v2158, %v2368
        %v2371 = vld [vmem:[#allocation4] sm:$0xff]
        %v2372 = vld [vmem:[%s2303] sm:$0xf]
        %v2373 = vld [vmem:[%s2312] sm:$0xf]
        %2374 = vmatprep.subr.bf16.mxu0 0
        %2375 = vmatpush1.bf16.xpose.msra.mxu0 %v2372
        %2376 = vmatprep.subr.bf16.mxu0 0
        %2377 = vmatpush1.bf16.xpose.msra.mxu0 0
        %2378 = vmatprep.subr.bf16.mxu0 0
        %2379 = vmatpush1.bf16.xpose.msra.mxu0 0
        %2380 = vmatprep.subr.bf16.mxu0 0
        %2381 = vmatpush1.bf16.xpose.msra.mxu0 0
        %2382 = vmatprep.subr.bf16.mxu0 0
        %2383 = vmatpush1.bf16.xpose.msra.mxu0 0
        %2384 = vmatprep.subr.bf16.mxu0 0
        %2385 = vmatpush1.bf16.xpose.msra.mxu0 0
        %2386 = vmatprep.subr.bf16.mxu0 0
        %2387 = vmatpush1.bf16.xpose.msra.mxu0 0
        %2388 = vmatprep.subr.bf16.mxu0 0
        %2389 = vmatpush1.bf16.xpose.msra.mxu0 0
        %2390 = vmatprep.subr.bf16.mxu0 0
        %2391 = vmatpush1.bf16.xpose.msra.mxu0 0
        %2392 = vmatprep.subr.bf16.mxu0 0
        %2393 = vmatpush1.bf16.xpose.msra.mxu0 0
        %2394 = vmatprep.subr.bf16.mxu0 0
        %2395 = vmatpush1.bf16.xpose.msra.mxu0 0
        %2396 = vmatprep.subr.bf16.mxu0 0
        %2397 = vmatpush1.bf16.xpose.msra.mxu0 0
        %2398 = vmatprep.subr.bf16.mxu0 0
        %2399 = vmatpush1.bf16.xpose.msra.mxu0 0
        %2400 = vmatprep.subr.bf16.mxu0 0
        %2401 = vmatpush1.bf16.xpose.msra.mxu0 0
        %2402 = vmatprep.subr.bf16.mxu0 0
        %2403 = vmatpush1.bf16.xpose.msra.mxu0 0
        %2404 = vmatprep.subr.bf16.mxu0 0
        %2405 = vmatpush1.bf16.xpose.msra.mxu0 0
        %2406 = vmatprep.mubr.bf16.mxu0 0
        %2407 = vmatmul.mubr.bf16.gmra.mrb[0].mxu0 %v2371
        %v2408 = vpop.f32.mrb[0].mxu0
        %v2409 = vadd.f32 0.0, %v2408
        %v2410 = vpop.f32.mrb[0].mxu0
        %v2411 = vpop.f32.mrb[0].mxu0
        %v2412 = vadd.f32 0.0, %v2411
        %v2413 = vpop.f32.mrb[0].mxu0
        %2414 = vdwg.mxu0
        %v2415 = vsel %vm2369, %v2409, -1e+30
        %v2416 = vsel %vm2370, %v2412, -1e+30
        %vm2417 = vcmask 64512
        %v2418 = vsel %vm2417, %v2415, -inf
        %2419 = vmax.xlane.f32.xlu0 %v2418
        %v2420 = vpop.xlane.xlu0 %2419
        %v2421 = vsel %vm2417, %v2416, -inf
        %2422 = vmax.xlane.f32.xlu0 %v2421
        %v2423 = vpop.xlane.xlu0 %2422
        %v2424 = vsub.f32 %v2415, %v2420
        %v2425 = vsub.f32 %v2416, %v2423
        %v2426 = vmul.f32 %v2424, 1.442695
        %v2427 = vpow.pop %v2426
        %v2428 = vmul.f32 %v2425, 1.442695
        %v2429 = vpow.pop %v2428
        %v2430 = vsel %vm2417, %v2427, 0.0
        %2431 = vadd.xlane.f32.xlu0 %v2430
        %v2432 = vpop.xlane.xlu0 %2431
        %v2433 = vsel %vm2417, %v2429, 0.0
        %2434 = vadd.xlane.f32.xlu0 %v2433
        %v2435 = vpop.xlane.xlu0 %2434
        %v2436 = vrcp.pop %v2432
        %v2437 = vrcp.pop %v2435
        %v2438 = vmul.f32 %v2427, %v2436
        %v2439 = vmul.f32 %v2429, %v2437
        %v2440 = vpack.c.bf16 %v2439, %v2438
        %v2442 = vsel %vm2417, %v2440, 0
        %vm2444 = vcmask 1043456
        %v2446 = vsel %vm2444, %v2373, 0
        %2448 = vmatprep.subr.bf16.mxu0 0
        %2449 = vmatpush1.bf16.msra.mxu0 %v2446
        %2450 = vmatprep.subr.bf16.mxu0 0
        %2451 = vmatpush1.bf16.msra.mxu0 0
        %2452 = vmatprep.subr.bf16.mxu0 0
        %2453 = vmatpush1.bf16.msra.mxu0 0
        %2454 = vmatprep.subr.bf16.mxu0 0
        %2455 = vmatpush1.bf16.msra.mxu0 0
        %2456 = vmatprep.subr.bf16.mxu0 0
        %2457 = vmatpush1.bf16.msra.mxu0 0
        %2458 = vmatprep.subr.bf16.mxu0 0
        %2459 = vmatpush1.bf16.msra.mxu0 0
        %2460 = vmatprep.subr.bf16.mxu0 0
        %2461 = vmatpush1.bf16.msra.mxu0 0
        %2462 = vmatprep.subr.bf16.mxu0 0
        %2463 = vmatpush1.bf16.msra.mxu0 0
        %2464 = vmatprep.subr.bf16.mxu0 0
        %2465 = vmatpush1.bf16.msra.mxu0 0
        %2466 = vmatprep.subr.bf16.mxu0 0
        %2467 = vmatpush1.bf16.msra.mxu0 0
        %2468 = vmatprep.subr.bf16.mxu0 0
        %2469 = vmatpush1.bf16.msra.mxu0 0
        %2470 = vmatprep.subr.bf16.mxu0 0
        %2471 = vmatpush1.bf16.msra.mxu0 0
        %2472 = vmatprep.subr.bf16.mxu0 0
        %2473 = vmatpush1.bf16.msra.mxu0 0
        %2474 = vmatprep.subr.bf16.mxu0 0
        %2475 = vmatpush1.bf16.msra.mxu0 0
        %2476 = vmatprep.subr.bf16.mxu0 0
        %2477 = vmatpush1.bf16.msra.mxu0 0
        %2478 = vmatprep.subr.bf16.mxu0 0
        %2479 = vmatpush1.bf16.msra.mxu0 0
        %2480 = vmatprep.mubr.bf16.mxu0 0
        %2481 = vmatmul.mubr.bf16.gmra.mrb[0].mxu0 %v2442
        %v2482 = vpop.f32.mrb[0].mxu0
        %v2483 = vadd.f32 0.0, %v2482
        %v2484 = vpop.f32.mrb[0].mxu0
        %v2485 = vpop.f32.mrb[0].mxu0
        %v2486 = vadd.f32 0.0, %v2485
        %v2487 = vpop.f32.mrb[0].mxu0
        %2488 = vdwg.mxu0
        %v2489 = vpack.c.bf16 %v2483, %v2483
        %2490 = vst [vmem:[#allocation5] sm:$0xf] %v2489
        %v2491 = vpack.c.bf16 %v2486, %v2486
        %2492 = vst [vmem:[#allocation5 + $0x4] sm:$0xf] %v2491
        %v2493 = vld [vmem:[%s2289] sm:$0xff]
        %v2494 = vld [vmem:[%s2303 + $0x4] sm:$0xf]
        %v2495 = vld [vmem:[%s2312 + $0x4] sm:$0xf]
        %2496 = vmatprep.subr.bf16.mxu0 0
        %2497 = vmatpush1.bf16.xpose.msra.mxu0 %v2494
        %2498 = vmatprep.subr.bf16.mxu0 0
        %2499 = vmatpush1.bf16.xpose.msra.mxu0 0
        %2500 = vmatprep.subr.bf16.mxu0 0
        %2501 = vmatpush1.bf16.xpose.msra.mxu0 0
        %2502 = vmatprep.subr.bf16.mxu0 0
        %2503 = vmatpush1.bf16.xpose.msra.mxu0 0
        %2504 = vmatprep.subr.bf16.mxu0 0
        %2505 = vmatpush1.bf16.xpose.msra.mxu0 0
        %2506 = vmatprep.subr.bf16.mxu0 0
        %2507 = vmatpush1.bf16.xpose.msra.mxu0 0
        %2508 = vmatprep.subr.bf16.mxu0 0
        %2509 = vmatpush1.bf16.xpose.msra.mxu0 0
        %2510 = vmatprep.subr.bf16.mxu0 0
        %2511 = vmatpush1.bf16.xpose.msra.mxu0 0
        %2512 = vmatprep.subr.bf16.mxu0 0
        %2513 = vmatpush1.bf16.xpose.msra.mxu0 0
        %2514 = vmatprep.subr.bf16.mxu0 0
        %2515 = vmatpush1.bf16.xpose.msra.mxu0 0
        %2516 = vmatprep.subr.bf16.mxu0 0
        %2517 = vmatpush1.bf16.xpose.msra.mxu0 0
        %2518 = vmatprep.subr.bf16.mxu0 0
        %2519 = vmatpush1.bf16.xpose.msra.mxu0 0
        %2520 = vmatprep.subr.bf16.mxu0 0
        %2521 = vmatpush1.bf16.xpose.msra.mxu0 0
        %2522 = vmatprep.subr.bf16.mxu0 0
        %2523 = vmatpush1.bf16.xpose.msra.mxu0 0
        %2524 = vmatprep.subr.bf16.mxu0 0
        %2525 = vmatpush1.bf16.xpose.msra.mxu0 0
        %2526 = vmatprep.subr.bf16.mxu0 0
        %2527 = vmatpush1.bf16.xpose.msra.mxu0 0
        %2528 = vmatprep.mubr.bf16.mxu0 0
        %2529 = vmatmul.mubr.bf16.gmra.mrb[0].mxu0 %v2493
        %v2530 = vpop.f32.mrb[0].mxu0
        %v2531 = vadd.f32 0.0, %v2530
        %v2532 = vpop.f32.mrb[0].mxu0
        %v2533 = vpop.f32.mrb[0].mxu0
        %v2534 = vadd.f32 0.0, %v2533
        %v2535 = vpop.f32.mrb[0].mxu0
        %2536 = vdwg.mxu0
        %v2537 = vsel %vm2369, %v2531, -1e+30
        %v2538 = vsel %vm2370, %v2534, -1e+30
        %v2539 = vsel %vm2417, %v2537, -inf
        %2540 = vmax.xlane.f32.xlu0 %v2539
        %v2541 = vpop.xlane.xlu0 %2540
        %v2542 = vsel %vm2417, %v2538, -inf
        %2543 = vmax.xlane.f32.xlu0 %v2542
        %v2544 = vpop.xlane.xlu0 %2543
        %v2545 = vsub.f32 %v2537, %v2541
        %v2546 = vsub.f32 %v2538, %v2544
        %v2547 = vmul.f32 %v2545, 1.442695
        %v2548 = vpow.pop %v2547
        %v2549 = vmul.f32 %v2546, 1.442695
        %v2550 = vpow.pop %v2549
        %v2551 = vsel %vm2417, %v2548, 0.0
        %2552 = vadd.xlane.f32.xlu0 %v2551
        %v2553 = vpop.xlane.xlu0 %2552
        %v2554 = vsel %vm2417, %v2550, 0.0
        %2555 = vadd.xlane.f32.xlu0 %v2554
        %v2556 = vpop.xlane.xlu0 %2555
        %v2557 = vrcp.pop %v2553
        %v2558 = vrcp.pop %v2556
        %v2559 = vmul.f32 %v2548, %v2557
        %v2560 = vmul.f32 %v2550, %v2558
        %v2561 = vpack.c.bf16 %v2560, %v2559
        %v2563 = vsel %vm2417, %v2561, 0
        %v2566 = vsel %vm2444, %v2495, 0
        %2568 = vmatprep.subr.bf16.mxu0 0
        %2569 = vmatpush1.bf16.msra.mxu0 %v2566
        %2570 = vmatprep.subr.bf16.mxu0 0
        %2571 = vmatpush1.bf16.msra.mxu0 0
        %2572 = vmatprep.subr.bf16.mxu0 0
        %2573 = vmatpush1.bf16.msra.mxu0 0
        %2574 = vmatprep.subr.bf16.mxu0 0
        %2575 = vmatpush1.bf16.msra.mxu0 0
        %2576 = vmatprep.subr.bf16.mxu0 0
        %2577 = vmatpush1.bf16.msra.mxu0 0
        %2578 = vmatprep.subr.bf16.mxu0 0
        %2579 = vmatpush1.bf16.msra.mxu0 0
        %2580 = vmatprep.subr.bf16.mxu0 0
        %2581 = vmatpush1.bf16.msra.mxu0 0
        %2582 = vmatprep.subr.bf16.mxu0 0
        %2583 = vmatpush1.bf16.msra.mxu0 0
        %2584 = vmatprep.subr.bf16.mxu0 0
        %2585 = vmatpush1.bf16.msra.mxu0 0
        %2586 = vmatprep.subr.bf16.mxu0 0
        %2587 = vmatpush1.bf16.msra.mxu0 0
        %2588 = vmatprep.subr.bf16.mxu0 0
        %2589 = vmatpush1.bf16.msra.mxu0 0
        %2590 = vmatprep.subr.bf16.mxu0 0
        %2591 = vmatpush1.bf16.msra.mxu0 0
        %2592 = vmatprep.subr.bf16.mxu0 0
        %2593 = vmatpush1.bf16.msra.mxu0 0
        %2594 = vmatprep.subr.bf16.mxu0 0
        %2595 = vmatpush1.bf16.msra.mxu0 0
        %2596 = vmatprep.subr.bf16.mxu0 0
        %2597 = vmatpush1.bf16.msra.mxu0 0
        %2598 = vmatprep.subr.bf16.mxu0 0
        %2599 = vmatpush1.bf16.msra.mxu0 0
        %2600 = vmatprep.mubr.bf16.mxu0 0
        %2601 = vmatmul.mubr.bf16.gmra.mrb[0].mxu0 %v2563
        %v2602 = vpop.f32.mrb[0].mxu0
        %v2603 = vadd.f32 0.0, %v2602
        %v2604 = vpop.f32.mrb[0].mxu0
        %v2605 = vpop.f32.mrb[0].mxu0
        %v2606 = vadd.f32 0.0, %v2605
        %v2607 = vpop.f32.mrb[0].mxu0
        %2608 = vdwg.mxu0
        %v2609 = vpack.c.bf16 %v2603, %v2603
        %2610 = vst [vmem:[#allocation5 + $0x8] sm:$0xf] %v2609
        %v2611 = vpack.c.bf16 %v2606, %v2606
        %2612 = vst [vmem:[#allocation5 + $0xc] sm:$0xf] %v2611
        %v2613 = vld [vmem:[#allocation5] sm:$0xff]
        %v2614 = vld [vmem:[#allocation5 + $0x8] sm:$0xff]
        %v2615 = vld [vmem:[#allocation11] sm:$0xff]
        %v2616 = vld [vmem:[#allocation11 + $0x8] sm:$0xff]
        %v2617 = vld [vmem:[#allocation11 + $0x10] sm:$0xff]
        %v2618 = vld [vmem:[#allocation11 + $0x18] sm:$0xff]
        %v2619 = vld [vmem:[#allocation11 + $0x20] sm:$0xff]
        %v2620 = vld [vmem:[#allocation11 + $0x28] sm:$0xff]
        %v2621 = vld [vmem:[#allocation11 + $0x30] sm:$0xff]
        %v2622 = vld [vmem:[#allocation11 + $0x38] sm:$0xff]
        %v2623 = vld [vmem:[#allocation11 + $0x40] sm:$0xff]
        %v2624 = vld [vmem:[#allocation11 + $0x48] sm:$0xff]
        %v2625 = vld [vmem:[#allocation11 + $0x50] sm:$0xff]
        %v2626 = vld [vmem:[#allocation11 + $0x58] sm:$0xff]
        %v2627 = vld [vmem:[#allocation11 + $0x60] sm:$0xff]
        %v2628 = vld [vmem:[#allocation11 + $0x68] sm:$0xff]
        %v2629 = vld [vmem:[#allocation11 + $0x70] sm:$0xff]
        %v2630 = vld [vmem:[#allocation11 + $0x78] sm:$0xff]
        %v2631 = vld [vmem:[#allocation11 + $0x80] sm:$0xff]
        %v2632 = vld [vmem:[#allocation11 + $0x88] sm:$0xff]
        %v2633 = vld [vmem:[#allocation11 + $0x90] sm:$0xff]
        %v2634 = vld [vmem:[#allocation11 + $0x98] sm:$0xff]
        %v2635 = vld [vmem:[#allocation11 + $0xa0] sm:$0xff]
        %v2636 = vld [vmem:[#allocation11 + $0xa8] sm:$0xff]
        %v2637 = vld [vmem:[#allocation11 + $0xb0] sm:$0xff]
        %v2638 = vld [vmem:[#allocation11 + $0xb8] sm:$0xff]
        %v2639 = vld [vmem:[#allocation11 + $0xc0] sm:$0xff]
        %v2640 = vld [vmem:[#allocation11 + $0xc8] sm:$0xff]
        %v2641 = vld [vmem:[#allocation11 + $0xd0] sm:$0xff]
        %v2642 = vld [vmem:[#allocation11 + $0xd8] sm:$0xff]
        %v2643 = vld [vmem:[#allocation11 + $0xe0] sm:$0xff]
        %v2644 = vld [vmem:[#allocation11 + $0xe8] sm:$0xff]
        %v2645 = vld [vmem:[#allocation11 + $0xf0] sm:$0xff]
        %v2646 = vld [vmem:[#allocation11 + $0xf8] sm:$0xff]
        %v2647 = vld [vmem:[#allocation11 + $0x100] sm:$0xff]
        %v2648 = vld [vmem:[#allocation11 + $0x108] sm:$0xff]
        %v2649 = vld [vmem:[#allocation11 + $0x110] sm:$0xff]
        %v2650 = vld [vmem:[#allocation11 + $0x118] sm:$0xff]
        %v2651 = vld [vmem:[#allocation11 + $0x120] sm:$0xff]
        %v2652 = vld [vmem:[#allocation11 + $0x128] sm:$0xff]
        %v2653 = vld [vmem:[#allocation11 + $0x130] sm:$0xff]
        %v2654 = vld [vmem:[#allocation11 + $0x138] sm:$0xff]
        %v2655 = vld [vmem:[#allocation11 + $0x140] sm:$0xff]
        %v2656 = vld [vmem:[#allocation11 + $0x148] sm:$0xff]
        %v2657 = vld [vmem:[#allocation11 + $0x150] sm:$0xff]
        %v2658 = vld [vmem:[#allocation11 + $0x158] sm:$0xff]
        %v2659 = vld [vmem:[#allocation11 + $0x160] sm:$0xff]
        %v2660 = vld [vmem:[#allocation11 + $0x168] sm:$0xff]
        %v2661 = vld [vmem:[#allocation11 + $0x170] sm:$0xff]
        %v2662 = vld [vmem:[#allocation11 + $0x178] sm:$0xff]
        %v2663 = vld [vmem:[#allocation11 + $0x180] sm:$0xff]
        %v2664 = vld [vmem:[#allocation11 + $0x188] sm:$0xff]
        %v2665 = vld [vmem:[#allocation11 + $0x190] sm:$0xff]
        %v2666 = vld [vmem:[#allocation11 + $0x198] sm:$0xff]
        %v2667 = vld [vmem:[#allocation11 + $0x1a0] sm:$0xff]
        %v2668 = vld [vmem:[#allocation11 + $0x1a8] sm:$0xff]
        %v2669 = vld [vmem:[#allocation11 + $0x1b0] sm:$0xff]
        %v2670 = vld [vmem:[#allocation11 + $0x1b8] sm:$0xff]
        %v2671 = vld [vmem:[#allocation11 + $0x1c0] sm:$0xff]
        %v2672 = vld [vmem:[#allocation11 + $0x1c8] sm:$0xff]
        %v2673 = vld [vmem:[#allocation11 + $0x1d0] sm:$0xff]
        %v2674 = vld [vmem:[#allocation11 + $0x1d8] sm:$0xff]
        %v2675 = vld [vmem:[#allocation11 + $0x1e0] sm:$0xff]
        %v2676 = vld [vmem:[#allocation11 + $0x1e8] sm:$0xff]
        %v2677 = vld [vmem:[#allocation11 + $0x1f0] sm:$0xff]
        %v2678 = vld [vmem:[#allocation11 + $0x1f8] sm:$0xff]
        %v2679 = vld [vmem:[#allocation11 + $0x200] sm:$0xff]
        %v2680 = vld [vmem:[#allocation11 + $0x208] sm:$0xff]
        %v2681 = vld [vmem:[#allocation11 + $0x210] sm:$0xff]
        %v2682 = vld [vmem:[#allocation11 + $0x218] sm:$0xff]
        %v2683 = vld [vmem:[#allocation11 + $0x220] sm:$0xff]
        %v2684 = vld [vmem:[#allocation11 + $0x228] sm:$0xff]
        %v2685 = vld [vmem:[#allocation11 + $0x230] sm:$0xff]
        %v2686 = vld [vmem:[#allocation11 + $0x238] sm:$0xff]
        %v2687 = vld [vmem:[#allocation11 + $0x240] sm:$0xff]
        %v2688 = vld [vmem:[#allocation11 + $0x248] sm:$0xff]
        %v2689 = vld [vmem:[#allocation11 + $0x250] sm:$0xff]
        %v2690 = vld [vmem:[#allocation11 + $0x258] sm:$0xff]
        %v2691 = vld [vmem:[#allocation11 + $0x260] sm:$0xff]
        %v2692 = vld [vmem:[#allocation11 + $0x268] sm:$0xff]
        %v2693 = vld [vmem:[#allocation11 + $0x270] sm:$0xff]
        %v2694 = vld [vmem:[#allocation11 + $0x278] sm:$0xff]
        %v2695 = vld [vmem:[#allocation11 + $0x280] sm:$0xff]
        %v2696 = vld [vmem:[#allocation11 + $0x288] sm:$0xff]
        %v2697 = vld [vmem:[#allocation11 + $0x290] sm:$0xff]
        %v2698 = vld [vmem:[#allocation11 + $0x298] sm:$0xff]
        %v2699 = vld [vmem:[#allocation11 + $0x2a0] sm:$0xff]
        %v2700 = vld [vmem:[#allocation11 + $0x2a8] sm:$0xff]
        %v2701 = vld [vmem:[#allocation11 + $0x2b0] sm:$0xff]
        %v2702 = vld [vmem:[#allocation11 + $0x2b8] sm:$0xff]
        %v2703 = vld [vmem:[#allocation11 + $0x2c0] sm:$0xff]
        %v2704 = vld [vmem:[#allocation11 + $0x2c8] sm:$0xff]
        %v2705 = vld [vmem:[#allocation11 + $0x2d0] sm:$0xff]
        %v2706 = vld [vmem:[#allocation11 + $0x2d8] sm:$0xff]
        %v2707 = vld [vmem:[#allocation11 + $0x2e0] sm:$0xff]
        %v2708 = vld [vmem:[#allocation11 + $0x2e8] sm:$0xff]
        %v2709 = vld [vmem:[#allocation11 + $0x2f0] sm:$0xff]
        %v2710 = vld [vmem:[#allocation11 + $0x2f8] sm:$0xff]
        %v2711 = vld [vmem:[#allocation11 + $0x300] sm:$0xff]
        %v2712 = vld [vmem:[#allocation11 + $0x308] sm:$0xff]
        %v2713 = vld [vmem:[#allocation11 + $0x310] sm:$0xff]
        %v2714 = vld [vmem:[#allocation11 + $0x318] sm:$0xff]
        %v2715 = vld [vmem:[#allocation11 + $0x320] sm:$0xff]
        %v2716 = vld [vmem:[#allocation11 + $0x328] sm:$0xff]
        %v2717 = vld [vmem:[#allocation11 + $0x330] sm:$0xff]
        %v2718 = vld [vmem:[#allocation11 + $0x338] sm:$0xff]
        %v2719 = vld [vmem:[#allocation11 + $0x340] sm:$0xff]
        %v2720 = vld [vmem:[#allocation11 + $0x348] sm:$0xff]
        %v2721 = vld [vmem:[#allocation11 + $0x350] sm:$0xff]
        %v2722 = vld [vmem:[#allocation11 + $0x358] sm:$0xff]
        %v2723 = vld [vmem:[#allocation11 + $0x360] sm:$0xff]
        %v2724 = vld [vmem:[#allocation11 + $0x368] sm:$0xff]
        %v2725 = vld [vmem:[#allocation11 + $0x370] sm:$0xff]
        %v2726 = vld [vmem:[#allocation11 + $0x378] sm:$0xff]
        %v2727 = vld [vmem:[#allocation11 + $0x380] sm:$0xff]
        %v2728 = vld [vmem:[#allocation11 + $0x388] sm:$0xff]
        %v2729 = vld [vmem:[#allocation11 + $0x390] sm:$0xff]
        %v2730 = vld [vmem:[#allocation11 + $0x398] sm:$0xff]
        %v2731 = vld [vmem:[#allocation11 + $0x3a0] sm:$0xff]
        %v2732 = vld [vmem:[#allocation11 + $0x3a8] sm:$0xff]
        %v2733 = vld [vmem:[#allocation11 + $0x3b0] sm:$0xff]
        %v2734 = vld [vmem:[#allocation11 + $0x3b8] sm:$0xff]
        %v2735 = vld [vmem:[#allocation11 + $0x3c0] sm:$0xff]
        %v2736 = vld [vmem:[#allocation11 + $0x3c8] sm:$0xff]
        %v2737 = vld [vmem:[#allocation11 + $0x3d0] sm:$0xff]
        %v2738 = vld [vmem:[#allocation11 + $0x3d8] sm:$0xff]
        %v2739 = vld [vmem:[#allocation11 + $0x3e0] sm:$0xff]
        %v2740 = vld [vmem:[#allocation11 + $0x3e8] sm:$0xff]
        %v2741 = vld [vmem:[#allocation11 + $0x3f0] sm:$0xff]
        %v2742 = vld [vmem:[#allocation11 + $0x3f8] sm:$0xff]
        %v2745 = vunpack.c.l.b16 %v2613
        %v2746 = vunpack.c.h.b16 %v2613
        %v2747 = vunpack.c.l.b16 %v2614
        %v2748 = vunpack.c.h.b16 %v2614
        %v2749 = vpack.c.b16 %v2745, %v2745
        %v2750 = vpack.c.b16 %v2746, %v2746
        %v2751 = vpack.c.b16 %v2747, %v2747
        %v2752 = vpack.c.b16 %v2748, %v2748
        %v2885 = vunpack.c.l.b16 %v2615
        %v2886 = vunpack.c.h.b16 %v2615
        %v2887 = vunpack.c.l.b16 %v2616
        %v2888 = vunpack.c.h.b16 %v2616
        %v2889 = vunpack.c.l.b16 %v2617
        %v2890 = vunpack.c.h.b16 %v2617
        %v2891 = vunpack.c.l.b16 %v2618
        %v2892 = vunpack.c.h.b16 %v2618
        %v2893 = vunpack.c.l.b16 %v2619
        %v2894 = vunpack.c.h.b16 %v2619
        %v2895 = vunpack.c.l.b16 %v2620
        %v2896 = vunpack.c.h.b16 %v2620
        %v2897 = vunpack.c.l.b16 %v2621
        %v2898 = vunpack.c.h.b16 %v2621
        %v2899 = vunpack.c.l.b16 %v2622
        %v2900 = vunpack.c.h.b16 %v2622
        %v2901 = vunpack.c.l.b16 %v2623
        %v2902 = vunpack.c.h.b16 %v2623
        %v2903 = vunpack.c.l.b16 %v2624
        %v2904 = vunpack.c.h.b16 %v2624
        %v2905 = vunpack.c.l.b16 %v2625
        %v2906 = vunpack.c.h.b16 %v2625
        %v2907 = vunpack.c.l.b16 %v2626
        %v2908 = vunpack.c.h.b16 %v2626
        %v2909 = vunpack.c.l.b16 %v2627
        %v2910 = vunpack.c.h.b16 %v2627
        %v2911 = vunpack.c.l.b16 %v2628
        %v2912 = vunpack.c.h.b16 %v2628
        %v2913 = vunpack.c.l.b16 %v2629
        %v2914 = vunpack.c.h.b16 %v2629
        %v2915 = vunpack.c.l.b16 %v2630
        %v2916 = vunpack.c.h.b16 %v2630
        %v2917 = vunpack.c.l.b16 %v2631
        %v2918 = vunpack.c.h.b16 %v2631
        %v2919 = vunpack.c.l.b16 %v2632
        %v2920 = vunpack.c.h.b16 %v2632
        %v2921 = vunpack.c.l.b16 %v2633
        %v2922 = vunpack.c.h.b16 %v2633
        %v2923 = vunpack.c.l.b16 %v2634
        %v2924 = vunpack.c.h.b16 %v2634
        %v2925 = vunpack.c.l.b16 %v2635
        %v2926 = vunpack.c.h.b16 %v2635
        %v2927 = vunpack.c.l.b16 %v2636
        %v2928 = vunpack.c.h.b16 %v2636
        %v2929 = vunpack.c.l.b16 %v2637
        %v2930 = vunpack.c.h.b16 %v2637
        %v2931 = vunpack.c.l.b16 %v2638
        %v2932 = vunpack.c.h.b16 %v2638
        %v2933 = vunpack.c.l.b16 %v2639
        %v2934 = vunpack.c.h.b16 %v2639
        %v2935 = vunpack.c.l.b16 %v2640
        %v2936 = vunpack.c.h.b16 %v2640
        %v2937 = vunpack.c.l.b16 %v2641
        %v2938 = vunpack.c.h.b16 %v2641
        %v2939 = vunpack.c.l.b16 %v2642
        %v2940 = vunpack.c.h.b16 %v2642
        %v2941 = vunpack.c.l.b16 %v2643
        %v2942 = vunpack.c.h.b16 %v2643
        %v2943 = vunpack.c.l.b16 %v2644
        %v2944 = vunpack.c.h.b16 %v2644
        %v2945 = vunpack.c.l.b16 %v2645
        %v2946 = vunpack.c.h.b16 %v2645
        %v2947 = vunpack.c.l.b16 %v2646
        %v2948 = vunpack.c.h.b16 %v2646
        %v2949 = vunpack.c.l.b16 %v2647
        %v2950 = vunpack.c.h.b16 %v2647
        %v2951 = vunpack.c.l.b16 %v2648
        %v2952 = vunpack.c.h.b16 %v2648
        %v2953 = vunpack.c.l.b16 %v2649
        %v2954 = vunpack.c.h.b16 %v2649
        %v2955 = vunpack.c.l.b16 %v2650
        %v2956 = vunpack.c.h.b16 %v2650
        %v2957 = vunpack.c.l.b16 %v2651
        %v2958 = vunpack.c.h.b16 %v2651
        %v2959 = vunpack.c.l.b16 %v2652
        %v2960 = vunpack.c.h.b16 %v2652
        %v2961 = vunpack.c.l.b16 %v2653
        %v2962 = vunpack.c.h.b16 %v2653
        %v2963 = vunpack.c.l.b16 %v2654
        %v2964 = vunpack.c.h.b16 %v2654
        %v2965 = vunpack.c.l.b16 %v2655
        %v2966 = vunpack.c.h.b16 %v2655
        %v2967 = vunpack.c.l.b16 %v2656
        %v2968 = vunpack.c.h.b16 %v2656
        %v2969 = vunpack.c.l.b16 %v2657
        %v2970 = vunpack.c.h.b16 %v2657
        %v2971 = vunpack.c.l.b16 %v2658
        %v2972 = vunpack.c.h.b16 %v2658
        %v2973 = vunpack.c.l.b16 %v2659
        %v2974 = vunpack.c.h.b16 %v2659
        %v2975 = vunpack.c.l.b16 %v2660
        %v2976 = vunpack.c.h.b16 %v2660
        %v2977 = vunpack.c.l.b16 %v2661
        %v2978 = vunpack.c.h.b16 %v2661
        %v2979 = vunpack.c.l.b16 %v2662
        %v2980 = vunpack.c.h.b16 %v2662
        %v2981 = vunpack.c.l.b16 %v2663
        %v2982 = vunpack.c.h.b16 %v2663
        %v2983 = vunpack.c.l.b16 %v2664
        %v2984 = vunpack.c.h.b16 %v2664
        %v2985 = vunpack.c.l.b16 %v2665
        %v2986 = vunpack.c.h.b16 %v2665
        %v2987 = vunpack.c.l.b16 %v2666
        %v2988 = vunpack.c.h.b16 %v2666
        %v2989 = vunpack.c.l.b16 %v2667
        %v2990 = vunpack.c.h.b16 %v2667
        %v2991 = vunpack.c.l.b16 %v2668
        %v2992 = vunpack.c.h.b16 %v2668
        %v2993 = vunpack.c.l.b16 %v2669
        %v2994 = vunpack.c.h.b16 %v2669
        %v2995 = vunpack.c.l.b16 %v2670
        %v2996 = vunpack.c.h.b16 %v2670
        %v2997 = vunpack.c.l.b16 %v2671
        %v2998 = vunpack.c.h.b16 %v2671
        %v2999 = vunpack.c.l.b16 %v2672
        %v3000 = vunpack.c.h.b16 %v2672
        %v3001 = vunpack.c.l.b16 %v2673
        %v3002 = vunpack.c.h.b16 %v2673
        %v3003 = vunpack.c.l.b16 %v2674
        %v3004 = vunpack.c.h.b16 %v2674
        %v3005 = vunpack.c.l.b16 %v2675
        %v3006 = vunpack.c.h.b16 %v2675
        %v3007 = vunpack.c.l.b16 %v2676
        %v3008 = vunpack.c.h.b16 %v2676
        %v3009 = vunpack.c.l.b16 %v2677
        %v3010 = vunpack.c.h.b16 %v2677
        %v3011 = vunpack.c.l.b16 %v2678
        %v3012 = vunpack.c.h.b16 %v2678
        %v3013 = vunpack.c.l.b16 %v2679
        %v3014 = vunpack.c.h.b16 %v2679
        %v3015 = vunpack.c.l.b16 %v2680
        %v3016 = vunpack.c.h.b16 %v2680
        %v3017 = vunpack.c.l.b16 %v2681
        %v3018 = vunpack.c.h.b16 %v2681
        %v3019 = vunpack.c.l.b16 %v2682
        %v3020 = vunpack.c.h.b16 %v2682
        %v3021 = vunpack.c.l.b16 %v2683
        %v3022 = vunpack.c.h.b16 %v2683
        %v3023 = vunpack.c.l.b16 %v2684
        %v3024 = vunpack.c.h.b16 %v2684
        %v3025 = vunpack.c.l.b16 %v2685
        %v3026 = vunpack.c.h.b16 %v2685
        %v3027 = vunpack.c.l.b16 %v2686
        %v3028 = vunpack.c.h.b16 %v2686
        %v3029 = vunpack.c.l.b16 %v2687
        %v3030 = vunpack.c.h.b16 %v2687
        %v3031 = vunpack.c.l.b16 %v2688
        %v3032 = vunpack.c.h.b16 %v2688
        %v3033 = vunpack.c.l.b16 %v2689
        %v3034 = vunpack.c.h.b16 %v2689
        %v3035 = vunpack.c.l.b16 %v2690
        %v3036 = vunpack.c.h.b16 %v2690
        %v3037 = vunpack.c.l.b16 %v2691
        %v3038 = vunpack.c.h.b16 %v2691
        %v3039 = vunpack.c.l.b16 %v2692
        %v3040 = vunpack.c.h.b16 %v2692
        %v3041 = vunpack.c.l.b16 %v2693
        %v3042 = vunpack.c.h.b16 %v2693
        %v3043 = vunpack.c.l.b16 %v2694
        %v3044 = vunpack.c.h.b16 %v2694
        %v3045 = vunpack.c.l.b16 %v2695
        %v3046 = vunpack.c.h.b16 %v2695
        %v3047 = vunpack.c.l.b16 %v2696
        %v3048 = vunpack.c.h.b16 %v2696
        %v3049 = vunpack.c.l.b16 %v2697
        %v3050 = vunpack.c.h.b16 %v2697
        %v3051 = vunpack.c.l.b16 %v2698
        %v3052 = vunpack.c.h.b16 %v2698
        %v3053 = vunpack.c.l.b16 %v2699
        %v3054 = vunpack.c.h.b16 %v2699
        %v3055 = vunpack.c.l.b16 %v2700
        %v3056 = vunpack.c.h.b16 %v2700
        %v3057 = vunpack.c.l.b16 %v2701
        %v3058 = vunpack.c.h.b16 %v2701
        %v3059 = vunpack.c.l.b16 %v2702
        %v3060 = vunpack.c.h.b16 %v2702
        %v3061 = vunpack.c.l.b16 %v2703
        %v3062 = vunpack.c.h.b16 %v2703
        %v3063 = vunpack.c.l.b16 %v2704
        %v3064 = vunpack.c.h.b16 %v2704
        %v3065 = vunpack.c.l.b16 %v2705
        %v3066 = vunpack.c.h.b16 %v2705
        %v3067 = vunpack.c.l.b16 %v2706
        %v3068 = vunpack.c.h.b16 %v2706
        %v3069 = vunpack.c.l.b16 %v2707
        %v3070 = vunpack.c.h.b16 %v2707
        %v3071 = vunpack.c.l.b16 %v2708
        %v3072 = vunpack.c.h.b16 %v2708
        %v3073 = vunpack.c.l.b16 %v2709
        %v3074 = vunpack.c.h.b16 %v2709
        %v3075 = vunpack.c.l.b16 %v2710
        %v3076 = vunpack.c.h.b16 %v2710
        %v3077 = vunpack.c.l.b16 %v2711
        %v3078 = vunpack.c.h.b16 %v2711
        %v3079 = vunpack.c.l.b16 %v2712
        %v3080 = vunpack.c.h.b16 %v2712
        %v3081 = vunpack.c.l.b16 %v2713
        %v3082 = vunpack.c.h.b16 %v2713
        %v3083 = vunpack.c.l.b16 %v2714
        %v3084 = vunpack.c.h.b16 %v2714
        %v3085 = vunpack.c.l.b16 %v2715
        %v3086 = vunpack.c.h.b16 %v2715
        %v3087 = vunpack.c.l.b16 %v2716
        %v3088 = vunpack.c.h.b16 %v2716
        %v3089 = vunpack.c.l.b16 %v2717
        %v3090 = vunpack.c.h.b16 %v2717
        %v3091 = vunpack.c.l.b16 %v2718
        %v3092 = vunpack.c.h.b16 %v2718
        %v3093 = vunpack.c.l.b16 %v2719
        %v3094 = vunpack.c.h.b16 %v2719
        %v3095 = vunpack.c.l.b16 %v2720
        %v3096 = vunpack.c.h.b16 %v2720
        %v3097 = vunpack.c.l.b16 %v2721
        %v3098 = vunpack.c.h.b16 %v2721
        %v3099 = vunpack.c.l.b16 %v2722
        %v3100 = vunpack.c.h.b16 %v2722
        %v3101 = vunpack.c.l.b16 %v2723
        %v3102 = vunpack.c.h.b16 %v2723
        %v3103 = vunpack.c.l.b16 %v2724
        %v3104 = vunpack.c.h.b16 %v2724
        %v3105 = vunpack.c.l.b16 %v2725
        %v3106 = vunpack.c.h.b16 %v2725
        %v3107 = vunpack.c.l.b16 %v2726
        %v3108 = vunpack.c.h.b16 %v2726
        %v3109 = vunpack.c.l.b16 %v2727
        %v3110 = vunpack.c.h.b16 %v2727
        %v3111 = vunpack.c.l.b16 %v2728
        %v3112 = vunpack.c.h.b16 %v2728
        %v3113 = vunpack.c.l.b16 %v2729
        %v3114 = vunpack.c.h.b16 %v2729
        %v3115 = vunpack.c.l.b16 %v2730
        %v3116 = vunpack.c.h.b16 %v2730
        %v3117 = vunpack.c.l.b16 %v2731
        %v3118 = vunpack.c.h.b16 %v2731
        %v3119 = vunpack.c.l.b16 %v2732
        %v3120 = vunpack.c.h.b16 %v2732
        %v3121 = vunpack.c.l.b16 %v2733
        %v3122 = vunpack.c.h.b16 %v2733
        %v3123 = vunpack.c.l.b16 %v2734
        %v3124 = vunpack.c.h.b16 %v2734
        %v3125 = vunpack.c.l.b16 %v2735
        %v3126 = vunpack.c.h.b16 %v2735
        %v3127 = vunpack.c.l.b16 %v2736
        %v3128 = vunpack.c.h.b16 %v2736
        %v3129 = vunpack.c.l.b16 %v2737
        %v3130 = vunpack.c.h.b16 %v2737
        %v3131 = vunpack.c.l.b16 %v2738
        %v3132 = vunpack.c.h.b16 %v2738
        %v3133 = vunpack.c.l.b16 %v2739
        %v3134 = vunpack.c.h.b16 %v2739
        %v3135 = vunpack.c.l.b16 %v2740
        %v3136 = vunpack.c.h.b16 %v2740
        %v3137 = vunpack.c.l.b16 %v2741
        %v3138 = vunpack.c.h.b16 %v2741
        %v3139 = vunpack.c.l.b16 %v2742
        %v3140 = vunpack.c.h.b16 %v2742
        %v3141 = vpack.c.b16 %v2889, %v2885
        %v3142 = vpack.c.b16 %v2890, %v2886
        %v3143 = vpack.c.b16 %v2891, %v2887
        %v3144 = vpack.c.b16 %v2892, %v2888
        %v3145 = vpack.c.b16 %v2897, %v2893
        %v3146 = vpack.c.b16 %v2898, %v2894
        %v3147 = vpack.c.b16 %v2899, %v2895
        %v3148 = vpack.c.b16 %v2900, %v2896
        %v3149 = vpack.c.b16 %v2905, %v2901
        %v3150 = vpack.c.b16 %v2906, %v2902
        %v3151 = vpack.c.b16 %v2907, %v2903
        %v3152 = vpack.c.b16 %v2908, %v2904
        %v3153 = vpack.c.b16 %v2913, %v2909
        %v3154 = vpack.c.b16 %v2914, %v2910
        %v3155 = vpack.c.b16 %v2915, %v2911
        %v3156 = vpack.c.b16 %v2916, %v2912
        %v3157 = vpack.c.b16 %v2921, %v2917
        %v3158 = vpack.c.b16 %v2922, %v2918
        %v3159 = vpack.c.b16 %v2923, %v2919
        %v3160 = vpack.c.b16 %v2924, %v2920
        %v3161 = vpack.c.b16 %v2929, %v2925
        %v3162 = vpack.c.b16 %v2930, %v2926
        %v3163 = vpack.c.b16 %v2931, %v2927
        %v3164 = vpack.c.b16 %v2932, %v2928
        %v3165 = vpack.c.b16 %v2937, %v2933
        %v3166 = vpack.c.b16 %v2938, %v2934
        %v3167 = vpack.c.b16 %v2939, %v2935
        %v3168 = vpack.c.b16 %v2940, %v2936
        %v3169 = vpack.c.b16 %v2945, %v2941
        %v3170 = vpack.c.b16 %v2946, %v2942
        %v3171 = vpack.c.b16 %v2947, %v2943
        %v3172 = vpack.c.b16 %v2948, %v2944
        %v3173 = vpack.c.b16 %v2953, %v2949
        %v3174 = vpack.c.b16 %v2954, %v2950
        %v3175 = vpack.c.b16 %v2955, %v2951
        %v3176 = vpack.c.b16 %v2956, %v2952
        %v3177 = vpack.c.b16 %v2961, %v2957
        %v3178 = vpack.c.b16 %v2962, %v2958
        %v3179 = vpack.c.b16 %v2963, %v2959
        %v3180 = vpack.c.b16 %v2964, %v2960
        %v3181 = vpack.c.b16 %v2969, %v2965
        %v3182 = vpack.c.b16 %v2970, %v2966
        %v3183 = vpack.c.b16 %v2971, %v2967
        %v3184 = vpack.c.b16 %v2972, %v2968
        %v3185 = vpack.c.b16 %v2977, %v2973
        %v3186 = vpack.c.b16 %v2978, %v2974
        %v3187 = vpack.c.b16 %v2979, %v2975
        %v3188 = vpack.c.b16 %v2980, %v2976
        %v3189 = vpack.c.b16 %v2985, %v2981
        %v3190 = vpack.c.b16 %v2986, %v2982
        %v3191 = vpack.c.b16 %v2987, %v2983
        %v3192 = vpack.c.b16 %v2988, %v2984
        %v3193 = vpack.c.b16 %v2993, %v2989
        %v3194 = vpack.c.b16 %v2994, %v2990
        %v3195 = vpack.c.b16 %v2995, %v2991
        %v3196 = vpack.c.b16 %v2996, %v2992
        %v3197 = vpack.c.b16 %v3001, %v2997
        %v3198 = vpack.c.b16 %v3002, %v2998
        %v3199 = vpack.c.b16 %v3003, %v2999
        %v3200 = vpack.c.b16 %v3004, %v3000
        %v3201 = vpack.c.b16 %v3009, %v3005
        %v3202 = vpack.c.b16 %v3010, %v3006
        %v3203 = vpack.c.b16 %v3011, %v3007
        %v3204 = vpack.c.b16 %v3012, %v3008
        %v3205 = vpack.c.b16 %v3017, %v3013
        %v3206 = vpack.c.b16 %v3018, %v3014
        %v3207 = vpack.c.b16 %v3019, %v3015
        %v3208 = vpack.c.b16 %v3020, %v3016
        %v3209 = vpack.c.b16 %v3025, %v3021
        %v3210 = vpack.c.b16 %v3026, %v3022
        %v3211 = vpack.c.b16 %v3027, %v3023
        %v3212 = vpack.c.b16 %v3028, %v3024
        %v3213 = vpack.c.b16 %v3033, %v3029
        %v3214 = vpack.c.b16 %v3034, %v3030
        %v3215 = vpack.c.b16 %v3035, %v3031
        %v3216 = vpack.c.b16 %v3036, %v3032
        %v3217 = vpack.c.b16 %v3041, %v3037
        %v3218 = vpack.c.b16 %v3042, %v3038
        %v3219 = vpack.c.b16 %v3043, %v3039
        %v3220 = vpack.c.b16 %v3044, %v3040
        %v3221 = vpack.c.b16 %v3049, %v3045
        %v3222 = vpack.c.b16 %v3050, %v3046
        %v3223 = vpack.c.b16 %v3051, %v3047
        %v3224 = vpack.c.b16 %v3052, %v3048
        %v3225 = vpack.c.b16 %v3057, %v3053
        %v3226 = vpack.c.b16 %v3058, %v3054
        %v3227 = vpack.c.b16 %v3059, %v3055
        %v3228 = vpack.c.b16 %v3060, %v3056
        %v3229 = vpack.c.b16 %v3065, %v3061
        %v3230 = vpack.c.b16 %v3066, %v3062
        %v3231 = vpack.c.b16 %v3067, %v3063
        %v3232 = vpack.c.b16 %v3068, %v3064
        %v3233 = vpack.c.b16 %v3073, %v3069
        %v3234 = vpack.c.b16 %v3074, %v3070
        %v3235 = vpack.c.b16 %v3075, %v3071
        %v3236 = vpack.c.b16 %v3076, %v3072
        %v3237 = vpack.c.b16 %v3081, %v3077
        %v3238 = vpack.c.b16 %v3082, %v3078
        %v3239 = vpack.c.b16 %v3083, %v3079
        %v3240 = vpack.c.b16 %v3084, %v3080
        %v3241 = vpack.c.b16 %v3089, %v3085
        %v3242 = vpack.c.b16 %v3090, %v3086
        %v3243 = vpack.c.b16 %v3091, %v3087
        %v3244 = vpack.c.b16 %v3092, %v3088
        %v3245 = vpack.c.b16 %v3097, %v3093
        %v3246 = vpack.c.b16 %v3098, %v3094
        %v3247 = vpack.c.b16 %v3099, %v3095
        %v3248 = vpack.c.b16 %v3100, %v3096
        %v3249 = vpack.c.b16 %v3105, %v3101
        %v3250 = vpack.c.b16 %v3106, %v3102
        %v3251 = vpack.c.b16 %v3107, %v3103
        %v3252 = vpack.c.b16 %v3108, %v3104
        %v3253 = vpack.c.b16 %v3113, %v3109
        %v3254 = vpack.c.b16 %v3114, %v3110
        %v3255 = vpack.c.b16 %v3115, %v3111
        %v3256 = vpack.c.b16 %v3116, %v3112
        %v3257 = vpack.c.b16 %v3121, %v3117
        %v3258 = vpack.c.b16 %v3122, %v3118
        %v3259 = vpack.c.b16 %v3123, %v3119
        %v3260 = vpack.c.b16 %v3124, %v3120
        %v3261 = vpack.c.b16 %v3129, %v3125
        %v3262 = vpack.c.b16 %v3130, %v3126
        %v3263 = vpack.c.b16 %v3131, %v3127
        %v3264 = vpack.c.b16 %v3132, %v3128
        %v3265 = vpack.c.b16 %v3137, %v3133
        %v3266 = vpack.c.b16 %v3138, %v3134
        %v3267 = vpack.c.b16 %v3139, %v3135
        %v3268 = vpack.c.b16 %v3140, %v3136
        %3397 = vmatprep.subr.bf16.mxu0 %v3142
        %3398 = vmatpush1.bf16.msra.mxu0 %v3141
        %3399 = vmatprep.subr.bf16.mxu0 %v3146
        %3400 = vmatpush1.bf16.msra.mxu0 %v3145
        %3401 = vmatprep.subr.bf16.mxu0 %v3150
        %3402 = vmatpush1.bf16.msra.mxu0 %v3149
        %3403 = vmatprep.subr.bf16.mxu0 %v3154
        %3404 = vmatpush1.bf16.msra.mxu0 %v3153
        %3405 = vmatprep.subr.bf16.mxu0 %v3158
        %3406 = vmatpush1.bf16.msra.mxu0 %v3157
        %3407 = vmatprep.subr.bf16.mxu0 %v3162
        %3408 = vmatpush1.bf16.msra.mxu0 %v3161
        %3409 = vmatprep.subr.bf16.mxu0 %v3166
        %3410 = vmatpush1.bf16.msra.mxu0 %v3165
        %3411 = vmatprep.subr.bf16.mxu0 %v3170
        %3412 = vmatpush1.bf16.msra.mxu0 %v3169
        %3413 = vmatprep.subr.bf16.mxu0 %v3174
        %3414 = vmatpush1.bf16.msra.mxu0 %v3173
        %3415 = vmatprep.subr.bf16.mxu0 %v3178
        %3416 = vmatpush1.bf16.msra.mxu0 %v3177
        %3417 = vmatprep.subr.bf16.mxu0 %v3182
        %3418 = vmatpush1.bf16.msra.mxu0 %v3181
        %3419 = vmatprep.subr.bf16.mxu0 %v3186
        %3420 = vmatpush1.bf16.msra.mxu0 %v3185
        %3421 = vmatprep.subr.bf16.mxu0 %v3190
        %3422 = vmatpush1.bf16.msra.mxu0 %v3189
        %3423 = vmatprep.subr.bf16.mxu0 %v3194
        %3424 = vmatpush1.bf16.msra.mxu0 %v3193
        %3425 = vmatprep.subr.bf16.mxu0 %v3198
        %3426 = vmatpush1.bf16.msra.mxu0 %v3197
        %3427 = vmatprep.subr.bf16.mxu0 %v3202
        %3428 = vmatpush1.bf16.msra.mxu0 %v3201
        %3429 = vmatprep.mubr.bf16.mxu0 %v2750
        %3430 = vmatmul.mubr.bf16.gmra.mrb[0].mxu0 %v2749
        %v3431 = vpop.f32.mrb[0].mxu0
        %v3432 = vadd.f32 0.0, %v3431
        %v3433 = vpop.f32.mrb[0].mxu0
        %v3434 = vadd.f32 0.0, %v3433
        %v3435 = vpop.f32.mrb[0].mxu0
        %v3436 = vpop.f32.mrb[0].mxu0
        %3437 = vdwg.mxu0
        %3438 = vmatprep.subr.bf16.mxu0 %v3206
        %3439 = vmatpush1.bf16.msra.mxu0 %v3205
        %3440 = vmatprep.subr.bf16.mxu0 %v3210
        %3441 = vmatpush1.bf16.msra.mxu0 %v3209
        %3442 = vmatprep.subr.bf16.mxu0 %v3214
        %3443 = vmatpush1.bf16.msra.mxu0 %v3213
        %3444 = vmatprep.subr.bf16.mxu0 %v3218
        %3445 = vmatpush1.bf16.msra.mxu0 %v3217
        %3446 = vmatprep.subr.bf16.mxu0 %v3222
        %3447 = vmatpush1.bf16.msra.mxu0 %v3221
        %3448 = vmatprep.subr.bf16.mxu0 %v3226
        %3449 = vmatpush1.bf16.msra.mxu0 %v3225
        %3450 = vmatprep.subr.bf16.mxu0 %v3230
        %3451 = vmatpush1.bf16.msra.mxu0 %v3229
        %3452 = vmatprep.subr.bf16.mxu0 %v3234
        %3453 = vmatpush1.bf16.msra.mxu0 %v3233
        %3454 = vmatprep.subr.bf16.mxu0 %v3238
        %3455 = vmatpush1.bf16.msra.mxu0 %v3237
        %3456 = vmatprep.subr.bf16.mxu0 %v3242
        %3457 = vmatpush1.bf16.msra.mxu0 %v3241
        %3458 = vmatprep.subr.bf16.mxu0 %v3246
        %3459 = vmatpush1.bf16.msra.mxu0 %v3245
        %3460 = vmatprep.subr.bf16.mxu0 %v3250
        %3461 = vmatpush1.bf16.msra.mxu0 %v3249
        %3462 = vmatprep.subr.bf16.mxu0 %v3254
        %3463 = vmatpush1.bf16.msra.mxu0 %v3253
        %3464 = vmatprep.subr.bf16.mxu0 %v3258
        %3465 = vmatpush1.bf16.msra.mxu0 %v3257
        %3466 = vmatprep.subr.bf16.mxu0 %v3262
        %3467 = vmatpush1.bf16.msra.mxu0 %v3261
        %3468 = vmatprep.subr.bf16.mxu0 %v3266
        %3469 = vmatpush1.bf16.msra.mxu0 %v3265
        %3470 = vmatprep.mubr.bf16.mxu0 %v2752
        %3471 = vmatmul.mubr.bf16.gmra.mrb[0].mxu0 %v2751
        %v3472 = vpop.f32.mrb[0].mxu0
        %v3473 = vadd.f32 %v3432, %v3472
        %v3474 = vpop.f32.mrb[0].mxu0
        %v3475 = vadd.f32 %v3434, %v3474
        %v3476 = vpop.f32.mrb[0].mxu0
        %v3477 = vpop.f32.mrb[0].mxu0
        %3478 = vdwg.mxu0
        %3479 = vmatprep.subr.bf16.mxu0 %v3144
        %3480 = vmatpush1.bf16.msra.mxu0 %v3143
        %3481 = vmatprep.subr.bf16.mxu0 %v3148
        %3482 = vmatpush1.bf16.msra.mxu0 %v3147
        %3483 = vmatprep.subr.bf16.mxu0 %v3152
        %3484 = vmatpush1.bf16.msra.mxu0 %v3151
        %3485 = vmatprep.subr.bf16.mxu0 %v3156
        %3486 = vmatpush1.bf16.msra.mxu0 %v3155
        %3487 = vmatprep.subr.bf16.mxu0 %v3160
        %3488 = vmatpush1.bf16.msra.mxu0 %v3159
        %3489 = vmatprep.subr.bf16.mxu0 %v3164
        %3490 = vmatpush1.bf16.msra.mxu0 %v3163
        %3491 = vmatprep.subr.bf16.mxu0 %v3168
        %3492 = vmatpush1.bf16.msra.mxu0 %v3167
        %3493 = vmatprep.subr.bf16.mxu0 %v3172
        %3494 = vmatpush1.bf16.msra.mxu0 %v3171
        %3495 = vmatprep.subr.bf16.mxu0 %v3176
        %3496 = vmatpush1.bf16.msra.mxu0 %v3175
        %3497 = vmatprep.subr.bf16.mxu0 %v3180
        %3498 = vmatpush1.bf16.msra.mxu0 %v3179
        %3499 = vmatprep.subr.bf16.mxu0 %v3184
        %3500 = vmatpush1.bf16.msra.mxu0 %v3183
        %3501 = vmatprep.subr.bf16.mxu0 %v3188
        %3502 = vmatpush1.bf16.msra.mxu0 %v3187
        %3503 = vmatprep.subr.bf16.mxu0 %v3192
        %3504 = vmatpush1.bf16.msra.mxu0 %v3191
        %3505 = vmatprep.subr.bf16.mxu0 %v3196
        %3506 = vmatpush1.bf16.msra.mxu0 %v3195
        %3507 = vmatprep.subr.bf16.mxu0 %v3200
        %3508 = vmatpush1.bf16.msra.mxu0 %v3199
        %3509 = vmatprep.subr.bf16.mxu0 %v3204
        %3510 = vmatpush1.bf16.msra.mxu0 %v3203
        %3511 = vmatprep.mubr.bf16.mxu0 %v2750
        %3512 = vmatmul.mubr.bf16.gmra.mrb[0].mxu0 %v2749
        %v3513 = vpop.f32.mrb[0].mxu0
        %v3514 = vadd.f32 0.0, %v3513
        %v3515 = vpop.f32.mrb[0].mxu0
        %v3516 = vadd.f32 0.0, %v3515
        %v3517 = vpop.f32.mrb[0].mxu0
        %v3518 = vpop.f32.mrb[0].mxu0
        %3519 = vdwg.mxu0
        %3520 = vmatprep.subr.bf16.mxu0 %v3208
        %3521 = vmatpush1.bf16.msra.mxu0 %v3207
        %3522 = vmatprep.subr.bf16.mxu0 %v3212
        %3523 = vmatpush1.bf16.msra.mxu0 %v3211
        %3524 = vmatprep.subr.bf16.mxu0 %v3216
        %3525 = vmatpush1.bf16.msra.mxu0 %v3215
        %3526 = vmatprep.subr.bf16.mxu0 %v3220
        %3527 = vmatpush1.bf16.msra.mxu0 %v3219
        %3528 = vmatprep.subr.bf16.mxu0 %v3224
        %3529 = vmatpush1.bf16.msra.mxu0 %v3223
        %3530 = vmatprep.subr.bf16.mxu0 %v3228
        %3531 = vmatpush1.bf16.msra.mxu0 %v3227
        %3532 = vmatprep.subr.bf16.mxu0 %v3232
        %3533 = vmatpush1.bf16.msra.mxu0 %v3231
        %3534 = vmatprep.subr.bf16.mxu0 %v3236
        %3535 = vmatpush1.bf16.msra.mxu0 %v3235
        %3536 = vmatprep.subr.bf16.mxu0 %v3240
        %3537 = vmatpush1.bf16.msra.mxu0 %v3239
        %3538 = vmatprep.subr.bf16.mxu0 %v3244
        %3539 = vmatpush1.bf16.msra.mxu0 %v3243
        %3540 = vmatprep.subr.bf16.mxu0 %v3248
        %3541 = vmatpush1.bf16.msra.mxu0 %v3247
        %3542 = vmatprep.subr.bf16.mxu0 %v3252
        %3543 = vmatpush1.bf16.msra.mxu0 %v3251
        %3544 = vmatprep.subr.bf16.mxu0 %v3256
        %3545 = vmatpush1.bf16.msra.mxu0 %v3255
        %3546 = vmatprep.subr.bf16.mxu0 %v3260
        %3547 = vmatpush1.bf16.msra.mxu0 %v3259
        %3548 = vmatprep.subr.bf16.mxu0 %v3264
        %3549 = vmatpush1.bf16.msra.mxu0 %v3263
        %3550 = vmatprep.subr.bf16.mxu0 %v3268
        %3551 = vmatpush1.bf16.msra.mxu0 %v3267
        %3552 = vmatprep.mubr.bf16.mxu0 %v2752
        %3553 = vmatmul.mubr.bf16.gmra.mrb[0].mxu0 %v2751
        %v3554 = vpop.f32.mrb[0].mxu0
        %v3555 = vadd.f32 %v3514, %v3554
        %v3556 = vpop.f32.mrb[0].mxu0
        %v3557 = vadd.f32 %v3516, %v3556
        %v3558 = vpop.f32.mrb[0].mxu0
        %v3559 = vpop.f32.mrb[0].mxu0
        %3560 = vdwg.mxu0
        %v3561 = vpack.c.bf16 %v3473, %v3473
        %v3562 = vpack.c.bf16 %v3475, %v3475
        %v3563 = vpack.c.bf16 %v3555, %v3555
        %v3564 = vpack.c.bf16 %v3557, %v3557
        %v3569 = vunpack.c.l.b16 %v3561
        %v3570 = vunpack.c.l.b16 %v3562
        %v3571 = vunpack.c.l.b16 %v3563
        %v3572 = vunpack.c.l.b16 %v3564
        %v3573 = vpack.c.b16 %v3570, %v3569
        %v3574 = vpack.c.b16 %v3572, %v3571
        %3577 = vst [vmem:[%s252] sm:$0xff] %v3573
        %3578 = vst [vmem:[%s252 + $0x8] sm:$0xff] %v3574
        %s3579 = smul.u32 4, 1
        %s3580 = smul.u32 %s3579, 2
        %s3581 = sshll.u32 %s3580, 4
        %3582 = dma.done [#allocation7], %s3581
        %s3583 = sshll.u32 %s3580, 4
        %3584 = dma.done %s2330, %s3583
        %s3585 = sand.u32 %s144, 1
        %s3586 = scalar_lea.sflag [#allocation10], %s3585
        %s3587 = sand.u32 %s144, 1
        %s3588 = smul.addr %s3587, 16
        %s3589 = scalar_lea.vmem [#allocation13], %s3588
        // Predicated region
        $region57: #{tpu_custom_call.1} parent=39 // pred_check
          %p3590 = pneg %p154
        $region58: #{tpu_custom_call.1} parent=39 // pred_check_branch
          %3592 = sbr.rel (%p3590) target = $region60
        $region59: #{tpu_custom_call.1} parent=39 // pred_region
          %s3594 = ssub.s32 256, 256
          %3595 = vsyncadd %s3586, %s3594
          %s3596 = smul.addr %s26, 4
          %s3597 = smul.addr %s3596, 64
          %s3598 = scalar_lea.hbm %s7, %s3597
          %s3600 = sshll.u32 %s3589, 4
          %s3601 = int_to_ptr.vmem [resolvable:$true] %s3600
          %3603 = dma.vmem_to_hbm [thread:$0]  %s3601, 256, %s3598, %s3586
        $region60: #{tpu_custom_call.1} parent=39 // pred_fallthru
          _
      $region40: #{tpu_custom_call.1} parent=5 // pred_fallthru
        _
      %p3604 = scmp.le.s32.totalorder 2, %s21
      // Predicated region
      $region61: #{tpu_custom_call.1} parent=5 // pred_check
        %p3605 = pneg %p3604
      $region62: #{tpu_custom_call.1} parent=5 // pred_check_branch
        %3607 = sbr.rel (%p3605) target = $region64
      $region63: #{tpu_custom_call.1} parent=5 // pred_region
        %s3608 = ssub.s32 %s21, 2
        // Predicated region
        $region65: #{tpu_custom_call.1} parent=63 // pred_check
          %p3609 = pneg %p160
        $region66: #{tpu_custom_call.1} parent=63 // pred_check_branch
          %3611 = sbr.rel (%p3609) target = $region68
        $region67: #{tpu_custom_call.1} parent=63 // pred_region
          %s3612 = sand.u32 %s145, 1
          %s3613 = scalar_lea.sflag [#allocation10], %s3612
          %s3614 = sand.u32 %s145, 1
          %s3615 = smul.addr %s3614, 16
          %s3616 = scalar_lea.vmem [#allocation13], %s3615
          %3617 = dma.done %s3613, 256
        $region68: #{tpu_custom_call.1} parent=63 // pred_fallthru
          _
      $region64: #{tpu_custom_call.1} parent=5 // pred_fallthru
        _
    $region6: #{tpu_custom_call.1} parent=1 // loop_footer
      %s25 = sadd.s32 1, %s21
    $region7: #{tpu_custom_call.1} parent=1 // loop_footer_branch
      %20 = sbr.rel target = $region3
    $region8: #{tpu_custom_call.1} parent=1 // loop_exit
      _
    %3618 = vsyncpa [#allocation9], 1
    %s3619 = scalar_lea.sflag [#allocation9], 1
    %3620 = vsyncpa %s3619, 1
    %3621 = vsyncpa [#allocation12], 1
    %3622 = vsyncpa [#allocation10], 1
    %s3623 = scalar_lea.sflag [#allocation10], 1
    %3624 = vsyncpa %s3623, 1
  %3625 = vsyncmov [#allocation6]
  %s3626 = vpop.sfrf %3625
  %p3627 = scmp.eq.s32.totalorder %s3626, 0
  %p3628 = pneg %p3627
  %3630 = shalt.err (%p3628)
  %s3631 = scalar_lea.sflag [#allocation6], 1
  %3632 = vsyncmov %s3631
  %s3633 = vpop.sfrf %3632
  %p3634 = scmp.eq.s32.totalorder %s3633, 0
  %p3635 = pneg %p3634
  %3637 = shalt.err (%p3635)
  %s3638 = scalar_lea.sflag [#allocation6], 2
  %3639 = vsyncmov %s3638
  %s3640 = vpop.sfrf %3639
  %p3641 = scmp.eq.s32.totalorder %s3640, 0
  %p3642 = pneg %p3641
  %3644 = shalt.err (%p3642)
  %s3645 = scalar_lea.sflag [#allocation6], 3
  %3646 = vsyncmov %s3645
  %s3647 = vpop.sfrf %3646
  %p3648 = scmp.eq.s32.totalorder %s3647, 0
  %p3649 = pneg %p3648
  %3651 = shalt.err (%p3649)
  %3652 = vsyncmov [#allocation7]
  %s3653 = vpop.sfrf %3652
  %p3654 = scmp.eq.s32.totalorder %s3653, 0
  %p3655 = pneg %p3654
  %3657 = shalt.err (%p3655)
  %s3658 = scalar_lea.sflag [#allocation7], 1
  %3659 = vsyncmov %s3658
  %s3660 = vpop.sfrf %3659
  %p3661 = scmp.eq.s32.totalorder %s3660, 0
  %p3662 = pneg %p3661
  %3664 = shalt.err (%p3662)

</llo_original>
